<compile_context>
chip_gen: v7x
topology: tpu7x:2x2x1
jax: 0.10.0
libtpu: 0.0.40
codegen_flags: <defaults>
</compile_context>

<pallas_src>
import jax
import jax.numpy as jnp
from jax import lax
from jax.experimental import pallas as pl
from jax.experimental.pallas import tpu as pltpu

_SUBLANES = 8     # f32 sublane count
_LANES = 128      # lane count


def _round_up(n, m):
    return ((n + m - 1) // m) * m


def _make_lstm_decoder_kernel(T, Bp, Hp):
    """Builds the kernel for static (T, padded batch, padded per-gate hidden)."""

    def kernel(x_ref, wih_ref, whh_ref, b_ref, wout_ref, bout_ref,
               out_ref, gx_ref, hs_ref):
        # (1) Time-independent input projection for ALL timesteps at once
        #     (hoisted off the serial critical path). One bias broadcast total.
        gx_ref[...] = (
            jnp.dot(x_ref[...], wih_ref[...],
                    preferred_element_type=jnp.float32)
            + b_ref[...])                                   # (T*Bp, 4Hp)

        # (2) Serial recurrence. h/c live in registers via the fori_loop carry;
        #     only the h @ W_hh^T matmul + gate math are on the per-step chain.
        h0 = jnp.zeros((Bp, Hp), jnp.float32)
        c0 = jnp.zeros((Bp, Hp), jnp.float32)

        def step(t, carry):
            h, c = carry
            row = pl.multiple_of(t * Bp, Bp)                # sublane-aligned
            gates = gx_ref[pl.ds(row, Bp), :] + jnp.dot(
                h, whh_ref[...], preferred_element_type=jnp.float32)
            # Gate slices are full 128-lane tiles thanks to per-gate padding.
            i = jax.nn.sigmoid(gates[:, 0 * Hp:1 * Hp])
            f = jax.nn.sigmoid(gates[:, 1 * Hp:2 * Hp])
            g = jnp.tanh(gates[:, 2 * Hp:3 * Hp])
            o = jax.nn.sigmoid(gates[:, 3 * Hp:4 * Hp])
            c = f * c + i * g
            h = o * jnp.tanh(c)
            hs_ref[pl.ds(row, Bp), :] = h                   # dense (8, Hp) store
            return (h, c)

        # T is small and static: full unroll gives the scheduler
        # cross-iteration visibility (MXU/EUP/VPU overlap).
        lax.fori_loop(0, T, step, (h0, c0), unroll=True)

        # (3) Output projection for the whole sequence in one MXU matmul and
        #     one lane/sublane-dense store (W_out off the serial path).
        out_ref[...] = (
            jnp.dot(hs_ref[...], wout_ref[...],
                    preferred_element_type=jnp.float32)
            + bout_ref[...])                                # (T*Bp, Vp)

    return kernel


def _pad_params(params, H, Hp, V, Vp):
    """Pad per-gate hidden width to Hp lanes and vocab to Vp lanes (zeros)."""

    def pad_gate_cols(w):  # (..., 4H) -> (..., 4Hp), gate g placed at g*Hp
        parts = []
        for g_i in range(4):
            blk = w[..., g_i * H:(g_i + 1) * H]
            blk = jnp.pad(blk, [(0, 0)] * (w.ndim - 1) + [(0, Hp - H)])
            parts.append(blk)
        return jnp.concatenate(parts, axis=-1)

    wih_p = pad_gate_cols(params["w_ih_t"])                          # (E, 4Hp)
    whh_p = pad_gate_cols(params["w_hh_t"])                          # (H, 4Hp)
    whh_p = jnp.pad(whh_p, ((0, Hp - H), (0, 0)))                    # (Hp, 4Hp)
    b_p = pad_gate_cols(params["b_gates"])                           # (1, 4Hp)
    wout_p = jnp.pad(params["w_out_t"], ((0, Hp - H), (0, Vp - V)))  # (Hp, Vp)
    bout_p = jnp.pad(params["b_out"], ((0, 0), (0, Vp - V)))         # (1, Vp)
    return wih_p, whh_p, b_p, wout_p, bout_p


def decoder_rnn_forward(features, captions, params):
    """features: (B, E) f32, captions: (B, S) int32 -> logits (B, S, V) f32."""
    emb_table = params["embedding"]                  # (V, E)
    E = emb_table.shape[1]
    H = params["w_hh_t"].shape[0]
    V = params["w_out_t"].shape[1]

    captions_embed = jnp.take(emb_table, captions[:, :-1], axis=0)   # (B, S-1, E)
    x = jnp.concatenate([features[:, None, :].astype(jnp.float32),
                         captions_embed.astype(jnp.float32)], axis=1)  # (B, T, E)
    B, T, _ = x.shape

    Bp = _round_up(B, _SUBLANES)        # pad batch to full sublanes
    Hp = _round_up(H, _LANES)           # pad each gate block to full lanes
    Vp = _round_up(V, _LANES)           # pad vocab to full lanes

    # Time-major, batch-padded, flattened to (T*Bp, E): row index = t*Bp + b.
    x_p = jnp.pad(x, ((0, Bp - B), (0, 0), (0, 0)))
    x_flat = jnp.transpose(x_p, (1, 0, 2)).reshape(T * Bp, E)

    wih_p, whh_p, b_p, wout_p, bout_p = _pad_params(params, H, Hp, V, Vp)

    vmem = pl.BlockSpec(memory_space=pltpu.MemorySpace.VMEM)
    out_flat = pl.pallas_call(
        _make_lstm_decoder_kernel(T, Bp, Hp),
        out_shape=jax.ShapeDtypeStruct((T * Bp, Vp), jnp.float32),
        in_specs=[vmem] * 6,
        out_specs=vmem,
        scratch_shapes=[
            pltpu.VMEM((T * Bp, 4 * Hp), jnp.float32),   # precomputed x-gates
            pltpu.VMEM((T * Bp, Hp), jnp.float32),       # per-step hidden states
        ],
        # TODO(synk): at production H/V, tile the output projection over V via a
        # grid + BlockSpec (and a "parallel" batch axis for v7x's 2 TensorCores).
    )(x_flat, wih_p, whh_p, b_p, wout_p, bout_p)

    out = out_flat.reshape(T, Bp, Vp).transpose(1, 0, 2)   # (Bp, T, Vp)
    return out[:B, :, :V]                                  # strip padding


def init_params(key, embed_size, hidden_size, vocab_size):
    """Deterministic init mirroring PyTorch layer shapes (not a checkpoint)."""
    k_emb, k_wih, k_whh, k_bih, k_bhh, k_wo, k_bo = jax.random.split(key, 7)
    ks = 1.0 / jnp.sqrt(hidden_size)

    embedding = jax.random.normal(k_emb, (vocab_size, embed_size), jnp.float32)
    # PyTorch nn.LSTM weights: weight_ih_l0 (4H, E), weight_hh_l0 (4H, H)
    w_ih = jax.random.uniform(k_wih, (4 * hidden_size, embed_size), jnp.float32, -ks, ks)
    w_hh = jax.random.uniform(k_whh, (4 * hidden_size, hidden_size), jnp.float32, -ks, ks)
    b_ih = jax.random.uniform(k_bih, (4 * hidden_size,), jnp.float32, -ks, ks)
    b_hh = jax.random.uniform(k_bhh, (4 * hidden_size,), jnp.float32, -ks, ks)
    # nn.Linear(hidden_size, vocab_size): weight (V, H), bias (V,)
    kl = 1.0 / jnp.sqrt(hidden_size)
    w_out = jax.random.uniform(k_wo, (vocab_size, hidden_size), jnp.float32, -kl, kl)
    b_out = jax.random.uniform(k_bo, (vocab_size,), jnp.float32, -kl, kl)

    return {
        "embedding": embedding,
        "w_ih_t": w_ih.T,                                   # (E, 4H)
        "w_hh_t": w_hh.T,                                   # (H, 4H)
        "b_gates": (b_ih + b_hh)[None, :],                  # (1, 4H)
        "w_out_t": w_out.T,                                 # (H, V)
        "b_out": b_out[None, :],                            # (1, V)
    }


def _reference_forward(features, captions, params):
    """Pure-JAX reference (same math, unpadded) for a correctness check."""
    emb = jnp.take(params["embedding"], captions[:, :-1], axis=0)
    x = jnp.concatenate([features[:, None, :], emb], axis=1)  # (B, T, E)
    B, T, _ = x.shape
    H = params["w_hh_t"].shape[0]

    def step(carry, x_t):
        h, c = carry
        gates = x_t @ params["w_ih_t"] + h @ params["w_hh_t"] + params["b_gates"]
        i = jax.nn.sigmoid(gates[:, 0 * H:1 * H])
        f = jax.nn.sigmoid(gates[:, 1 * H:2 * H])
        g = jnp.tanh(gates[:, 2 * H:3 * H])
        o = jax.nn.sigmoid(gates[:, 3 * H:4 * H])
        c = f * c + i * g
        h = o * jnp.tanh(c)
        return (h, c), h

    h0 = jnp.zeros((B, H), jnp.float32)
    (_, _), hs = lax.scan(step, (h0, h0), jnp.transpose(x, (1, 0, 2)))
    hidden = jnp.transpose(hs, (1, 0, 2))                     # (B, T, H)
    return hidden @ params["w_out_t"] + params["b_out"]


if __name__ == "__main__":
    EMBED, HIDDEN, VOCAB = 32, 32, 128
    BATCH, SEQ = 2, 8       # captions length S=8 -> decoded length T = 1 + (S-1) = 8

    key = jax.random.PRNGKey(0)
    k_par, k_feat, k_cap = jax.random.split(key, 3)

    params = init_params(k_par, EMBED, HIDDEN, VOCAB)
    features = jax.random.normal(k_feat, (BATCH, EMBED), jnp.float32)
    captions = jax.random.randint(k_cap, (BATCH, SEQ), 0, VOCAB, jnp.int32)

    logits = decoder_rnn_forward(features, captions, params)
    logits = jax.block_until_ready(logits)

    ref = _reference_forward(features, captions, params)
    assert logits.shape == (BATCH, SEQ, VOCAB)
    assert jnp.allclose(logits, ref, atol=1e-4, rtol=1e-4), "mismatch vs reference"

    print("KERNEL_OK")
</pallas_src>

<mosaic_0001>
module attributes {stable_mosaic.version = 11 : i64} {
  func.func @kernel(%arg0: memref<64x32xf32, #tpu.memory_space<vmem>>, %arg1: memref<32x512xf32, #tpu.memory_space<vmem>>, %arg2: memref<128x512xf32, #tpu.memory_space<vmem>>, %arg3: memref<1x512xf32, #tpu.memory_space<vmem>>, %arg4: memref<128x128xf32, #tpu.memory_space<vmem>>, %arg5: memref<1x128xf32, #tpu.memory_space<vmem>>, %arg6: memref<64x128xf32, #tpu.memory_space<vmem>>, %arg7: memref<64x512xf32, #tpu.memory_space<vmem>>, %arg8: memref<64x128xf32, #tpu.memory_space<vmem>>) attributes {dimension_semantics = [], scalar_prefetch = 0 : i64, scratch_operands = 2 : i64, tpu.core_type = #tpu.core_type<tc>} {
    %c0 = arith.constant 0 : index
    %c0_0 = arith.constant 0 : index
    %0 = vector.load %arg0[%c0, %c0_0] : memref<64x32xf32, #tpu.memory_space<vmem>>, vector<64x32xf32>
    %c0_1 = arith.constant 0 : index
    %c0_2 = arith.constant 0 : index
    %1 = vector.load %arg1[%c0_1, %c0_2] : memref<32x512xf32, #tpu.memory_space<vmem>>, vector<32x512xf32>
    %cst = arith.constant dense<0.000000e+00> : vector<64x512xf32>
    %2 = tpu.matmul %0, %1, %cst {dimension_numbers = #tpu.dot_dimension_numbers<[1], [0], [0], [1], [0, 0, 1, 1], [], []>} : vector<64x32xf32>, vector<32x512xf32>, vector<64x512xf32> -> vector<64x512xf32>
    %c0_3 = arith.constant 0 : index
    %c0_4 = arith.constant 0 : index
    %3 = vector.load %arg3[%c0_3, %c0_4] : memref<1x512xf32, #tpu.memory_space<vmem>>, vector<1x512xf32>
    %4 = vector.broadcast %3 : vector<1x512xf32> to vector<64x512xf32>
    %5 = arith.addf %2, %4 : vector<64x512xf32>
    %c0_5 = arith.constant 0 : index
    %c0_6 = arith.constant 0 : index
    %6 = vector.load %arg7[%c0_5, %c0_6] : memref<64x512xf32, #tpu.memory_space<vmem>>, vector<64x512xf32>
    tpu.vector_store %arg7[%c0_5, %c0_6], %5 {strides = array<i32>} : memref<64x512xf32, #tpu.memory_space<vmem>>, vector<64x512xf32>,
    %cst_7 = arith.constant 0.000000e+00 : f32
    %7 = vector.broadcast %cst_7 : f32 to vector<8x128xf32>
    %cst_8 = arith.constant 0.000000e+00 : f32
    %8 = vector.broadcast %cst_8 : f32 to vector<8x128xf32>
    %c0_i32 = arith.constant 0 : i32
    %c8_i32 = arith.constant 8 : i32
    %9 = arith.muli %c0_i32, %c8_i32 : i32
    %10 = tpu.assume_multiple %9, 8 : i32
    %11 = arith.index_cast %10 : i32 to index
    %c0_9 = arith.constant 0 : index
    %12 = vector.load %arg7[%11, %c0_9] : memref<64x512xf32, #tpu.memory_space<vmem>>, vector<8x512xf32>
    %c0_10 = arith.constant 0 : index
    %c0_11 = arith.constant 0 : index
    %13 = vector.load %arg2[%c0_10, %c0_11] : memref<128x512xf32, #tpu.memory_space<vmem>>, vector<128x512xf32>
    %cst_12 = arith.constant dense<0.000000e+00> : vector<8x512xf32>
    %14 = tpu.matmul %7, %13, %cst_12 {dimension_numbers = #tpu.dot_dimension_numbers<[1], [0], [0], [1], [0, 0, 1, 1], [], []>} : vector<8x128xf32>, vector<128x512xf32>, vector<8x512xf32> -> vector<8x512xf32>
    %15 = arith.addf %12, %14 : vector<8x512xf32>
    %16 = vector.extract_strided_slice %15 {offsets = [0, 0], sizes = [8, 128], strides = [1, 1]} : vector<8x512xf32> to vector<8x128xf32>
    %17 = arith.negf %16 : vector<8x128xf32>
    %18 = math.exp %17 : vector<8x128xf32>
    %cst_13 = arith.constant 1.000000e+00 : f32
    %19 = vector.broadcast %cst_13 : f32 to vector<8x128xf32>
    %20 = arith.addf %19, %18 : vector<8x128xf32>
    %21 = arith.divf %19, %20 : vector<8x128xf32>
    %22 = vector.extract_strided_slice %15 {offsets = [0, 128], sizes = [8, 128], strides = [1, 1]} : vector<8x512xf32> to vector<8x128xf32>
    %23 = arith.negf %22 : vector<8x128xf32>
    %24 = math.exp %23 : vector<8x128xf32>
    %cst_14 = arith.constant 1.000000e+00 : f32
    %25 = vector.broadcast %cst_14 : f32 to vector<8x128xf32>
    %26 = arith.addf %25, %24 : vector<8x128xf32>
    %27 = arith.divf %25, %26 : vector<8x128xf32>
    %28 = vector.extract_strided_slice %15 {offsets = [0, 256], sizes = [8, 128], strides = [1, 1]} : vector<8x512xf32> to vector<8x128xf32>
    %29 = math.tanh %28 : vector<8x128xf32>
    %30 = vector.extract_strided_slice %15 {offsets = [0, 384], sizes = [8, 128], strides = [1, 1]} : vector<8x512xf32> to vector<8x128xf32>
    %31 = arith.negf %30 : vector<8x128xf32>
    %32 = math.exp %31 : vector<8x128xf32>
    %cst_15 = arith.constant 1.000000e+00 : f32
    %33 = vector.broadcast %cst_15 : f32 to vector<8x128xf32>
    %34 = arith.addf %33, %32 : vector<8x128xf32>
    %35 = arith.divf %33, %34 : vector<8x128xf32>
    %36 = arith.mulf %27, %8 : vector<8x128xf32>
    %37 = arith.mulf %21, %29 : vector<8x128xf32>
    %38 = arith.addf %36, %37 : vector<8x128xf32>
    %39 = math.tanh %38 : vector<8x128xf32>
    %40 = arith.mulf %35, %39 : vector<8x128xf32>
    %41 = arith.index_cast %10 : i32 to index
    %c0_16 = arith.constant 0 : index
    %42 = vector.load %arg8[%41, %c0_16] : memref<64x128xf32, #tpu.memory_space<vmem>>, vector<8x128xf32>
    tpu.vector_store %arg8[%41, %c0_16], %40 {strides = array<i32>} : memref<64x128xf32, #tpu.memory_space<vmem>>, vector<8x128xf32>,
    %c1_i32 = arith.constant 1 : i32
    %c8_i32_17 = arith.constant 8 : i32
    %43 = arith.muli %c1_i32, %c8_i32_17 : i32
    %44 = tpu.assume_multiple %43, 8 : i32
    %45 = arith.index_cast %44 : i32 to index
    %c0_18 = arith.constant 0 : index
    %46 = vector.load %arg7[%45, %c0_18] : memref<64x512xf32, #tpu.memory_space<vmem>>, vector<8x512xf32>
    %c0_19 = arith.constant 0 : index
    %c0_20 = arith.constant 0 : index
    %47 = vector.load %arg2[%c0_19, %c0_20] : memref<128x512xf32, #tpu.memory_space<vmem>>, vector<128x512xf32>
    %cst_21 = arith.constant dense<0.000000e+00> : vector<8x512xf32>
    %48 = tpu.matmul %40, %47, %cst_21 {dimension_numbers = #tpu.dot_dimension_numbers<[1], [0], [0], [1], [0, 0, 1, 1], [], []>} : vector<8x128xf32>, vector<128x512xf32>, vector<8x512xf32> -> vector<8x512xf32>
    %49 = arith.addf %46, %48 : vector<8x512xf32>
    %50 = vector.extract_strided_slice %49 {offsets = [0, 0], sizes = [8, 128], strides = [1, 1]} : vector<8x512xf32> to vector<8x128xf32>
    %51 = arith.negf %50 : vector<8x128xf32>
    %52 = math.exp %51 : vector<8x128xf32>
    %cst_22 = arith.constant 1.000000e+00 : f32
    %53 = vector.broadcast %cst_22 : f32 to vector<8x128xf32>
    %54 = arith.addf %53, %52 : vector<8x128xf32>
    %55 = arith.divf %53, %54 : vector<8x128xf32>
    %56 = vector.extract_strided_slice %49 {offsets = [0, 128], sizes = [8, 128], strides = [1, 1]} : vector<8x512xf32> to vector<8x128xf32>
    %57 = arith.negf %56 : vector<8x128xf32>
    %58 = math.exp %57 : vector<8x128xf32>
    %cst_23 = arith.constant 1.000000e+00 : f32
    %59 = vector.broadcast %cst_23 : f32 to vector<8x128xf32>
    %60 = arith.addf %59, %58 : vector<8x128xf32>
    %61 = arith.divf %59, %60 : vector<8x128xf32>
    %62 = vector.extract_strided_slice %49 {offsets = [0, 256], sizes = [8, 128], strides = [1, 1]} : vector<8x512xf32> to vector<8x128xf32>
    %63 = math.tanh %62 : vector<8x128xf32>
    %64 = vector.extract_strided_slice %49 {offsets = [0, 384], sizes = [8, 128], strides = [1, 1]} : vector<8x512xf32> to vector<8x128xf32>
    %65 = arith.negf %64 : vector<8x128xf32>
    %66 = math.exp %65 : vector<8x128xf32>
    %cst_24 = arith.constant 1.000000e+00 : f32
    %67 = vector.broadcast %cst_24 : f32 to vector<8x128xf32>
    %68 = arith.addf %67, %66 : vector<8x128xf32>
    %69 = arith.divf %67, %68 : vector<8x128xf32>
    %70 = arith.mulf %61, %38 : vector<8x128xf32>
    %71 = arith.mulf %55, %63 : vector<8x128xf32>
    %72 = arith.addf %70, %71 : vector<8x128xf32>
    %73 = math.tanh %72 : vector<8x128xf32>
    %74 = arith.mulf %69, %73 : vector<8x128xf32>
    %75 = arith.index_cast %44 : i32 to index
    %c0_25 = arith.constant 0 : index
    %76 = vector.load %arg8[%75, %c0_25] : memref<64x128xf32, #tpu.memory_space<vmem>>, vector<8x128xf32>
    tpu.vector_store %arg8[%75, %c0_25], %74 {strides = array<i32>} : memref<64x128xf32, #tpu.memory_space<vmem>>, vector<8x128xf32>,
    %c2_i32 = arith.constant 2 : i32
    %c8_i32_26 = arith.constant 8 : i32
    %77 = arith.muli %c2_i32, %c8_i32_26 : i32
    %78 = tpu.assume_multiple %77, 8 : i32
    %79 = arith.index_cast %78 : i32 to index
    %c0_27 = arith.constant 0 : index
    %80 = vector.load %arg7[%79, %c0_27] : memref<64x512xf32, #tpu.memory_space<vmem>>, vector<8x512xf32>
    %c0_28 = arith.constant 0 : index
    %c0_29 = arith.constant 0 : index
    %81 = vector.load %arg2[%c0_28, %c0_29] : memref<128x512xf32, #tpu.memory_space<vmem>>, vector<128x512xf32>
    %cst_30 = arith.constant dense<0.000000e+00> : vector<8x512xf32>
    %82 = tpu.matmul %74, %81, %cst_30 {dimension_numbers = #tpu.dot_dimension_numbers<[1], [0], [0], [1], [0, 0, 1, 1], [], []>} : vector<8x128xf32>, vector<128x512xf32>, vector<8x512xf32> -> vector<8x512xf32>
    %83 = arith.addf %80, %82 : vector<8x512xf32>
    %84 = vector.extract_strided_slice %83 {offsets = [0, 0], sizes = [8, 128], strides = [1, 1]} : vector<8x512xf32> to vector<8x128xf32>
    %85 = arith.negf %84 : vector<8x128xf32>
    %86 = math.exp %85 : vector<8x128xf32>
    %cst_31 = arith.constant 1.000000e+00 : f32
    %87 = vector.broadcast %cst_31 : f32 to vector<8x128xf32>
    %88 = arith.addf %87, %86 : vector<8x128xf32>
    %89 = arith.divf %87, %88 : vector<8x128xf32>
    %90 = vector.extract_strided_slice %83 {offsets = [0, 128], sizes = [8, 128], strides = [1, 1]} : vector<8x512xf32> to vector<8x128xf32>
    %91 = arith.negf %90 : vector<8x128xf32>
    %92 = math.exp %91 : vector<8x128xf32>
    %cst_32 = arith.constant 1.000000e+00 : f32
    %93 = vector.broadcast %cst_32 : f32 to vector<8x128xf32>
    %94 = arith.addf %93, %92 : vector<8x128xf32>
    %95 = arith.divf %93, %94 : vector<8x128xf32>
    %96 = vector.extract_strided_slice %83 {offsets = [0, 256], sizes = [8, 128], strides = [1, 1]} : vector<8x512xf32> to vector<8x128xf32>
    %97 = math.tanh %96 : vector<8x128xf32>
    %98 = vector.extract_strided_slice %83 {offsets = [0, 384], sizes = [8, 128], strides = [1, 1]} : vector<8x512xf32> to vector<8x128xf32>
    %99 = arith.negf %98 : vector<8x128xf32>
    %100 = math.exp %99 : vector<8x128xf32>
    %cst_33 = arith.constant 1.000000e+00 : f32
    %101 = vector.broadcast %cst_33 : f32 to vector<8x128xf32>
    %102 = arith.addf %101, %100 : vector<8x128xf32>
    %103 = arith.divf %101, %102 : vector<8x128xf32>
    %104 = arith.mulf %95, %72 : vector<8x128xf32>
    %105 = arith.mulf %89, %97 : vector<8x128xf32>
    %106 = arith.addf %104, %105 : vector<8x128xf32>
    %107 = math.tanh %106 : vector<8x128xf32>
    %108 = arith.mulf %103, %107 : vector<8x128xf32>
    %109 = arith.index_cast %78 : i32 to index
    %c0_34 = arith.constant 0 : index
    %110 = vector.load %arg8[%109, %c0_34] : memref<64x128xf32, #tpu.memory_space<vmem>>, vector<8x128xf32>
    tpu.vector_store %arg8[%109, %c0_34], %108 {strides = array<i32>} : memref<64x128xf32, #tpu.memory_space<vmem>>, vector<8x128xf32>,
    %c3_i32 = arith.constant 3 : i32
    %c8_i32_35 = arith.constant 8 : i32
    %111 = arith.muli %c3_i32, %c8_i32_35 : i32
    %112 = tpu.assume_multiple %111, 8 : i32
    %113 = arith.index_cast %112 : i32 to index
    %c0_36 = arith.constant 0 : index
    %114 = vector.load %arg7[%113, %c0_36] : memref<64x512xf32, #tpu.memory_space<vmem>>, vector<8x512xf32>
    %c0_37 = arith.constant 0 : index
    %c0_38 = arith.constant 0 : index
    %115 = vector.load %arg2[%c0_37, %c0_38] : memref<128x512xf32, #tpu.memory_space<vmem>>, vector<128x512xf32>
    %cst_39 = arith.constant dense<0.000000e+00> : vector<8x512xf32>
    %116 = tpu.matmul %108, %115, %cst_39 {dimension_numbers = #tpu.dot_dimension_numbers<[1], [0], [0], [1], [0, 0, 1, 1], [], []>} : vector<8x128xf32>, vector<128x512xf32>, vector<8x512xf32> -> vector<8x512xf32>
    %117 = arith.addf %114, %116 : vector<8x512xf32>
    %118 = vector.extract_strided_slice %117 {offsets = [0, 0], sizes = [8, 128], strides = [1, 1]} : vector<8x512xf32> to vector<8x128xf32>
    %119 = arith.negf %118 : vector<8x128xf32>
    %120 = math.exp %119 : vector<8x128xf32>
    %cst_40 = arith.constant 1.000000e+00 : f32
    %121 = vector.broadcast %cst_40 : f32 to vector<8x128xf32>
    %122 = arith.addf %121, %120 : vector<8x128xf32>
    %123 = arith.divf %121, %122 : vector<8x128xf32>
    %124 = vector.extract_strided_slice %117 {offsets = [0, 128], sizes = [8, 128], strides = [1, 1]} : vector<8x512xf32> to vector<8x128xf32>
    %125 = arith.negf %124 : vector<8x128xf32>
    %126 = math.exp %125 : vector<8x128xf32>
    %cst_41 = arith.constant 1.000000e+00 : f32
    %127 = vector.broadcast %cst_41 : f32 to vector<8x128xf32>
    %128 = arith.addf %127, %126 : vector<8x128xf32>
    %129 = arith.divf %127, %128 : vector<8x128xf32>
    %130 = vector.extract_strided_slice %117 {offsets = [0, 256], sizes = [8, 128], strides = [1, 1]} : vector<8x512xf32> to vector<8x128xf32>
    %131 = math.tanh %130 : vector<8x128xf32>
    %132 = vector.extract_strided_slice %117 {offsets = [0, 384], sizes = [8, 128], strides = [1, 1]} : vector<8x512xf32> to vector<8x128xf32>
    %133 = arith.negf %132 : vector<8x128xf32>
    %134 = math.exp %133 : vector<8x128xf32>
    %cst_42 = arith.constant 1.000000e+00 : f32
    %135 = vector.broadcast %cst_42 : f32 to vector<8x128xf32>
    %136 = arith.addf %135, %134 : vector<8x128xf32>
    %137 = arith.divf %135, %136 : vector<8x128xf32>
    %138 = arith.mulf %129, %106 : vector<8x128xf32>
    %139 = arith.mulf %123, %131 : vector<8x128xf32>
    %140 = arith.addf %138, %139 : vector<8x128xf32>
    %141 = math.tanh %140 : vector<8x128xf32>
    %142 = arith.mulf %137, %141 : vector<8x128xf32>
    %143 = arith.index_cast %112 : i32 to index
    %c0_43 = arith.constant 0 : index
    %144 = vector.load %arg8[%143, %c0_43] : memref<64x128xf32, #tpu.memory_space<vmem>>, vector<8x128xf32>
    tpu.vector_store %arg8[%143, %c0_43], %142 {strides = array<i32>} : memref<64x128xf32, #tpu.memory_space<vmem>>, vector<8x128xf32>,
    %c4_i32 = arith.constant 4 : i32
    %c8_i32_44 = arith.constant 8 : i32
    %145 = arith.muli %c4_i32, %c8_i32_44 : i32
    %146 = tpu.assume_multiple %145, 8 : i32
    %147 = arith.index_cast %146 : i32 to index
    %c0_45 = arith.constant 0 : index
    %148 = vector.load %arg7[%147, %c0_45] : memref<64x512xf32, #tpu.memory_space<vmem>>, vector<8x512xf32>
    %c0_46 = arith.constant 0 : index
    %c0_47 = arith.constant 0 : index
    %149 = vector.load %arg2[%c0_46, %c0_47] : memref<128x512xf32, #tpu.memory_space<vmem>>, vector<128x512xf32>
    %cst_48 = arith.constant dense<0.000000e+00> : vector<8x512xf32>
    %150 = tpu.matmul %142, %149, %cst_48 {dimension_numbers = #tpu.dot_dimension_numbers<[1], [0], [0], [1], [0, 0, 1, 1], [], []>} : vector<8x128xf32>, vector<128x512xf32>, vector<8x512xf32> -> vector<8x512xf32>
    %151 = arith.addf %148, %150 : vector<8x512xf32>
    %152 = vector.extract_strided_slice %151 {offsets = [0, 0], sizes = [8, 128], strides = [1, 1]} : vector<8x512xf32> to vector<8x128xf32>
    %153 = arith.negf %152 : vector<8x128xf32>
    %154 = math.exp %153 : vector<8x128xf32>
    %cst_49 = arith.constant 1.000000e+00 : f32
    %155 = vector.broadcast %cst_49 : f32 to vector<8x128xf32>
    %156 = arith.addf %155, %154 : vector<8x128xf32>
    %157 = arith.divf %155, %156 : vector<8x128xf32>
    %158 = vector.extract_strided_slice %151 {offsets = [0, 128], sizes = [8, 128], strides = [1, 1]} : vector<8x512xf32> to vector<8x128xf32>
    %159 = arith.negf %158 : vector<8x128xf32>
    %160 = math.exp %159 : vector<8x128xf32>
    %cst_50 = arith.constant 1.000000e+00 : f32
    %161 = vector.broadcast %cst_50 : f32 to vector<8x128xf32>
    %162 = arith.addf %161, %160 : vector<8x128xf32>
    %163 = arith.divf %161, %162 : vector<8x128xf32>
    %164 = vector.extract_strided_slice %151 {offsets = [0, 256], sizes = [8, 128], strides = [1, 1]} : vector<8x512xf32> to vector<8x128xf32>
    %165 = math.tanh %164 : vector<8x128xf32>
    %166 = vector.extract_strided_slice %151 {offsets = [0, 384], sizes = [8, 128], strides = [1, 1]} : vector<8x512xf32> to vector<8x128xf32>
    %167 = arith.negf %166 : vector<8x128xf32>
    %168 = math.exp %167 : vector<8x128xf32>
    %cst_51 = arith.constant 1.000000e+00 : f32
    %169 = vector.broadcast %cst_51 : f32 to vector<8x128xf32>
    %170 = arith.addf %169, %168 : vector<8x128xf32>
    %171 = arith.divf %169, %170 : vector<8x128xf32>
    %172 = arith.mulf %163, %140 : vector<8x128xf32>
    %173 = arith.mulf %157, %165 : vector<8x128xf32>
    %174 = arith.addf %172, %173 : vector<8x128xf32>
    %175 = math.tanh %174 : vector<8x128xf32>
    %176 = arith.mulf %171, %175 : vector<8x128xf32>
    %177 = arith.index_cast %146 : i32 to index
    %c0_52 = arith.constant 0 : index
    %178 = vector.load %arg8[%177, %c0_52] : memref<64x128xf32, #tpu.memory_space<vmem>>, vector<8x128xf32>
    tpu.vector_store %arg8[%177, %c0_52], %176 {strides = array<i32>} : memref<64x128xf32, #tpu.memory_space<vmem>>, vector<8x128xf32>,
    %c5_i32 = arith.constant 5 : i32
    %c8_i32_53 = arith.constant 8 : i32
    %179 = arith.muli %c5_i32, %c8_i32_53 : i32
    %180 = tpu.assume_multiple %179, 8 : i32
    %181 = arith.index_cast %180 : i32 to index
    %c0_54 = arith.constant 0 : index
    %182 = vector.load %arg7[%181, %c0_54] : memref<64x512xf32, #tpu.memory_space<vmem>>, vector<8x512xf32>
    %c0_55 = arith.constant 0 : index
    %c0_56 = arith.constant 0 : index
    %183 = vector.load %arg2[%c0_55, %c0_56] : memref<128x512xf32, #tpu.memory_space<vmem>>, vector<128x512xf32>
    %cst_57 = arith.constant dense<0.000000e+00> : vector<8x512xf32>
    %184 = tpu.matmul %176, %183, %cst_57 {dimension_numbers = #tpu.dot_dimension_numbers<[1], [0], [0], [1], [0, 0, 1, 1], [], []>} : vector<8x128xf32>, vector<128x512xf32>, vector<8x512xf32> -> vector<8x512xf32>
    %185 = arith.addf %182, %184 : vector<8x512xf32>
    %186 = vector.extract_strided_slice %185 {offsets = [0, 0], sizes = [8, 128], strides = [1, 1]} : vector<8x512xf32> to vector<8x128xf32>
    %187 = arith.negf %186 : vector<8x128xf32>
    %188 = math.exp %187 : vector<8x128xf32>
    %cst_58 = arith.constant 1.000000e+00 : f32
    %189 = vector.broadcast %cst_58 : f32 to vector<8x128xf32>
    %190 = arith.addf %189, %188 : vector<8x128xf32>
    %191 = arith.divf %189, %190 : vector<8x128xf32>
    %192 = vector.extract_strided_slice %185 {offsets = [0, 128], sizes = [8, 128], strides = [1, 1]} : vector<8x512xf32> to vector<8x128xf32>
    %193 = arith.negf %192 : vector<8x128xf32>
    %194 = math.exp %193 : vector<8x128xf32>
    %cst_59 = arith.constant 1.000000e+00 : f32
    %195 = vector.broadcast %cst_59 : f32 to vector<8x128xf32>
    %196 = arith.addf %195, %194 : vector<8x128xf32>
    %197 = arith.divf %195, %196 : vector<8x128xf32>
    %198 = vector.extract_strided_slice %185 {offsets = [0, 256], sizes = [8, 128], strides = [1, 1]} : vector<8x512xf32> to vector<8x128xf32>
    %199 = math.tanh %198 : vector<8x128xf32>
    %200 = vector.extract_strided_slice %185 {offsets = [0, 384], sizes = [8, 128], strides = [1, 1]} : vector<8x512xf32> to vector<8x128xf32>
    %201 = arith.negf %200 : vector<8x128xf32>
    %202 = math.exp %201 : vector<8x128xf32>
    %cst_60 = arith.constant 1.000000e+00 : f32
    %203 = vector.broadcast %cst_60 : f32 to vector<8x128xf32>
    %204 = arith.addf %203, %202 : vector<8x128xf32>
    %205 = arith.divf %203, %204 : vector<8x128xf32>
    %206 = arith.mulf %197, %174 : vector<8x128xf32>
    %207 = arith.mulf %191, %199 : vector<8x128xf32>
    %208 = arith.addf %206, %207 : vector<8x128xf32>
    %209 = math.tanh %208 : vector<8x128xf32>
    %210 = arith.mulf %205, %209 : vector<8x128xf32>
    %211 = arith.index_cast %180 : i32 to index
    %c0_61 = arith.constant 0 : index
    %212 = vector.load %arg8[%211, %c0_61] : memref<64x128xf32, #tpu.memory_space<vmem>>, vector<8x128xf32>
    tpu.vector_store %arg8[%211, %c0_61], %210 {strides = array<i32>} : memref<64x128xf32, #tpu.memory_space<vmem>>, vector<8x128xf32>,
    %c6_i32 = arith.constant 6 : i32
    %c8_i32_62 = arith.constant 8 : i32
    %213 = arith.muli %c6_i32, %c8_i32_62 : i32
    %214 = tpu.assume_multiple %213, 8 : i32
    %215 = arith.index_cast %214 : i32 to index
    %c0_63 = arith.constant 0 : index
    %216 = vector.load %arg7[%215, %c0_63] : memref<64x512xf32, #tpu.memory_space<vmem>>, vector<8x512xf32>
    %c0_64 = arith.constant 0 : index
    %c0_65 = arith.constant 0 : index
    %217 = vector.load %arg2[%c0_64, %c0_65] : memref<128x512xf32, #tpu.memory_space<vmem>>, vector<128x512xf32>
    %cst_66 = arith.constant dense<0.000000e+00> : vector<8x512xf32>
    %218 = tpu.matmul %210, %217, %cst_66 {dimension_numbers = #tpu.dot_dimension_numbers<[1], [0], [0], [1], [0, 0, 1, 1], [], []>} : vector<8x128xf32>, vector<128x512xf32>, vector<8x512xf32> -> vector<8x512xf32>
    %219 = arith.addf %216, %218 : vector<8x512xf32>
    %220 = vector.extract_strided_slice %219 {offsets = [0, 0], sizes = [8, 128], strides = [1, 1]} : vector<8x512xf32> to vector<8x128xf32>
    %221 = arith.negf %220 : vector<8x128xf32>
    %222 = math.exp %221 : vector<8x128xf32>
    %cst_67 = arith.constant 1.000000e+00 : f32
    %223 = vector.broadcast %cst_67 : f32 to vector<8x128xf32>
    %224 = arith.addf %223, %222 : vector<8x128xf32>
    %225 = arith.divf %223, %224 : vector<8x128xf32>
    %226 = vector.extract_strided_slice %219 {offsets = [0, 128], sizes = [8, 128], strides = [1, 1]} : vector<8x512xf32> to vector<8x128xf32>
    %227 = arith.negf %226 : vector<8x128xf32>
    %228 = math.exp %227 : vector<8x128xf32>
    %cst_68 = arith.constant 1.000000e+00 : f32
    %229 = vector.broadcast %cst_68 : f32 to vector<8x128xf32>
    %230 = arith.addf %229, %228 : vector<8x128xf32>
    %231 = arith.divf %229, %230 : vector<8x128xf32>
    %232 = vector.extract_strided_slice %219 {offsets = [0, 256], sizes = [8, 128], strides = [1, 1]} : vector<8x512xf32> to vector<8x128xf32>
    %233 = math.tanh %232 : vector<8x128xf32>
    %234 = vector.extract_strided_slice %219 {offsets = [0, 384], sizes = [8, 128], strides = [1, 1]} : vector<8x512xf32> to vector<8x128xf32>
    %235 = arith.negf %234 : vector<8x128xf32>
    %236 = math.exp %235 : vector<8x128xf32>
    %cst_69 = arith.constant 1.000000e+00 : f32
    %237 = vector.broadcast %cst_69 : f32 to vector<8x128xf32>
    %238 = arith.addf %237, %236 : vector<8x128xf32>
    %239 = arith.divf %237, %238 : vector<8x128xf32>
    %240 = arith.mulf %231, %208 : vector<8x128xf32>
    %241 = arith.mulf %225, %233 : vector<8x128xf32>
    %242 = arith.addf %240, %241 : vector<8x128xf32>
    %243 = math.tanh %242 : vector<8x128xf32>
    %244 = arith.mulf %239, %243 : vector<8x128xf32>
    %245 = arith.index_cast %214 : i32 to index
    %c0_70 = arith.constant 0 : index
    %246 = vector.load %arg8[%245, %c0_70] : memref<64x128xf32, #tpu.memory_space<vmem>>, vector<8x128xf32>
    tpu.vector_store %arg8[%245, %c0_70], %244 {strides = array<i32>} : memref<64x128xf32, #tpu.memory_space<vmem>>, vector<8x128xf32>,
    %c7_i32 = arith.constant 7 : i32
    %c8_i32_71 = arith.constant 8 : i32
    %247 = arith.muli %c7_i32, %c8_i32_71 : i32
    %248 = tpu.assume_multiple %247, 8 : i32
    %249 = arith.index_cast %248 : i32 to index
    %c0_72 = arith.constant 0 : index
    %250 = vector.load %arg7[%249, %c0_72] : memref<64x512xf32, #tpu.memory_space<vmem>>, vector<8x512xf32>
    %c0_73 = arith.constant 0 : index
    %c0_74 = arith.constant 0 : index
    %251 = vector.load %arg2[%c0_73, %c0_74] : memref<128x512xf32, #tpu.memory_space<vmem>>, vector<128x512xf32>
    %cst_75 = arith.constant dense<0.000000e+00> : vector<8x512xf32>
    %252 = tpu.matmul %244, %251, %cst_75 {dimension_numbers = #tpu.dot_dimension_numbers<[1], [0], [0], [1], [0, 0, 1, 1], [], []>} : vector<8x128xf32>, vector<128x512xf32>, vector<8x512xf32> -> vector<8x512xf32>
    %253 = arith.addf %250, %252 : vector<8x512xf32>
    %254 = vector.extract_strided_slice %253 {offsets = [0, 0], sizes = [8, 128], strides = [1, 1]} : vector<8x512xf32> to vector<8x128xf32>
    %255 = arith.negf %254 : vector<8x128xf32>
    %256 = math.exp %255 : vector<8x128xf32>
    %cst_76 = arith.constant 1.000000e+00 : f32
    %257 = vector.broadcast %cst_76 : f32 to vector<8x128xf32>
    %258 = arith.addf %257, %256 : vector<8x128xf32>
    %259 = arith.divf %257, %258 : vector<8x128xf32>
    %260 = vector.extract_strided_slice %253 {offsets = [0, 128], sizes = [8, 128], strides = [1, 1]} : vector<8x512xf32> to vector<8x128xf32>
    %261 = arith.negf %260 : vector<8x128xf32>
    %262 = math.exp %261 : vector<8x128xf32>
    %cst_77 = arith.constant 1.000000e+00 : f32
    %263 = vector.broadcast %cst_77 : f32 to vector<8x128xf32>
    %264 = arith.addf %263, %262 : vector<8x128xf32>
    %265 = arith.divf %263, %264 : vector<8x128xf32>
    %266 = vector.extract_strided_slice %253 {offsets = [0, 256], sizes = [8, 128], strides = [1, 1]} : vector<8x512xf32> to vector<8x128xf32>
    %267 = math.tanh %266 : vector<8x128xf32>
    %268 = vector.extract_strided_slice %253 {offsets = [0, 384], sizes = [8, 128], strides = [1, 1]} : vector<8x512xf32> to vector<8x128xf32>
    %269 = arith.negf %268 : vector<8x128xf32>
    %270 = math.exp %269 : vector<8x128xf32>
    %cst_78 = arith.constant 1.000000e+00 : f32
    %271 = vector.broadcast %cst_78 : f32 to vector<8x128xf32>
    %272 = arith.addf %271, %270 : vector<8x128xf32>
    %273 = arith.divf %271, %272 : vector<8x128xf32>
    %274 = arith.mulf %265, %242 : vector<8x128xf32>
    %275 = arith.mulf %259, %267 : vector<8x128xf32>
    %276 = arith.addf %274, %275 : vector<8x128xf32>
    %277 = math.tanh %276 : vector<8x128xf32>
    %278 = arith.mulf %273, %277 : vector<8x128xf32>
    %279 = arith.index_cast %248 : i32 to index
    %c0_79 = arith.constant 0 : index
    %280 = vector.load %arg8[%279, %c0_79] : memref<64x128xf32, #tpu.memory_space<vmem>>, vector<8x128xf32>
    tpu.vector_store %arg8[%279, %c0_79], %278 {strides = array<i32>} : memref<64x128xf32, #tpu.memory_space<vmem>>, vector<8x128xf32>,
    %c8_i32_80 = arith.constant 8 : i32
    %c0_81 = arith.constant 0 : index
    %c0_82 = arith.constant 0 : index
    %281 = vector.load %arg8[%c0_81, %c0_82] : memref<64x128xf32, #tpu.memory_space<vmem>>, vector<64x128xf32>
    %c0_83 = arith.constant 0 : index
    %c0_84 = arith.constant 0 : index
    %282 = vector.load %arg4[%c0_83, %c0_84] : memref<128x128xf32, #tpu.memory_space<vmem>>, vector<128x128xf32>
    %cst_85 = arith.constant dense<0.000000e+00> : vector<64x128xf32>
    %283 = tpu.matmul %281, %282, %cst_85 {dimension_numbers = #tpu.dot_dimension_numbers<[1], [0], [0], [1], [0, 0, 1, 1], [], []>} : vector<64x128xf32>, vector<128x128xf32>, vector<64x128xf32> -> vector<64x128xf32>
    %c0_86 = arith.constant 0 : index
    %c0_87 = arith.constant 0 : index
    %284 = vector.load %arg5[%c0_86, %c0_87] : memref<1x128xf32, #tpu.memory_space<vmem>>, vector<1x128xf32>
    %285 = vector.broadcast %284 : vector<1x128xf32> to vector<64x128xf32>
    %286 = arith.addf %283, %285 : vector<64x128xf32>
    %c0_88 = arith.constant 0 : index
    %c0_89 = arith.constant 0 : index
    %287 = vector.load %arg6[%c0_88, %c0_89] : memref<64x128xf32, #tpu.memory_space<vmem>>, vector<64x128xf32>
    tpu.vector_store %arg6[%c0_88, %c0_89], %286 {strides = array<i32>} : memref<64x128xf32, #tpu.memory_space<vmem>>, vector<64x128xf32>,
    return
  }
}

</mosaic_0001>

<llo_original>
// kernel: tpu_custom_call.1
$region0: #{tpu_custom_call.1}
  #allocation0 [shape = 'u32[]', space=smem, size = 0x4, offset = 0x4, fixed_abs, tag = 'smem constant byte address 0x4 - core index']
  #allocation1 [shape = 'u32[144,128]{1,0:T(1,128)}', space=vmem, size = 0x12000, scoped, tag = 'internal scratch']
  #allocation2 [shape = 'f32[64,512]{1,0:T(8,128)}', space=vmem, size = 0x20000, scoped, tag = 'scratch operand']
  #allocation3 [shape = 'f32[64,128]{1,0:T(8,128)}', space=vmem, size = 0x8000, scoped, tag = 'scratch operand']
  %s0 = inlined_call_operand.vmem [shape: f32[64,32], index: 0, kind: input, shape index: {}]
  %s1 = inlined_call_operand.hbm [shape: f32[32,512], index: 1, kind: input, shape index: {}]
  %s2 = inlined_call_operand.hbm [shape: f32[128,512], index: 2, kind: input, shape index: {}]
  %s3 = inlined_call_operand.vmem [shape: f32[1,512], index: 3, kind: input, shape index: {}]
  %s4 = inlined_call_operand.hbm [shape: f32[128,128], index: 4, kind: input, shape index: {}]
  %s5 = inlined_call_operand.vmem [shape: f32[1,128], index: 5, kind: input, shape index: {}]
  %s6 = inlined_call_operand.hbm [shape: f32[64,128], index: 6, kind: output, shape index: {}]
  %s7 = sld [smem:[#allocation0]]
  $region46: #{tpu_custom_call.1} parent=0
    _
  %s9 = ssub.s32 1, %s7
  %s10 = scalar_select 0, %s9, %s7
  $region1: #{tpu_custom_call.1} parent=0
    #allocation4 [shape = 'u8[65536]{0}', space=vmem, size = 0x10000, scoped, tag = 'input window, operand 1, single buffered']
    #allocation5 [shape = 's32[1]{0}', space=sflag, size = 0x4, scoped, tag = 'scoped memory for tpu_custom_call.1']
    #allocation6 [shape = 's32[1]{0}', space=sflag, size = 0x4, scoped, tag = 'scoped memory for tpu_custom_call.1']
    #allocation7 [shape = 'u8[262144]{0}', space=vmem, size = 0x40000, scoped, tag = 'input window, operand 2, single buffered']
    #allocation8 [shape = 's32[1]{0}', space=sflag, size = 0x4, scoped, tag = 'scoped memory for tpu_custom_call.1']
    #allocation9 [shape = 'u8[65536]{0}', space=vmem, size = 0x10000, scoped, tag = 'input window, operand 4, single buffered']
    #allocation10 [shape = 'u8[32768]{0}', space=vmem, size = 0x8000, scoped, tag = 'output window, operand 0, single buffered']
    %11 = vsyncpa [#allocation5], 0
    %12 = vsyncpa [#allocation8], 0
    %13 = vsyncpa [#allocation6], 0
    // Predicated region
    $region2: #{tpu_custom_call.1} parent=1 // pred_check
      _
    $region3: #{tpu_custom_call.1} parent=1 // pred_check_branch
      %15 = sbr.rel (0) target = $region5
    $region4: #{tpu_custom_call.1} parent=1 // pred_region
      _
    $region5: #{tpu_custom_call.1} parent=1 // pred_fallthru
      _
    // Predicated region
    $region6: #{tpu_custom_call.1} parent=1 // pred_check
      _
    $region7: #{tpu_custom_call.1} parent=1 // pred_check_branch
      %17 = sbr.rel (0) target = $region9
    $region8: #{tpu_custom_call.1} parent=1 // pred_region
      %s19 = ssub.s32 2048, 2048
      %20 = vsyncadd [#allocation5], %s19
      %s21 = sshll.u32 [#allocation4], 4
      %s22 = int_to_ptr.vmem [resolvable:$true] %s21
      %27 = dma.hbm_to_vmem [thread:$0]  %s1, 2048, %s22, [#allocation5], 512, 512, 32
    $region9: #{tpu_custom_call.1} parent=1 // pred_fallthru
      _
    // Predicated region
    $region10: #{tpu_custom_call.1} parent=1 // pred_check
      _
    $region11: #{tpu_custom_call.1} parent=1 // pred_check_branch
      %29 = sbr.rel (0) target = $region13
    $region12: #{tpu_custom_call.1} parent=1 // pred_region
      %s31 = ssub.s32 8192, 8192
      %32 = vsyncadd [#allocation8], %s31
      %s33 = sshll.u32 [#allocation7], 4
      %s34 = int_to_ptr.vmem [resolvable:$true] %s33
      %39 = dma.hbm_to_vmem [thread:$0]  %s2, 8192, %s34, [#allocation8], 512, 512, 32
    $region13: #{tpu_custom_call.1} parent=1 // pred_fallthru
      _
    // Predicated region
    $region14: #{tpu_custom_call.1} parent=1 // pred_check
      _
    $region15: #{tpu_custom_call.1} parent=1 // pred_check_branch
      %41 = sbr.rel (0) target = $region17
    $region16: #{tpu_custom_call.1} parent=1 // pred_region
      _
    $region17: #{tpu_custom_call.1} parent=1 // pred_fallthru
      _
    // Predicated region
    $region18: #{tpu_custom_call.1} parent=1 // pred_check
      _
    $region19: #{tpu_custom_call.1} parent=1 // pred_check_branch
      %43 = sbr.rel (0) target = $region21
    $region20: #{tpu_custom_call.1} parent=1 // pred_region
      %s45 = ssub.s32 2048, 2048
      %46 = vsyncadd [#allocation8], %s45
      %s47 = sshll.u32 [#allocation9], 4
      %s48 = int_to_ptr.vmem [resolvable:$true] %s47
      %53 = dma.hbm_to_vmem [thread:$0]  %s4, 2048, %s48, [#allocation8], 128, 128, 8
    $region21: #{tpu_custom_call.1} parent=1 // pred_fallthru
      _
    // Predicated region
    $region22: #{tpu_custom_call.1} parent=1 // pred_check
      _
    $region23: #{tpu_custom_call.1} parent=1 // pred_check_branch
      %55 = sbr.rel (0) target = $region25
    $region24: #{tpu_custom_call.1} parent=1 // pred_region
      _
    $region25: #{tpu_custom_call.1} parent=1 // pred_fallthru
      _
    // Predicated region
    $region26: #{tpu_custom_call.1} parent=1 // pred_check
      _
    $region27: #{tpu_custom_call.1} parent=1 // pred_check_branch
      %57 = sbr.rel (0) target = $region29
    $region28: #{tpu_custom_call.1} parent=1 // pred_region
      %58 = dma.done [#allocation5], 2048
    $region29: #{tpu_custom_call.1} parent=1 // pred_fallthru
      _
    // Predicated region
    $region30: #{tpu_custom_call.1} parent=1 // pred_check
      _
    $region31: #{tpu_custom_call.1} parent=1 // pred_check_branch
      %60 = sbr.rel (0) target = $region33
    $region32: #{tpu_custom_call.1} parent=1 // pred_region
      %61 = dma.done [#allocation8], 8192
    $region33: #{tpu_custom_call.1} parent=1 // pred_fallthru
      _
    // Predicated region
    $region34: #{tpu_custom_call.1} parent=1 // pred_check
      _
    $region35: #{tpu_custom_call.1} parent=1 // pred_check_branch
      %63 = sbr.rel (0) target = $region37
    $region36: #{tpu_custom_call.1} parent=1 // pred_region
      %64 = dma.done [#allocation8], 2048
    $region37: #{tpu_custom_call.1} parent=1 // pred_fallthru
      _
    %v65 = vld [vmem:[%s0] sm:$0xff]
    %v66 = vld [vmem:[%s0 + $0x8] sm:$0xff]
    %v67 = vld [vmem:[%s0 + $0x10] sm:$0xff]
    %v68 = vld [vmem:[%s0 + $0x18] sm:$0xff]
    %v69 = vld [vmem:[%s0 + $0x20] sm:$0xff]
    %v70 = vld [vmem:[%s0 + $0x28] sm:$0xff]
    %v71 = vld [vmem:[%s0 + $0x30] sm:$0xff]
    %v72 = vld [vmem:[%s0 + $0x38] sm:$0xff]
    %v73 = vld [vmem:[#allocation4] sm:$0xff]
    %v74 = vld [vmem:[#allocation4 + $0x8] sm:$0xff]
    %v75 = vld [vmem:[#allocation4 + $0x10] sm:$0xff]
    %v76 = vld [vmem:[#allocation4 + $0x18] sm:$0xff]
    %v77 = vld [vmem:[#allocation4 + $0x20] sm:$0xff]
    %v78 = vld [vmem:[#allocation4 + $0x28] sm:$0xff]
    %v79 = vld [vmem:[#allocation4 + $0x30] sm:$0xff]
    %v80 = vld [vmem:[#allocation4 + $0x38] sm:$0xff]
    %v81 = vld [vmem:[#allocation4 + $0x40] sm:$0xff]
    %v82 = vld [vmem:[#allocation4 + $0x48] sm:$0xff]
    %v83 = vld [vmem:[#allocation4 + $0x50] sm:$0xff]
    %v84 = vld [vmem:[#allocation4 + $0x58] sm:$0xff]
    %v85 = vld [vmem:[#allocation4 + $0x60] sm:$0xff]
    %v86 = vld [vmem:[#allocation4 + $0x68] sm:$0xff]
    %v87 = vld [vmem:[#allocation4 + $0x70] sm:$0xff]
    %v88 = vld [vmem:[#allocation4 + $0x78] sm:$0xff]
    %v89 = vld [vmem:[%s3] sm:$0xf]
    %v91 = vlaneseq
    %v92 = vshrl.u32 %v91, 7
    %v93 = vsub.s32 0, %v92
    %v94 = vrot.slane %v89, %v93
    %v95 = vlaneseq
    %v96 = vshrl.u32 %v95, 7
    %v97 = vsub.s32 1, %v96
    %v98 = vrot.slane %v89, %v97
    %v99 = vlaneseq
    %v100 = vshrl.u32 %v99, 7
    %v101 = vsub.s32 2, %v100
    %v102 = vrot.slane %v89, %v101
    %v103 = vlaneseq
    %v104 = vshrl.u32 %v103, 7
    %v105 = vsub.s32 3, %v104
    %v106 = vrot.slane %v89, %v105
    %vm111 = vcmask 261120
    %v113 = vsel %vm111, %v65, 0
    %v116 = vsel %vm111, %v66, 0
    %v119 = vsel %vm111, %v67, 0
    %v122 = vsel %vm111, %v68, 0
    %v125 = vsel %vm111, %v69, 0
    %v128 = vsel %vm111, %v70, 0
    %v131 = vsel %vm111, %v71, 0
    %v134 = vsel %vm111, %v72, 0
    %136 = vmatprep.subr.mxu0 %v74
    %137 = vmatpush1.msra.mxu0 %v73
    %138 = vmatprep.subr.mxu0 %v78
    %139 = vmatpush1.msra.mxu0 %v77
    %140 = vmatprep.subr.mxu0 %v82
    %141 = vmatpush1.msra.mxu0 %v81
    %142 = vmatprep.subr.mxu0 %v86
    %143 = vmatpush1.msra.mxu0 %v85
    %144 = vmatprep.subr.mxu0 0.0
    %145 = vmatpush1.msra.mxu0 0.0
    %146 = vmatprep.subr.mxu0 0.0
    %147 = vmatpush1.msra.mxu0 0.0
    %148 = vmatprep.subr.mxu0 0.0
    %149 = vmatpush1.msra.mxu0 0.0
    %150 = vmatprep.subr.mxu0 0.0
    %151 = vmatpush1.msra.mxu0 0.0
    %152 = vmatprep.subr.mxu0 0.0
    %153 = vmatpush1.msra.mxu0 0.0
    %154 = vmatprep.subr.mxu0 0.0
    %155 = vmatpush1.msra.mxu0 0.0
    %156 = vmatprep.subr.mxu0 0.0
    %157 = vmatpush1.msra.mxu0 0.0
    %158 = vmatprep.subr.mxu0 0.0
    %159 = vmatpush1.msra.mxu0 0.0
    %160 = vmatprep.subr.mxu0 0.0
    %161 = vmatpush1.msra.mxu0 0.0
    %162 = vmatprep.subr.mxu0 0.0
    %163 = vmatpush1.msra.mxu0 0.0
    %164 = vmatprep.subr.mxu0 0.0
    %165 = vmatpush1.msra.mxu0 0.0
    %166 = vmatprep.subr.mxu0 0.0
    %167 = vmatpush1.msra.mxu0 0.0
    %168 = vmatprep.subr.mxu0 0.0
    %169 = vmatpush1.msra.mxu0 0.0
    %170 = vmatprep.subr.mxu0 0.0
    %171 = vmatpush1.msra.mxu0 0.0
    %172 = vmatprep.subr.mxu0 0.0
    %173 = vmatpush1.msra.mxu0 0.0
    %174 = vmatprep.subr.mxu0 0.0
    %175 = vmatpush1.msra.mxu0 0.0
    %176 = vmatprep.subr.mxu0 0.0
    %177 = vmatpush1.msra.mxu0 0.0
    %178 = vmatprep.subr.mxu0 0.0
    %179 = vmatpush1.msra.mxu0 0.0
    %180 = vmatprep.subr.mxu0 0.0
    %181 = vmatpush1.msra.mxu0 0.0
    %182 = vmatprep.subr.mxu0 0.0
    %183 = vmatpush1.msra.mxu0 0.0
    %184 = vmatprep.subr.mxu0 0.0
    %185 = vmatpush1.msra.mxu0 0.0
    %186 = vmatprep.subr.mxu0 0.0
    %187 = vmatpush1.msra.mxu0 0.0
    %188 = vmatprep.subr.mxu0 0.0
    %189 = vmatpush1.msra.mxu0 0.0
    %190 = vmatprep.subr.mxu0 0.0
    %191 = vmatpush1.msra.mxu0 0.0
    %192 = vmatprep.subr.mxu0 0.0
    %193 = vmatpush1.msra.mxu0 0.0
    %194 = vmatprep.subr.mxu0 0.0
    %195 = vmatpush1.msra.mxu0 0.0
    %196 = vmatprep.subr.mxu0 0.0
    %197 = vmatpush1.msra.mxu0 0.0
    %198 = vmatprep.subr.mxu0 0.0
    %199 = vmatpush1.msra.mxu0 0.0
    %200 = vmatprep.mubr.f32.mxu0 0.0
    %201 = vmatmul.mubr.f32.gmra.mrb[0].mxu0 %v113
    %v202 = vpop.f32.mrb[0].mxu0
    %v203 = vadd.f32 %v94, %v202
    %v204 = vpop.f32.mrb[0].mxu0
    %v205 = vadd.f32 %v98, %v204
    %206 = vmatprep.mubr.f32.mxu0 0.0
    %207 = vmatmul.mubr.f32.gmra.mrb[0].mxu0 %v116
    %v208 = vpop.f32.mrb[0].mxu0
    %v209 = vadd.f32 %v94, %v208
    %v210 = vpop.f32.mrb[0].mxu0
    %v211 = vadd.f32 %v98, %v210
    %212 = vmatprep.mubr.f32.mxu0 0.0
    %213 = vmatmul.mubr.f32.gmra.mrb[0].mxu0 %v119
    %v214 = vpop.f32.mrb[0].mxu0
    %v215 = vadd.f32 %v94, %v214
    %v216 = vpop.f32.mrb[0].mxu0
    %v217 = vadd.f32 %v98, %v216
    %218 = vmatprep.mubr.f32.mxu0 0.0
    %219 = vmatmul.mubr.f32.gmra.mrb[0].mxu0 %v122
    %v220 = vpop.f32.mrb[0].mxu0
    %v221 = vadd.f32 %v94, %v220
    %v222 = vpop.f32.mrb[0].mxu0
    %v223 = vadd.f32 %v98, %v222
    %224 = vmatprep.mubr.f32.mxu0 0.0
    %225 = vmatmul.mubr.f32.gmra.mrb[0].mxu0 %v125
    %v226 = vpop.f32.mrb[0].mxu0
    %v227 = vadd.f32 %v94, %v226
    %v228 = vpop.f32.mrb[0].mxu0
    %v229 = vadd.f32 %v98, %v228
    %230 = vmatprep.mubr.f32.mxu0 0.0
    %231 = vmatmul.mubr.f32.gmra.mrb[0].mxu0 %v128
    %v232 = vpop.f32.mrb[0].mxu0
    %v233 = vadd.f32 %v94, %v232
    %v234 = vpop.f32.mrb[0].mxu0
    %v235 = vadd.f32 %v98, %v234
    %236 = vmatprep.mubr.f32.mxu0 0.0
    %237 = vmatmul.mubr.f32.gmra.mrb[0].mxu0 %v131
    %v238 = vpop.f32.mrb[0].mxu0
    %v239 = vadd.f32 %v94, %v238
    %v240 = vpop.f32.mrb[0].mxu0
    %v241 = vadd.f32 %v98, %v240
    %242 = vmatprep.mubr.f32.mxu0 0.0
    %243 = vmatmul.mubr.f32.gmra.mrb[0].mxu0 %v134
    %v244 = vpop.f32.mrb[0].mxu0
    %v245 = vadd.f32 %v94, %v244
    %v246 = vpop.f32.mrb[0].mxu0
    %v247 = vadd.f32 %v98, %v246
    %248 = vdwg.mxu0
    %249 = vmatprep.subr.mxu0 %v76
    %250 = vmatpush1.msra.mxu0 %v75
    %251 = vmatprep.subr.mxu0 %v80
    %252 = vmatpush1.msra.mxu0 %v79
    %253 = vmatprep.subr.mxu0 %v84
    %254 = vmatpush1.msra.mxu0 %v83
    %255 = vmatprep.subr.mxu0 %v88
    %256 = vmatpush1.msra.mxu0 %v87
    %257 = vmatprep.subr.mxu0 0.0
    %258 = vmatpush1.msra.mxu0 0.0
    %259 = vmatprep.subr.mxu0 0.0
    %260 = vmatpush1.msra.mxu0 0.0
    %261 = vmatprep.subr.mxu0 0.0
    %262 = vmatpush1.msra.mxu0 0.0
    %263 = vmatprep.subr.mxu0 0.0
    %264 = vmatpush1.msra.mxu0 0.0
    %265 = vmatprep.subr.mxu0 0.0
    %266 = vmatpush1.msra.mxu0 0.0
    %267 = vmatprep.subr.mxu0 0.0
    %268 = vmatpush1.msra.mxu0 0.0
    %269 = vmatprep.subr.mxu0 0.0
    %270 = vmatpush1.msra.mxu0 0.0
    %271 = vmatprep.subr.mxu0 0.0
    %272 = vmatpush1.msra.mxu0 0.0
    %273 = vmatprep.subr.mxu0 0.0
    %274 = vmatpush1.msra.mxu0 0.0
    %275 = vmatprep.subr.mxu0 0.0
    %276 = vmatpush1.msra.mxu0 0.0
    %277 = vmatprep.subr.mxu0 0.0
    %278 = vmatpush1.msra.mxu0 0.0
    %279 = vmatprep.subr.mxu0 0.0
    %280 = vmatpush1.msra.mxu0 0.0
    %281 = vmatprep.subr.mxu0 0.0
    %282 = vmatpush1.msra.mxu0 0.0
    %283 = vmatprep.subr.mxu0 0.0
    %284 = vmatpush1.msra.mxu0 0.0
    %285 = vmatprep.subr.mxu0 0.0
    %286 = vmatpush1.msra.mxu0 0.0
    %287 = vmatprep.subr.mxu0 0.0
    %288 = vmatpush1.msra.mxu0 0.0
    %289 = vmatprep.subr.mxu0 0.0
    %290 = vmatpush1.msra.mxu0 0.0
    %291 = vmatprep.subr.mxu0 0.0
    %292 = vmatpush1.msra.mxu0 0.0
    %293 = vmatprep.subr.mxu0 0.0
    %294 = vmatpush1.msra.mxu0 0.0
    %295 = vmatprep.subr.mxu0 0.0
    %296 = vmatpush1.msra.mxu0 0.0
    %297 = vmatprep.subr.mxu0 0.0
    %298 = vmatpush1.msra.mxu0 0.0
    %299 = vmatprep.subr.mxu0 0.0
    %300 = vmatpush1.msra.mxu0 0.0
    %301 = vmatprep.subr.mxu0 0.0
    %302 = vmatpush1.msra.mxu0 0.0
    %303 = vmatprep.subr.mxu0 0.0
    %304 = vmatpush1.msra.mxu0 0.0
    %305 = vmatprep.subr.mxu0 0.0
    %306 = vmatpush1.msra.mxu0 0.0
    %307 = vmatprep.subr.mxu0 0.0
    %308 = vmatpush1.msra.mxu0 0.0
    %309 = vmatprep.subr.mxu0 0.0
    %310 = vmatpush1.msra.mxu0 0.0
    %311 = vmatprep.subr.mxu0 0.0
    %312 = vmatpush1.msra.mxu0 0.0
    %313 = vmatprep.mubr.f32.mxu0 0.0
    %314 = vmatmul.mubr.f32.gmra.mrb[0].mxu0 %v113
    %v315 = vpop.f32.mrb[0].mxu0
    %v316 = vadd.f32 %v102, %v315
    %v317 = vpop.f32.mrb[0].mxu0
    %v318 = vadd.f32 %v106, %v317
    %319 = vmatprep.mubr.f32.mxu0 0.0
    %320 = vmatmul.mubr.f32.gmra.mrb[0].mxu0 %v116
    %v321 = vpop.f32.mrb[0].mxu0
    %v322 = vadd.f32 %v102, %v321
    %v323 = vpop.f32.mrb[0].mxu0
    %v324 = vadd.f32 %v106, %v323
    %325 = vmatprep.mubr.f32.mxu0 0.0
    %326 = vmatmul.mubr.f32.gmra.mrb[0].mxu0 %v119
    %v327 = vpop.f32.mrb[0].mxu0
    %v328 = vadd.f32 %v102, %v327
    %v329 = vpop.f32.mrb[0].mxu0
    %v330 = vadd.f32 %v106, %v329
    %331 = vmatprep.mubr.f32.mxu0 0.0
    %332 = vmatmul.mubr.f32.gmra.mrb[0].mxu0 %v122
    %v333 = vpop.f32.mrb[0].mxu0
    %v334 = vadd.f32 %v102, %v333
    %v335 = vpop.f32.mrb[0].mxu0
    %v336 = vadd.f32 %v106, %v335
    %337 = vmatprep.mubr.f32.mxu0 0.0
    %338 = vmatmul.mubr.f32.gmra.mrb[0].mxu0 %v125
    %v339 = vpop.f32.mrb[0].mxu0
    %v340 = vadd.f32 %v102, %v339
    %v341 = vpop.f32.mrb[0].mxu0
    %v342 = vadd.f32 %v106, %v341
    %343 = vmatprep.mubr.f32.mxu0 0.0
    %344 = vmatmul.mubr.f32.gmra.mrb[0].mxu0 %v128
    %v345 = vpop.f32.mrb[0].mxu0
    %v346 = vadd.f32 %v102, %v345
    %v347 = vpop.f32.mrb[0].mxu0
    %v348 = vadd.f32 %v106, %v347
    %349 = vmatprep.mubr.f32.mxu0 0.0
    %350 = vmatmul.mubr.f32.gmra.mrb[0].mxu0 %v131
    %v351 = vpop.f32.mrb[0].mxu0
    %v352 = vadd.f32 %v102, %v351
    %v353 = vpop.f32.mrb[0].mxu0
    %v354 = vadd.f32 %v106, %v353
    %355 = vmatprep.mubr.f32.mxu0 0.0
    %356 = vmatmul.mubr.f32.gmra.mrb[0].mxu0 %v134
    %v357 = vpop.f32.mrb[0].mxu0
    %v358 = vadd.f32 %v102, %v357
    %v359 = vpop.f32.mrb[0].mxu0
    %v360 = vadd.f32 %v106, %v359
    %361 = vdwg.mxu0
    %362 = vst [vmem:[#allocation2] sm:$0xff] %v203
    %363 = vst [vmem:[#allocation2 + $0x8] sm:$0xff] %v205
    %364 = vst [vmem:[#allocation2 + $0x10] sm:$0xff] %v316
    %365 = vst [vmem:[#allocation2 + $0x18] sm:$0xff] %v318
    %366 = vst [vmem:[#allocation2 + $0x20] sm:$0xff] %v209
    %367 = vst [vmem:[#allocation2 + $0x28] sm:$0xff] %v211
    %368 = vst [vmem:[#allocation2 + $0x30] sm:$0xff] %v322
    %369 = vst [vmem:[#allocation2 + $0x38] sm:$0xff] %v324
    %370 = vst [vmem:[#allocation2 + $0x40] sm:$0xff] %v215
    %371 = vst [vmem:[#allocation2 + $0x48] sm:$0xff] %v217
    %372 = vst [vmem:[#allocation2 + $0x50] sm:$0xff] %v328
    %373 = vst [vmem:[#allocation2 + $0x58] sm:$0xff] %v330
    %374 = vst [vmem:[#allocation2 + $0x60] sm:$0xff] %v221
    %375 = vst [vmem:[#allocation2 + $0x68] sm:$0xff] %v223
    %376 = vst [vmem:[#allocation2 + $0x70] sm:$0xff] %v334
    %377 = vst [vmem:[#allocation2 + $0x78] sm:$0xff] %v336
    %378 = vst [vmem:[#allocation2 + $0x80] sm:$0xff] %v227
    %379 = vst [vmem:[#allocation2 + $0x88] sm:$0xff] %v229
    %380 = vst [vmem:[#allocation2 + $0x90] sm:$0xff] %v340
    %381 = vst [vmem:[#allocation2 + $0x98] sm:$0xff] %v342
    %382 = vst [vmem:[#allocation2 + $0xa0] sm:$0xff] %v233
    %383 = vst [vmem:[#allocation2 + $0xa8] sm:$0xff] %v235
    %384 = vst [vmem:[#allocation2 + $0xb0] sm:$0xff] %v346
    %385 = vst [vmem:[#allocation2 + $0xb8] sm:$0xff] %v348
    %386 = vst [vmem:[#allocation2 + $0xc0] sm:$0xff] %v239
    %387 = vst [vmem:[#allocation2 + $0xc8] sm:$0xff] %v241
    %388 = vst [vmem:[#allocation2 + $0xd0] sm:$0xff] %v352
    %389 = vst [vmem:[#allocation2 + $0xd8] sm:$0xff] %v354
    %390 = vst [vmem:[#allocation2 + $0xe0] sm:$0xff] %v245
    %391 = vst [vmem:[#allocation2 + $0xe8] sm:$0xff] %v247
    %392 = vst [vmem:[#allocation2 + $0xf0] sm:$0xff] %v358
    %393 = vst [vmem:[#allocation2 + $0xf8] sm:$0xff] %v360
    %s394 = smul.u32 0, 4
    %s395 = smul.addr %s394, 8
    %s396 = scalar_lea.vmem [#allocation2], %s395
    %v397 = vld [vmem:[%s396] sm:$0xff]
    %v398 = vld [vmem:[%s396 + $0x8] sm:$0xff]
    %v399 = vld [vmem:[%s396 + $0x10] sm:$0xff]
    %v400 = vld [vmem:[%s396 + $0x18] sm:$0xff]
    %v401 = vld [vmem:[#allocation7] sm:$0xff]
    %v402 = vld [vmem:[#allocation7 + $0x8] sm:$0xff]
    %v403 = vld [vmem:[#allocation7 + $0x10] sm:$0xff]
    %v404 = vld [vmem:[#allocation7 + $0x18] sm:$0xff]
    %v405 = vld [vmem:[#allocation7 + $0x20] sm:$0xff]
    %v406 = vld [vmem:[#allocation7 + $0x28] sm:$0xff]
    %v407 = vld [vmem:[#allocation7 + $0x30] sm:$0xff]
    %v408 = vld [vmem:[#allocation7 + $0x38] sm:$0xff]
    %v409 = vld [vmem:[#allocation7 + $0x40] sm:$0xff]
    %v410 = vld [vmem:[#allocation7 + $0x48] sm:$0xff]
    %v411 = vld [vmem:[#allocation7 + $0x50] sm:$0xff]
    %v412 = vld [vmem:[#allocation7 + $0x58] sm:$0xff]
    %v413 = vld [vmem:[#allocation7 + $0x60] sm:$0xff]
    %v414 = vld [vmem:[#allocation7 + $0x68] sm:$0xff]
    %v415 = vld [vmem:[#allocation7 + $0x70] sm:$0xff]
    %v416 = vld [vmem:[#allocation7 + $0x78] sm:$0xff]
    %v417 = vld [vmem:[#allocation7 + $0x80] sm:$0xff]
    %v418 = vld [vmem:[#allocation7 + $0x88] sm:$0xff]
    %v419 = vld [vmem:[#allocation7 + $0x90] sm:$0xff]
    %v420 = vld [vmem:[#allocation7 + $0x98] sm:$0xff]
    %v421 = vld [vmem:[#allocation7 + $0xa0] sm:$0xff]
    %v422 = vld [vmem:[#allocation7 + $0xa8] sm:$0xff]
    %v423 = vld [vmem:[#allocation7 + $0xb0] sm:$0xff]
    %v424 = vld [vmem:[#allocation7 + $0xb8] sm:$0xff]
    %v425 = vld [vmem:[#allocation7 + $0xc0] sm:$0xff]
    %v426 = vld [vmem:[#allocation7 + $0xc8] sm:$0xff]
    %v427 = vld [vmem:[#allocation7 + $0xd0] sm:$0xff]
    %v428 = vld [vmem:[#allocation7 + $0xd8] sm:$0xff]
    %v429 = vld [vmem:[#allocation7 + $0xe0] sm:$0xff]
    %v430 = vld [vmem:[#allocation7 + $0xe8] sm:$0xff]
    %v431 = vld [vmem:[#allocation7 + $0xf0] sm:$0xff]
    %v432 = vld [vmem:[#allocation7 + $0xf8] sm:$0xff]
    %v433 = vld [vmem:[#allocation7 + $0x100] sm:$0xff]
    %v434 = vld [vmem:[#allocation7 + $0x108] sm:$0xff]
    %v435 = vld [vmem:[#allocation7 + $0x110] sm:$0xff]
    %v436 = vld [vmem:[#allocation7 + $0x118] sm:$0xff]
    %v437 = vld [vmem:[#allocation7 + $0x120] sm:$0xff]
    %v438 = vld [vmem:[#allocation7 + $0x128] sm:$0xff]
    %v439 = vld [vmem:[#allocation7 + $0x130] sm:$0xff]
    %v440 = vld [vmem:[#allocation7 + $0x138] sm:$0xff]
    %v441 = vld [vmem:[#allocation7 + $0x140] sm:$0xff]
    %v442 = vld [vmem:[#allocation7 + $0x148] sm:$0xff]
    %v443 = vld [vmem:[#allocation7 + $0x150] sm:$0xff]
    %v444 = vld [vmem:[#allocation7 + $0x158] sm:$0xff]
    %v445 = vld [vmem:[#allocation7 + $0x160] sm:$0xff]
    %v446 = vld [vmem:[#allocation7 + $0x168] sm:$0xff]
    %v447 = vld [vmem:[#allocation7 + $0x170] sm:$0xff]
    %v448 = vld [vmem:[#allocation7 + $0x178] sm:$0xff]
    %v449 = vld [vmem:[#allocation7 + $0x180] sm:$0xff]
    %v450 = vld [vmem:[#allocation7 + $0x188] sm:$0xff]
    %v451 = vld [vmem:[#allocation7 + $0x190] sm:$0xff]
    %v452 = vld [vmem:[#allocation7 + $0x198] sm:$0xff]
    %v453 = vld [vmem:[#allocation7 + $0x1a0] sm:$0xff]
    %v454 = vld [vmem:[#allocation7 + $0x1a8] sm:$0xff]
    %v455 = vld [vmem:[#allocation7 + $0x1b0] sm:$0xff]
    %v456 = vld [vmem:[#allocation7 + $0x1b8] sm:$0xff]
    %v457 = vld [vmem:[#allocation7 + $0x1c0] sm:$0xff]
    %v458 = vld [vmem:[#allocation7 + $0x1c8] sm:$0xff]
    %v459 = vld [vmem:[#allocation7 + $0x1d0] sm:$0xff]
    %v460 = vld [vmem:[#allocation7 + $0x1d8] sm:$0xff]
    %v461 = vld [vmem:[#allocation7 + $0x1e0] sm:$0xff]
    %v462 = vld [vmem:[#allocation7 + $0x1e8] sm:$0xff]
    %v463 = vld [vmem:[#allocation7 + $0x1f0] sm:$0xff]
    %v464 = vld [vmem:[#allocation7 + $0x1f8] sm:$0xff]
    %465 = vmatprep.subr.mxu0 %v402
    %466 = vmatpush1.msra.mxu0 %v401
    %467 = vmatprep.subr.mxu0 %v406
    %468 = vmatpush1.msra.mxu0 %v405
    %469 = vmatprep.subr.mxu0 %v410
    %470 = vmatpush1.msra.mxu0 %v409
    %471 = vmatprep.subr.mxu0 %v414
    %472 = vmatpush1.msra.mxu0 %v413
    %473 = vmatprep.subr.mxu0 %v418
    %474 = vmatpush1.msra.mxu0 %v417
    %475 = vmatprep.subr.mxu0 %v422
    %476 = vmatpush1.msra.mxu0 %v421
    %477 = vmatprep.subr.mxu0 %v426
    %478 = vmatpush1.msra.mxu0 %v425
    %479 = vmatprep.subr.mxu0 %v430
    %480 = vmatpush1.msra.mxu0 %v429
    %481 = vmatprep.subr.mxu0 %v434
    %482 = vmatpush1.msra.mxu0 %v433
    %483 = vmatprep.subr.mxu0 %v438
    %484 = vmatpush1.msra.mxu0 %v437
    %485 = vmatprep.subr.mxu0 %v442
    %486 = vmatpush1.msra.mxu0 %v441
    %487 = vmatprep.subr.mxu0 %v446
    %488 = vmatpush1.msra.mxu0 %v445
    %489 = vmatprep.subr.mxu0 %v450
    %490 = vmatpush1.msra.mxu0 %v449
    %491 = vmatprep.subr.mxu0 %v454
    %492 = vmatpush1.msra.mxu0 %v453
    %493 = vmatprep.subr.mxu0 %v458
    %494 = vmatpush1.msra.mxu0 %v457
    %495 = vmatprep.subr.mxu0 %v462
    %496 = vmatpush1.msra.mxu0 %v461
    %497 = vmatprep.subr.mxu0 0.0
    %498 = vmatpush1.msra.mxu0 0.0
    %499 = vmatprep.subr.mxu0 0.0
    %500 = vmatpush1.msra.mxu0 0.0
    %501 = vmatprep.subr.mxu0 0.0
    %502 = vmatpush1.msra.mxu0 0.0
    %503 = vmatprep.subr.mxu0 0.0
    %504 = vmatpush1.msra.mxu0 0.0
    %505 = vmatprep.subr.mxu0 0.0
    %506 = vmatpush1.msra.mxu0 0.0
    %507 = vmatprep.subr.mxu0 0.0
    %508 = vmatpush1.msra.mxu0 0.0
    %509 = vmatprep.subr.mxu0 0.0
    %510 = vmatpush1.msra.mxu0 0.0
    %511 = vmatprep.subr.mxu0 0.0
    %512 = vmatpush1.msra.mxu0 0.0
    %513 = vmatprep.subr.mxu0 0.0
    %514 = vmatpush1.msra.mxu0 0.0
    %515 = vmatprep.subr.mxu0 0.0
    %516 = vmatpush1.msra.mxu0 0.0
    %517 = vmatprep.subr.mxu0 0.0
    %518 = vmatpush1.msra.mxu0 0.0
    %519 = vmatprep.subr.mxu0 0.0
    %520 = vmatpush1.msra.mxu0 0.0
    %521 = vmatprep.subr.mxu0 0.0
    %522 = vmatpush1.msra.mxu0 0.0
    %523 = vmatprep.subr.mxu0 0.0
    %524 = vmatpush1.msra.mxu0 0.0
    %525 = vmatprep.subr.mxu0 0.0
    %526 = vmatpush1.msra.mxu0 0.0
    %527 = vmatprep.subr.mxu0 0.0
    %528 = vmatpush1.msra.mxu0 0.0
    %529 = vmatprep.mubr.f32.mxu0 0.0
    %530 = vmatmul.mubr.f32.gmra.mrb[0].mxu0 0.0
    %v531 = vpop.f32.mrb[0].mxu0
    %v532 = vadd.f32 0.0, %v531
    %v533 = vpop.f32.mrb[0].mxu0
    %v534 = vadd.f32 0.0, %v533
    %535 = vdwg.mxu0
    %536 = vmatprep.subr.mxu0 %v404
    %537 = vmatpush1.msra.mxu0 %v403
    %538 = vmatprep.subr.mxu0 %v408
    %539 = vmatpush1.msra.mxu0 %v407
    %540 = vmatprep.subr.mxu0 %v412
    %541 = vmatpush1.msra.mxu0 %v411
    %542 = vmatprep.subr.mxu0 %v416
    %543 = vmatpush1.msra.mxu0 %v415
    %544 = vmatprep.subr.mxu0 %v420
    %545 = vmatpush1.msra.mxu0 %v419
    %546 = vmatprep.subr.mxu0 %v424
    %547 = vmatpush1.msra.mxu0 %v423
    %548 = vmatprep.subr.mxu0 %v428
    %549 = vmatpush1.msra.mxu0 %v427
    %550 = vmatprep.subr.mxu0 %v432
    %551 = vmatpush1.msra.mxu0 %v431
    %552 = vmatprep.subr.mxu0 %v436
    %553 = vmatpush1.msra.mxu0 %v435
    %554 = vmatprep.subr.mxu0 %v440
    %555 = vmatpush1.msra.mxu0 %v439
    %556 = vmatprep.subr.mxu0 %v444
    %557 = vmatpush1.msra.mxu0 %v443
    %558 = vmatprep.subr.mxu0 %v448
    %559 = vmatpush1.msra.mxu0 %v447
    %560 = vmatprep.subr.mxu0 %v452
    %561 = vmatpush1.msra.mxu0 %v451
    %562 = vmatprep.subr.mxu0 %v456
    %563 = vmatpush1.msra.mxu0 %v455
    %564 = vmatprep.subr.mxu0 %v460
    %565 = vmatpush1.msra.mxu0 %v459
    %566 = vmatprep.subr.mxu0 %v464
    %567 = vmatpush1.msra.mxu0 %v463
    %568 = vmatprep.subr.mxu0 0.0
    %569 = vmatpush1.msra.mxu0 0.0
    %570 = vmatprep.subr.mxu0 0.0
    %571 = vmatpush1.msra.mxu0 0.0
    %572 = vmatprep.subr.mxu0 0.0
    %573 = vmatpush1.msra.mxu0 0.0
    %574 = vmatprep.subr.mxu0 0.0
    %575 = vmatpush1.msra.mxu0 0.0
    %576 = vmatprep.subr.mxu0 0.0
    %577 = vmatpush1.msra.mxu0 0.0
    %578 = vmatprep.subr.mxu0 0.0
    %579 = vmatpush1.msra.mxu0 0.0
    %580 = vmatprep.subr.mxu0 0.0
    %581 = vmatpush1.msra.mxu0 0.0
    %582 = vmatprep.subr.mxu0 0.0
    %583 = vmatpush1.msra.mxu0 0.0
    %584 = vmatprep.subr.mxu0 0.0
    %585 = vmatpush1.msra.mxu0 0.0
    %586 = vmatprep.subr.mxu0 0.0
    %587 = vmatpush1.msra.mxu0 0.0
    %588 = vmatprep.subr.mxu0 0.0
    %589 = vmatpush1.msra.mxu0 0.0
    %590 = vmatprep.subr.mxu0 0.0
    %591 = vmatpush1.msra.mxu0 0.0
    %592 = vmatprep.subr.mxu0 0.0
    %593 = vmatpush1.msra.mxu0 0.0
    %594 = vmatprep.subr.mxu0 0.0
    %595 = vmatpush1.msra.mxu0 0.0
    %596 = vmatprep.subr.mxu0 0.0
    %597 = vmatpush1.msra.mxu0 0.0
    %598 = vmatprep.subr.mxu0 0.0
    %599 = vmatpush1.msra.mxu0 0.0
    %600 = vmatprep.mubr.f32.mxu0 0.0
    %601 = vmatmul.mubr.f32.gmra.mrb[0].mxu0 0.0
    %v602 = vpop.f32.mrb[0].mxu0
    %v603 = vadd.f32 0.0, %v602
    %v604 = vpop.f32.mrb[0].mxu0
    %v605 = vadd.f32 0.0, %v604
    %606 = vdwg.mxu0
    %v607 = vadd.f32 %v397, %v532
    %v608 = vadd.f32 %v398, %v534
    %v609 = vadd.f32 %v399, %v603
    %v610 = vadd.f32 %v400, %v605
    %v611 = vxor.u32 %v607, 2147483648
    %v612 = vmul.f32 %v611, 1.442695
    %v613 = vpow.pop %v612
    %v614 = vadd.f32 %v613, 1.0
    %v615 = vrcp.pop %v614
    %v616 = vmul.f32 1.0, %v615
    %v617 = vxor.u32 %v608, 2147483648
    %v618 = vmul.f32 %v617, 1.442695
    %v619 = vpow.pop %v618
    %v620 = vadd.f32 %v619, 1.0
    %v621 = vrcp.pop %v620
    %v622 = vmul.f32 1.0, %v621
    %v623 = vtanh.pop %v609
    %v624 = vxor.u32 %v610, 2147483648
    %v625 = vmul.f32 %v624, 1.442695
    %v626 = vpow.pop %v625
    %v627 = vadd.f32 %v626, 1.0
    %v628 = vrcp.pop %v627
    %v629 = vmul.f32 1.0, %v628
    %v630 = vmul.f32 %v622, 0.0
    %v631 = vmul.f32 %v616, %v623
    %v632 = vadd.f32 %v630, %v631
    %v633 = vtanh.pop %v632
    %v634 = vmul.f32 %v629, %v633
    %635 = vst [vmem:[#allocation3] sm:$0xff] %v634
    %s636 = smul.u32 1, 4
    %s637 = smul.addr %s636, 8
    %s638 = scalar_lea.vmem [#allocation2], %s637
    %v639 = vld [vmem:[%s638] sm:$0xff]
    %v640 = vld [vmem:[%s638 + $0x8] sm:$0xff]
    %v641 = vld [vmem:[%s638 + $0x10] sm:$0xff]
    %v642 = vld [vmem:[%s638 + $0x18] sm:$0xff]
    %v643 = vld [vmem:[#allocation7] sm:$0xff]
    %v644 = vld [vmem:[#allocation7 + $0x8] sm:$0xff]
    %v645 = vld [vmem:[#allocation7 + $0x10] sm:$0xff]
    %v646 = vld [vmem:[#allocation7 + $0x18] sm:$0xff]
    %v647 = vld [vmem:[#allocation7 + $0x20] sm:$0xff]
    %v648 = vld [vmem:[#allocation7 + $0x28] sm:$0xff]
    %v649 = vld [vmem:[#allocation7 + $0x30] sm:$0xff]
    %v650 = vld [vmem:[#allocation7 + $0x38] sm:$0xff]
    %v651 = vld [vmem:[#allocation7 + $0x40] sm:$0xff]
    %v652 = vld [vmem:[#allocation7 + $0x48] sm:$0xff]
    %v653 = vld [vmem:[#allocation7 + $0x50] sm:$0xff]
    %v654 = vld [vmem:[#allocation7 + $0x58] sm:$0xff]
    %v655 = vld [vmem:[#allocation7 + $0x60] sm:$0xff]
    %v656 = vld [vmem:[#allocation7 + $0x68] sm:$0xff]
    %v657 = vld [vmem:[#allocation7 + $0x70] sm:$0xff]
    %v658 = vld [vmem:[#allocation7 + $0x78] sm:$0xff]
    %v659 = vld [vmem:[#allocation7 + $0x80] sm:$0xff]
    %v660 = vld [vmem:[#allocation7 + $0x88] sm:$0xff]
    %v661 = vld [vmem:[#allocation7 + $0x90] sm:$0xff]
    %v662 = vld [vmem:[#allocation7 + $0x98] sm:$0xff]
    %v663 = vld [vmem:[#allocation7 + $0xa0] sm:$0xff]
    %v664 = vld [vmem:[#allocation7 + $0xa8] sm:$0xff]
    %v665 = vld [vmem:[#allocation7 + $0xb0] sm:$0xff]
    %v666 = vld [vmem:[#allocation7 + $0xb8] sm:$0xff]
    %v667 = vld [vmem:[#allocation7 + $0xc0] sm:$0xff]
    %v668 = vld [vmem:[#allocation7 + $0xc8] sm:$0xff]
    %v669 = vld [vmem:[#allocation7 + $0xd0] sm:$0xff]
    %v670 = vld [vmem:[#allocation7 + $0xd8] sm:$0xff]
    %v671 = vld [vmem:[#allocation7 + $0xe0] sm:$0xff]
    %v672 = vld [vmem:[#allocation7 + $0xe8] sm:$0xff]
    %v673 = vld [vmem:[#allocation7 + $0xf0] sm:$0xff]
    %v674 = vld [vmem:[#allocation7 + $0xf8] sm:$0xff]
    %v675 = vld [vmem:[#allocation7 + $0x100] sm:$0xff]
    %v676 = vld [vmem:[#allocation7 + $0x108] sm:$0xff]
    %v677 = vld [vmem:[#allocation7 + $0x110] sm:$0xff]
    %v678 = vld [vmem:[#allocation7 + $0x118] sm:$0xff]
    %v679 = vld [vmem:[#allocation7 + $0x120] sm:$0xff]
    %v680 = vld [vmem:[#allocation7 + $0x128] sm:$0xff]
    %v681 = vld [vmem:[#allocation7 + $0x130] sm:$0xff]
    %v682 = vld [vmem:[#allocation7 + $0x138] sm:$0xff]
    %v683 = vld [vmem:[#allocation7 + $0x140] sm:$0xff]
    %v684 = vld [vmem:[#allocation7 + $0x148] sm:$0xff]
    %v685 = vld [vmem:[#allocation7 + $0x150] sm:$0xff]
    %v686 = vld [vmem:[#allocation7 + $0x158] sm:$0xff]
    %v687 = vld [vmem:[#allocation7 + $0x160] sm:$0xff]
    %v688 = vld [vmem:[#allocation7 + $0x168] sm:$0xff]
    %v689 = vld [vmem:[#allocation7 + $0x170] sm:$0xff]
    %v690 = vld [vmem:[#allocation7 + $0x178] sm:$0xff]
    %v691 = vld [vmem:[#allocation7 + $0x180] sm:$0xff]
    %v692 = vld [vmem:[#allocation7 + $0x188] sm:$0xff]
    %v693 = vld [vmem:[#allocation7 + $0x190] sm:$0xff]
    %v694 = vld [vmem:[#allocation7 + $0x198] sm:$0xff]
    %v695 = vld [vmem:[#allocation7 + $0x1a0] sm:$0xff]
    %v696 = vld [vmem:[#allocation7 + $0x1a8] sm:$0xff]
    %v697 = vld [vmem:[#allocation7 + $0x1b0] sm:$0xff]
    %v698 = vld [vmem:[#allocation7 + $0x1b8] sm:$0xff]
    %v699 = vld [vmem:[#allocation7 + $0x1c0] sm:$0xff]
    %v700 = vld [vmem:[#allocation7 + $0x1c8] sm:$0xff]
    %v701 = vld [vmem:[#allocation7 + $0x1d0] sm:$0xff]
    %v702 = vld [vmem:[#allocation7 + $0x1d8] sm:$0xff]
    %v703 = vld [vmem:[#allocation7 + $0x1e0] sm:$0xff]
    %v704 = vld [vmem:[#allocation7 + $0x1e8] sm:$0xff]
    %v705 = vld [vmem:[#allocation7 + $0x1f0] sm:$0xff]
    %v706 = vld [vmem:[#allocation7 + $0x1f8] sm:$0xff]
    %707 = vmatprep.subr.mxu0 %v644
    %708 = vmatpush1.msra.mxu0 %v643
    %709 = vmatprep.subr.mxu0 %v648
    %710 = vmatpush1.msra.mxu0 %v647
    %711 = vmatprep.subr.mxu0 %v652
    %712 = vmatpush1.msra.mxu0 %v651
    %713 = vmatprep.subr.mxu0 %v656
    %714 = vmatpush1.msra.mxu0 %v655
    %715 = vmatprep.subr.mxu0 %v660
    %716 = vmatpush1.msra.mxu0 %v659
    %717 = vmatprep.subr.mxu0 %v664
    %718 = vmatpush1.msra.mxu0 %v663
    %719 = vmatprep.subr.mxu0 %v668
    %720 = vmatpush1.msra.mxu0 %v667
    %721 = vmatprep.subr.mxu0 %v672
    %722 = vmatpush1.msra.mxu0 %v671
    %723 = vmatprep.subr.mxu0 %v676
    %724 = vmatpush1.msra.mxu0 %v675
    %725 = vmatprep.subr.mxu0 %v680
    %726 = vmatpush1.msra.mxu0 %v679
    %727 = vmatprep.subr.mxu0 %v684
    %728 = vmatpush1.msra.mxu0 %v683
    %729 = vmatprep.subr.mxu0 %v688
    %730 = vmatpush1.msra.mxu0 %v687
    %731 = vmatprep.subr.mxu0 %v692
    %732 = vmatpush1.msra.mxu0 %v691
    %733 = vmatprep.subr.mxu0 %v696
    %734 = vmatpush1.msra.mxu0 %v695
    %735 = vmatprep.subr.mxu0 %v700
    %736 = vmatpush1.msra.mxu0 %v699
    %737 = vmatprep.subr.mxu0 %v704
    %738 = vmatpush1.msra.mxu0 %v703
    %739 = vmatprep.subr.mxu0 0.0
    %740 = vmatpush1.msra.mxu0 0.0
    %741 = vmatprep.subr.mxu0 0.0
    %742 = vmatpush1.msra.mxu0 0.0
    %743 = vmatprep.subr.mxu0 0.0
    %744 = vmatpush1.msra.mxu0 0.0
    %745 = vmatprep.subr.mxu0 0.0
    %746 = vmatpush1.msra.mxu0 0.0
    %747 = vmatprep.subr.mxu0 0.0
    %748 = vmatpush1.msra.mxu0 0.0
    %749 = vmatprep.subr.mxu0 0.0
    %750 = vmatpush1.msra.mxu0 0.0
    %751 = vmatprep.subr.mxu0 0.0
    %752 = vmatpush1.msra.mxu0 0.0
    %753 = vmatprep.subr.mxu0 0.0
    %754 = vmatpush1.msra.mxu0 0.0
    %755 = vmatprep.subr.mxu0 0.0
    %756 = vmatpush1.msra.mxu0 0.0
    %757 = vmatprep.subr.mxu0 0.0
    %758 = vmatpush1.msra.mxu0 0.0
    %759 = vmatprep.subr.mxu0 0.0
    %760 = vmatpush1.msra.mxu0 0.0
    %761 = vmatprep.subr.mxu0 0.0
    %762 = vmatpush1.msra.mxu0 0.0
    %763 = vmatprep.subr.mxu0 0.0
    %764 = vmatpush1.msra.mxu0 0.0
    %765 = vmatprep.subr.mxu0 0.0
    %766 = vmatpush1.msra.mxu0 0.0
    %767 = vmatprep.subr.mxu0 0.0
    %768 = vmatpush1.msra.mxu0 0.0
    %769 = vmatprep.subr.mxu0 0.0
    %770 = vmatpush1.msra.mxu0 0.0
    %771 = vmatprep.mubr.f32.mxu0 0.0
    %772 = vmatmul.mubr.f32.gmra.mrb[0].mxu0 %v634
    %v773 = vpop.f32.mrb[0].mxu0
    %v774 = vadd.f32 0.0, %v773
    %v775 = vpop.f32.mrb[0].mxu0
    %v776 = vadd.f32 0.0, %v775
    %777 = vdwg.mxu0
    %778 = vmatprep.subr.mxu0 %v646
    %779 = vmatpush1.msra.mxu0 %v645
    %780 = vmatprep.subr.mxu0 %v650
    %781 = vmatpush1.msra.mxu0 %v649
    %782 = vmatprep.subr.mxu0 %v654
    %783 = vmatpush1.msra.mxu0 %v653
    %784 = vmatprep.subr.mxu0 %v658
    %785 = vmatpush1.msra.mxu0 %v657
    %786 = vmatprep.subr.mxu0 %v662
    %787 = vmatpush1.msra.mxu0 %v661
    %788 = vmatprep.subr.mxu0 %v666
    %789 = vmatpush1.msra.mxu0 %v665
    %790 = vmatprep.subr.mxu0 %v670
    %791 = vmatpush1.msra.mxu0 %v669
    %792 = vmatprep.subr.mxu0 %v674
    %793 = vmatpush1.msra.mxu0 %v673
    %794 = vmatprep.subr.mxu0 %v678
    %795 = vmatpush1.msra.mxu0 %v677
    %796 = vmatprep.subr.mxu0 %v682
    %797 = vmatpush1.msra.mxu0 %v681
    %798 = vmatprep.subr.mxu0 %v686
    %799 = vmatpush1.msra.mxu0 %v685
    %800 = vmatprep.subr.mxu0 %v690
    %801 = vmatpush1.msra.mxu0 %v689
    %802 = vmatprep.subr.mxu0 %v694
    %803 = vmatpush1.msra.mxu0 %v693
    %804 = vmatprep.subr.mxu0 %v698
    %805 = vmatpush1.msra.mxu0 %v697
    %806 = vmatprep.subr.mxu0 %v702
    %807 = vmatpush1.msra.mxu0 %v701
    %808 = vmatprep.subr.mxu0 %v706
    %809 = vmatpush1.msra.mxu0 %v705
    %810 = vmatprep.subr.mxu0 0.0
    %811 = vmatpush1.msra.mxu0 0.0
    %812 = vmatprep.subr.mxu0 0.0
    %813 = vmatpush1.msra.mxu0 0.0
    %814 = vmatprep.subr.mxu0 0.0
    %815 = vmatpush1.msra.mxu0 0.0
    %816 = vmatprep.subr.mxu0 0.0
    %817 = vmatpush1.msra.mxu0 0.0
    %818 = vmatprep.subr.mxu0 0.0
    %819 = vmatpush1.msra.mxu0 0.0
    %820 = vmatprep.subr.mxu0 0.0
    %821 = vmatpush1.msra.mxu0 0.0
    %822 = vmatprep.subr.mxu0 0.0
    %823 = vmatpush1.msra.mxu0 0.0
    %824 = vmatprep.subr.mxu0 0.0
    %825 = vmatpush1.msra.mxu0 0.0
    %826 = vmatprep.subr.mxu0 0.0
    %827 = vmatpush1.msra.mxu0 0.0
    %828 = vmatprep.subr.mxu0 0.0
    %829 = vmatpush1.msra.mxu0 0.0
    %830 = vmatprep.subr.mxu0 0.0
    %831 = vmatpush1.msra.mxu0 0.0
    %832 = vmatprep.subr.mxu0 0.0
    %833 = vmatpush1.msra.mxu0 0.0
    %834 = vmatprep.subr.mxu0 0.0
    %835 = vmatpush1.msra.mxu0 0.0
    %836 = vmatprep.subr.mxu0 0.0
    %837 = vmatpush1.msra.mxu0 0.0
    %838 = vmatprep.subr.mxu0 0.0
    %839 = vmatpush1.msra.mxu0 0.0
    %840 = vmatprep.subr.mxu0 0.0
    %841 = vmatpush1.msra.mxu0 0.0
    %842 = vmatprep.mubr.f32.mxu0 0.0
    %843 = vmatmul.mubr.f32.gmra.mrb[0].mxu0 %v634
    %v844 = vpop.f32.mrb[0].mxu0
    %v845 = vadd.f32 0.0, %v844
    %v846 = vpop.f32.mrb[0].mxu0
    %v847 = vadd.f32 0.0, %v846
    %848 = vdwg.mxu0
    %v849 = vadd.f32 %v639, %v774
    %v850 = vadd.f32 %v640, %v776
    %v851 = vadd.f32 %v641, %v845
    %v852 = vadd.f32 %v642, %v847
    %v853 = vxor.u32 %v849, 2147483648
    %v854 = vmul.f32 %v853, 1.442695
    %v855 = vpow.pop %v854
    %v856 = vadd.f32 %v855, 1.0
    %v857 = vrcp.pop %v856
    %v858 = vmul.f32 1.0, %v857
    %v859 = vxor.u32 %v850, 2147483648
    %v860 = vmul.f32 %v859, 1.442695
    %v861 = vpow.pop %v860
    %v862 = vadd.f32 %v861, 1.0
    %v863 = vrcp.pop %v862
    %v864 = vmul.f32 1.0, %v863
    %v865 = vtanh.pop %v851
    %v866 = vxor.u32 %v852, 2147483648
    %v867 = vmul.f32 %v866, 1.442695
    %v868 = vpow.pop %v867
    %v869 = vadd.f32 %v868, 1.0
    %v870 = vrcp.pop %v869
    %v871 = vmul.f32 1.0, %v870
    %v872 = vmul.f32 %v864, %v632
    %v873 = vmul.f32 %v858, %v865
    %v874 = vadd.f32 %v872, %v873
    %v875 = vtanh.pop %v874
    %v876 = vmul.f32 %v871, %v875
    %s877 = scalar_lea.vmem [#allocation3], 8
    %878 = vst [vmem:[%s877] sm:$0xff] %v876
    %s879 = smul.u32 2, 4
    %s880 = smul.addr %s879, 8
    %s881 = scalar_lea.vmem [#allocation2], %s880
    %v882 = vld [vmem:[%s881] sm:$0xff]
    %v883 = vld [vmem:[%s881 + $0x8] sm:$0xff]
    %v884 = vld [vmem:[%s881 + $0x10] sm:$0xff]
    %v885 = vld [vmem:[%s881 + $0x18] sm:$0xff]
    %v886 = vld [vmem:[#allocation7] sm:$0xff]
    %v887 = vld [vmem:[#allocation7 + $0x8] sm:$0xff]
    %v888 = vld [vmem:[#allocation7 + $0x10] sm:$0xff]
    %v889 = vld [vmem:[#allocation7 + $0x18] sm:$0xff]
    %v890 = vld [vmem:[#allocation7 + $0x20] sm:$0xff]
    %v891 = vld [vmem:[#allocation7 + $0x28] sm:$0xff]
    %v892 = vld [vmem:[#allocation7 + $0x30] sm:$0xff]
    %v893 = vld [vmem:[#allocation7 + $0x38] sm:$0xff]
    %v894 = vld [vmem:[#allocation7 + $0x40] sm:$0xff]
    %v895 = vld [vmem:[#allocation7 + $0x48] sm:$0xff]
    %v896 = vld [vmem:[#allocation7 + $0x50] sm:$0xff]
    %v897 = vld [vmem:[#allocation7 + $0x58] sm:$0xff]
    %v898 = vld [vmem:[#allocation7 + $0x60] sm:$0xff]
    %v899 = vld [vmem:[#allocation7 + $0x68] sm:$0xff]
    %v900 = vld [vmem:[#allocation7 + $0x70] sm:$0xff]
    %v901 = vld [vmem:[#allocation7 + $0x78] sm:$0xff]
    %v902 = vld [vmem:[#allocation7 + $0x80] sm:$0xff]
    %v903 = vld [vmem:[#allocation7 + $0x88] sm:$0xff]
    %v904 = vld [vmem:[#allocation7 + $0x90] sm:$0xff]
    %v905 = vld [vmem:[#allocation7 + $0x98] sm:$0xff]
    %v906 = vld [vmem:[#allocation7 + $0xa0] sm:$0xff]
    %v907 = vld [vmem:[#allocation7 + $0xa8] sm:$0xff]
    %v908 = vld [vmem:[#allocation7 + $0xb0] sm:$0xff]
    %v909 = vld [vmem:[#allocation7 + $0xb8] sm:$0xff]
    %v910 = vld [vmem:[#allocation7 + $0xc0] sm:$0xff]
    %v911 = vld [vmem:[#allocation7 + $0xc8] sm:$0xff]
    %v912 = vld [vmem:[#allocation7 + $0xd0] sm:$0xff]
    %v913 = vld [vmem:[#allocation7 + $0xd8] sm:$0xff]
    %v914 = vld [vmem:[#allocation7 + $0xe0] sm:$0xff]
    %v915 = vld [vmem:[#allocation7 + $0xe8] sm:$0xff]
    %v916 = vld [vmem:[#allocation7 + $0xf0] sm:$0xff]
    %v917 = vld [vmem:[#allocation7 + $0xf8] sm:$0xff]
    %v918 = vld [vmem:[#allocation7 + $0x100] sm:$0xff]
    %v919 = vld [vmem:[#allocation7 + $0x108] sm:$0xff]
    %v920 = vld [vmem:[#allocation7 + $0x110] sm:$0xff]
    %v921 = vld [vmem:[#allocation7 + $0x118] sm:$0xff]
    %v922 = vld [vmem:[#allocation7 + $0x120] sm:$0xff]
    %v923 = vld [vmem:[#allocation7 + $0x128] sm:$0xff]
    %v924 = vld [vmem:[#allocation7 + $0x130] sm:$0xff]
    %v925 = vld [vmem:[#allocation7 + $0x138] sm:$0xff]
    %v926 = vld [vmem:[#allocation7 + $0x140] sm:$0xff]
    %v927 = vld [vmem:[#allocation7 + $0x148] sm:$0xff]
    %v928 = vld [vmem:[#allocation7 + $0x150] sm:$0xff]
    %v929 = vld [vmem:[#allocation7 + $0x158] sm:$0xff]
    %v930 = vld [vmem:[#allocation7 + $0x160] sm:$0xff]
    %v931 = vld [vmem:[#allocation7 + $0x168] sm:$0xff]
    %v932 = vld [vmem:[#allocation7 + $0x170] sm:$0xff]
    %v933 = vld [vmem:[#allocation7 + $0x178] sm:$0xff]
    %v934 = vld [vmem:[#allocation7 + $0x180] sm:$0xff]
    %v935 = vld [vmem:[#allocation7 + $0x188] sm:$0xff]
    %v936 = vld [vmem:[#allocation7 + $0x190] sm:$0xff]
    %v937 = vld [vmem:[#allocation7 + $0x198] sm:$0xff]
    %v938 = vld [vmem:[#allocation7 + $0x1a0] sm:$0xff]
    %v939 = vld [vmem:[#allocation7 + $0x1a8] sm:$0xff]
    %v940 = vld [vmem:[#allocation7 + $0x1b0] sm:$0xff]
    %v941 = vld [vmem:[#allocation7 + $0x1b8] sm:$0xff]
    %v942 = vld [vmem:[#allocation7 + $0x1c0] sm:$0xff]
    %v943 = vld [vmem:[#allocation7 + $0x1c8] sm:$0xff]
    %v944 = vld [vmem:[#allocation7 + $0x1d0] sm:$0xff]
    %v945 = vld [vmem:[#allocation7 + $0x1d8] sm:$0xff]
    %v946 = vld [vmem:[#allocation7 + $0x1e0] sm:$0xff]
    %v947 = vld [vmem:[#allocation7 + $0x1e8] sm:$0xff]
    %v948 = vld [vmem:[#allocation7 + $0x1f0] sm:$0xff]
    %v949 = vld [vmem:[#allocation7 + $0x1f8] sm:$0xff]
    %950 = vmatprep.subr.mxu0 %v887
    %951 = vmatpush1.msra.mxu0 %v886
    %952 = vmatprep.subr.mxu0 %v891
    %953 = vmatpush1.msra.mxu0 %v890
    %954 = vmatprep.subr.mxu0 %v895
    %955 = vmatpush1.msra.mxu0 %v894
    %956 = vmatprep.subr.mxu0 %v899
    %957 = vmatpush1.msra.mxu0 %v898
    %958 = vmatprep.subr.mxu0 %v903
    %959 = vmatpush1.msra.mxu0 %v902
    %960 = vmatprep.subr.mxu0 %v907
    %961 = vmatpush1.msra.mxu0 %v906
    %962 = vmatprep.subr.mxu0 %v911
    %963 = vmatpush1.msra.mxu0 %v910
    %964 = vmatprep.subr.mxu0 %v915
    %965 = vmatpush1.msra.mxu0 %v914
    %966 = vmatprep.subr.mxu0 %v919
    %967 = vmatpush1.msra.mxu0 %v918
    %968 = vmatprep.subr.mxu0 %v923
    %969 = vmatpush1.msra.mxu0 %v922
    %970 = vmatprep.subr.mxu0 %v927
    %971 = vmatpush1.msra.mxu0 %v926
    %972 = vmatprep.subr.mxu0 %v931
    %973 = vmatpush1.msra.mxu0 %v930
    %974 = vmatprep.subr.mxu0 %v935
    %975 = vmatpush1.msra.mxu0 %v934
    %976 = vmatprep.subr.mxu0 %v939
    %977 = vmatpush1.msra.mxu0 %v938
    %978 = vmatprep.subr.mxu0 %v943
    %979 = vmatpush1.msra.mxu0 %v942
    %980 = vmatprep.subr.mxu0 %v947
    %981 = vmatpush1.msra.mxu0 %v946
    %982 = vmatprep.subr.mxu0 0.0
    %983 = vmatpush1.msra.mxu0 0.0
    %984 = vmatprep.subr.mxu0 0.0
    %985 = vmatpush1.msra.mxu0 0.0
    %986 = vmatprep.subr.mxu0 0.0
    %987 = vmatpush1.msra.mxu0 0.0
    %988 = vmatprep.subr.mxu0 0.0
    %989 = vmatpush1.msra.mxu0 0.0
    %990 = vmatprep.subr.mxu0 0.0
    %991 = vmatpush1.msra.mxu0 0.0
    %992 = vmatprep.subr.mxu0 0.0
    %993 = vmatpush1.msra.mxu0 0.0
    %994 = vmatprep.subr.mxu0 0.0
    %995 = vmatpush1.msra.mxu0 0.0
    %996 = vmatprep.subr.mxu0 0.0
    %997 = vmatpush1.msra.mxu0 0.0
    %998 = vmatprep.subr.mxu0 0.0
    %999 = vmatpush1.msra.mxu0 0.0
    %1000 = vmatprep.subr.mxu0 0.0
    %1001 = vmatpush1.msra.mxu0 0.0
    %1002 = vmatprep.subr.mxu0 0.0
    %1003 = vmatpush1.msra.mxu0 0.0
    %1004 = vmatprep.subr.mxu0 0.0
    %1005 = vmatpush1.msra.mxu0 0.0
    %1006 = vmatprep.subr.mxu0 0.0
    %1007 = vmatpush1.msra.mxu0 0.0
    %1008 = vmatprep.subr.mxu0 0.0
    %1009 = vmatpush1.msra.mxu0 0.0
    %1010 = vmatprep.subr.mxu0 0.0
    %1011 = vmatpush1.msra.mxu0 0.0
    %1012 = vmatprep.subr.mxu0 0.0
    %1013 = vmatpush1.msra.mxu0 0.0
    %1014 = vmatprep.mubr.f32.mxu0 0.0
    %1015 = vmatmul.mubr.f32.gmra.mrb[0].mxu0 %v876
    %v1016 = vpop.f32.mrb[0].mxu0
    %v1017 = vadd.f32 0.0, %v1016
    %v1018 = vpop.f32.mrb[0].mxu0
    %v1019 = vadd.f32 0.0, %v1018
    %1020 = vdwg.mxu0
    %1021 = vmatprep.subr.mxu0 %v889
    %1022 = vmatpush1.msra.mxu0 %v888
    %1023 = vmatprep.subr.mxu0 %v893
    %1024 = vmatpush1.msra.mxu0 %v892
    %1025 = vmatprep.subr.mxu0 %v897
    %1026 = vmatpush1.msra.mxu0 %v896
    %1027 = vmatprep.subr.mxu0 %v901
    %1028 = vmatpush1.msra.mxu0 %v900
    %1029 = vmatprep.subr.mxu0 %v905
    %1030 = vmatpush1.msra.mxu0 %v904
    %1031 = vmatprep.subr.mxu0 %v909
    %1032 = vmatpush1.msra.mxu0 %v908
    %1033 = vmatprep.subr.mxu0 %v913
    %1034 = vmatpush1.msra.mxu0 %v912
    %1035 = vmatprep.subr.mxu0 %v917
    %1036 = vmatpush1.msra.mxu0 %v916
    %1037 = vmatprep.subr.mxu0 %v921
    %1038 = vmatpush1.msra.mxu0 %v920
    %1039 = vmatprep.subr.mxu0 %v925
    %1040 = vmatpush1.msra.mxu0 %v924
    %1041 = vmatprep.subr.mxu0 %v929
    %1042 = vmatpush1.msra.mxu0 %v928
    %1043 = vmatprep.subr.mxu0 %v933
    %1044 = vmatpush1.msra.mxu0 %v932
    %1045 = vmatprep.subr.mxu0 %v937
    %1046 = vmatpush1.msra.mxu0 %v936
    %1047 = vmatprep.subr.mxu0 %v941
    %1048 = vmatpush1.msra.mxu0 %v940
    %1049 = vmatprep.subr.mxu0 %v945
    %1050 = vmatpush1.msra.mxu0 %v944
    %1051 = vmatprep.subr.mxu0 %v949
    %1052 = vmatpush1.msra.mxu0 %v948
    %1053 = vmatprep.subr.mxu0 0.0
    %1054 = vmatpush1.msra.mxu0 0.0
    %1055 = vmatprep.subr.mxu0 0.0
    %1056 = vmatpush1.msra.mxu0 0.0
    %1057 = vmatprep.subr.mxu0 0.0
    %1058 = vmatpush1.msra.mxu0 0.0
    %1059 = vmatprep.subr.mxu0 0.0
    %1060 = vmatpush1.msra.mxu0 0.0
    %1061 = vmatprep.subr.mxu0 0.0
    %1062 = vmatpush1.msra.mxu0 0.0
    %1063 = vmatprep.subr.mxu0 0.0
    %1064 = vmatpush1.msra.mxu0 0.0
    %1065 = vmatprep.subr.mxu0 0.0
    %1066 = vmatpush1.msra.mxu0 0.0
    %1067 = vmatprep.subr.mxu0 0.0
    %1068 = vmatpush1.msra.mxu0 0.0
    %1069 = vmatprep.subr.mxu0 0.0
    %1070 = vmatpush1.msra.mxu0 0.0
    %1071 = vmatprep.subr.mxu0 0.0
    %1072 = vmatpush1.msra.mxu0 0.0
    %1073 = vmatprep.subr.mxu0 0.0
    %1074 = vmatpush1.msra.mxu0 0.0
    %1075 = vmatprep.subr.mxu0 0.0
    %1076 = vmatpush1.msra.mxu0 0.0
    %1077 = vmatprep.subr.mxu0 0.0
    %1078 = vmatpush1.msra.mxu0 0.0
    %1079 = vmatprep.subr.mxu0 0.0
    %1080 = vmatpush1.msra.mxu0 0.0
    %1081 = vmatprep.subr.mxu0 0.0
    %1082 = vmatpush1.msra.mxu0 0.0
    %1083 = vmatprep.subr.mxu0 0.0
    %1084 = vmatpush1.msra.mxu0 0.0
    %1085 = vmatprep.mubr.f32.mxu0 0.0
    %1086 = vmatmul.mubr.f32.gmra.mrb[0].mxu0 %v876
    %v1087 = vpop.f32.mrb[0].mxu0
    %v1088 = vadd.f32 0.0, %v1087
    %v1089 = vpop.f32.mrb[0].mxu0
    %v1090 = vadd.f32 0.0, %v1089
    %1091 = vdwg.mxu0
    %v1092 = vadd.f32 %v882, %v1017
    %v1093 = vadd.f32 %v883, %v1019
    %v1094 = vadd.f32 %v884, %v1088
    %v1095 = vadd.f32 %v885, %v1090
    %v1096 = vxor.u32 %v1092, 2147483648
    %v1097 = vmul.f32 %v1096, 1.442695
    %v1098 = vpow.pop %v1097
    %v1099 = vadd.f32 %v1098, 1.0
    %v1100 = vrcp.pop %v1099
    %v1101 = vmul.f32 1.0, %v1100
    %v1102 = vxor.u32 %v1093, 2147483648
    %v1103 = vmul.f32 %v1102, 1.442695
    %v1104 = vpow.pop %v1103
    %v1105 = vadd.f32 %v1104, 1.0
    %v1106 = vrcp.pop %v1105
    %v1107 = vmul.f32 1.0, %v1106
    %v1108 = vtanh.pop %v1094
    %v1109 = vxor.u32 %v1095, 2147483648
    %v1110 = vmul.f32 %v1109, 1.442695
    %v1111 = vpow.pop %v1110
    %v1112 = vadd.f32 %v1111, 1.0
    %v1113 = vrcp.pop %v1112
    %v1114 = vmul.f32 1.0, %v1113
    %v1115 = vmul.f32 %v1107, %v874
    %v1116 = vmul.f32 %v1101, %v1108
    %v1117 = vadd.f32 %v1115, %v1116
    %v1118 = vtanh.pop %v1117
    %v1119 = vmul.f32 %v1114, %v1118
    %s1120 = scalar_lea.vmem [#allocation3], 16
    %1121 = vst [vmem:[%s1120] sm:$0xff] %v1119
    %s1122 = smul.u32 3, 4
    %s1123 = smul.addr %s1122, 8
    %s1124 = scalar_lea.vmem [#allocation2], %s1123
    %v1125 = vld [vmem:[%s1124] sm:$0xff]
    %v1126 = vld [vmem:[%s1124 + $0x8] sm:$0xff]
    %v1127 = vld [vmem:[%s1124 + $0x10] sm:$0xff]
    %v1128 = vld [vmem:[%s1124 + $0x18] sm:$0xff]
    %v1129 = vld [vmem:[#allocation7] sm:$0xff]
    %v1130 = vld [vmem:[#allocation7 + $0x8] sm:$0xff]
    %v1131 = vld [vmem:[#allocation7 + $0x10] sm:$0xff]
    %v1132 = vld [vmem:[#allocation7 + $0x18] sm:$0xff]
    %v1133 = vld [vmem:[#allocation7 + $0x20] sm:$0xff]
    %v1134 = vld [vmem:[#allocation7 + $0x28] sm:$0xff]
    %v1135 = vld [vmem:[#allocation7 + $0x30] sm:$0xff]
    %v1136 = vld [vmem:[#allocation7 + $0x38] sm:$0xff]
    %v1137 = vld [vmem:[#allocation7 + $0x40] sm:$0xff]
    %v1138 = vld [vmem:[#allocation7 + $0x48] sm:$0xff]
    %v1139 = vld [vmem:[#allocation7 + $0x50] sm:$0xff]
    %v1140 = vld [vmem:[#allocation7 + $0x58] sm:$0xff]
    %v1141 = vld [vmem:[#allocation7 + $0x60] sm:$0xff]
    %v1142 = vld [vmem:[#allocation7 + $0x68] sm:$0xff]
    %v1143 = vld [vmem:[#allocation7 + $0x70] sm:$0xff]
    %v1144 = vld [vmem:[#allocation7 + $0x78] sm:$0xff]
    %v1145 = vld [vmem:[#allocation7 + $0x80] sm:$0xff]
    %v1146 = vld [vmem:[#allocation7 + $0x88] sm:$0xff]
    %v1147 = vld [vmem:[#allocation7 + $0x90] sm:$0xff]
    %v1148 = vld [vmem:[#allocation7 + $0x98] sm:$0xff]
    %v1149 = vld [vmem:[#allocation7 + $0xa0] sm:$0xff]
    %v1150 = vld [vmem:[#allocation7 + $0xa8] sm:$0xff]
    %v1151 = vld [vmem:[#allocation7 + $0xb0] sm:$0xff]
    %v1152 = vld [vmem:[#allocation7 + $0xb8] sm:$0xff]
    %v1153 = vld [vmem:[#allocation7 + $0xc0] sm:$0xff]
    %v1154 = vld [vmem:[#allocation7 + $0xc8] sm:$0xff]
    %v1155 = vld [vmem:[#allocation7 + $0xd0] sm:$0xff]
    %v1156 = vld [vmem:[#allocation7 + $0xd8] sm:$0xff]
    %v1157 = vld [vmem:[#allocation7 + $0xe0] sm:$0xff]
    %v1158 = vld [vmem:[#allocation7 + $0xe8] sm:$0xff]
    %v1159 = vld [vmem:[#allocation7 + $0xf0] sm:$0xff]
    %v1160 = vld [vmem:[#allocation7 + $0xf8] sm:$0xff]
    %v1161 = vld [vmem:[#allocation7 + $0x100] sm:$0xff]
    %v1162 = vld [vmem:[#allocation7 + $0x108] sm:$0xff]
    %v1163 = vld [vmem:[#allocation7 + $0x110] sm:$0xff]
    %v1164 = vld [vmem:[#allocation7 + $0x118] sm:$0xff]
    %v1165 = vld [vmem:[#allocation7 + $0x120] sm:$0xff]
    %v1166 = vld [vmem:[#allocation7 + $0x128] sm:$0xff]
    %v1167 = vld [vmem:[#allocation7 + $0x130] sm:$0xff]
    %v1168 = vld [vmem:[#allocation7 + $0x138] sm:$0xff]
    %v1169 = vld [vmem:[#allocation7 + $0x140] sm:$0xff]
    %v1170 = vld [vmem:[#allocation7 + $0x148] sm:$0xff]
    %v1171 = vld [vmem:[#allocation7 + $0x150] sm:$0xff]
    %v1172 = vld [vmem:[#allocation7 + $0x158] sm:$0xff]
    %v1173 = vld [vmem:[#allocation7 + $0x160] sm:$0xff]
    %v1174 = vld [vmem:[#allocation7 + $0x168] sm:$0xff]
    %v1175 = vld [vmem:[#allocation7 + $0x170] sm:$0xff]
    %v1176 = vld [vmem:[#allocation7 + $0x178] sm:$0xff]
    %v1177 = vld [vmem:[#allocation7 + $0x180] sm:$0xff]
    %v1178 = vld [vmem:[#allocation7 + $0x188] sm:$0xff]
    %v1179 = vld [vmem:[#allocation7 + $0x190] sm:$0xff]
    %v1180 = vld [vmem:[#allocation7 + $0x198] sm:$0xff]
    %v1181 = vld [vmem:[#allocation7 + $0x1a0] sm:$0xff]
    %v1182 = vld [vmem:[#allocation7 + $0x1a8] sm:$0xff]
    %v1183 = vld [vmem:[#allocation7 + $0x1b0] sm:$0xff]
    %v1184 = vld [vmem:[#allocation7 + $0x1b8] sm:$0xff]
    %v1185 = vld [vmem:[#allocation7 + $0x1c0] sm:$0xff]
    %v1186 = vld [vmem:[#allocation7 + $0x1c8] sm:$0xff]
    %v1187 = vld [vmem:[#allocation7 + $0x1d0] sm:$0xff]
    %v1188 = vld [vmem:[#allocation7 + $0x1d8] sm:$0xff]
    %v1189 = vld [vmem:[#allocation7 + $0x1e0] sm:$0xff]
    %v1190 = vld [vmem:[#allocation7 + $0x1e8] sm:$0xff]
    %v1191 = vld [vmem:[#allocation7 + $0x1f0] sm:$0xff]
    %v1192 = vld [vmem:[#allocation7 + $0x1f8] sm:$0xff]
    %1193 = vmatprep.subr.mxu0 %v1130
    %1194 = vmatpush1.msra.mxu0 %v1129
    %1195 = vmatprep.subr.mxu0 %v1134
    %1196 = vmatpush1.msra.mxu0 %v1133
    %1197 = vmatprep.subr.mxu0 %v1138
    %1198 = vmatpush1.msra.mxu0 %v1137
    %1199 = vmatprep.subr.mxu0 %v1142
    %1200 = vmatpush1.msra.mxu0 %v1141
    %1201 = vmatprep.subr.mxu0 %v1146
    %1202 = vmatpush1.msra.mxu0 %v1145
    %1203 = vmatprep.subr.mxu0 %v1150
    %1204 = vmatpush1.msra.mxu0 %v1149
    %1205 = vmatprep.subr.mxu0 %v1154
    %1206 = vmatpush1.msra.mxu0 %v1153
    %1207 = vmatprep.subr.mxu0 %v1158
    %1208 = vmatpush1.msra.mxu0 %v1157
    %1209 = vmatprep.subr.mxu0 %v1162
    %1210 = vmatpush1.msra.mxu0 %v1161
    %1211 = vmatprep.subr.mxu0 %v1166
    %1212 = vmatpush1.msra.mxu0 %v1165
    %1213 = vmatprep.subr.mxu0 %v1170
    %1214 = vmatpush1.msra.mxu0 %v1169
    %1215 = vmatprep.subr.mxu0 %v1174
    %1216 = vmatpush1.msra.mxu0 %v1173
    %1217 = vmatprep.subr.mxu0 %v1178
    %1218 = vmatpush1.msra.mxu0 %v1177
    %1219 = vmatprep.subr.mxu0 %v1182
    %1220 = vmatpush1.msra.mxu0 %v1181
    %1221 = vmatprep.subr.mxu0 %v1186
    %1222 = vmatpush1.msra.mxu0 %v1185
    %1223 = vmatprep.subr.mxu0 %v1190
    %1224 = vmatpush1.msra.mxu0 %v1189
    %1225 = vmatprep.subr.mxu0 0.0
    %1226 = vmatpush1.msra.mxu0 0.0
    %1227 = vmatprep.subr.mxu0 0.0
    %1228 = vmatpush1.msra.mxu0 0.0
    %1229 = vmatprep.subr.mxu0 0.0
    %1230 = vmatpush1.msra.mxu0 0.0
    %1231 = vmatprep.subr.mxu0 0.0
    %1232 = vmatpush1.msra.mxu0 0.0
    %1233 = vmatprep.subr.mxu0 0.0
    %1234 = vmatpush1.msra.mxu0 0.0
    %1235 = vmatprep.subr.mxu0 0.0
    %1236 = vmatpush1.msra.mxu0 0.0
    %1237 = vmatprep.subr.mxu0 0.0
    %1238 = vmatpush1.msra.mxu0 0.0
    %1239 = vmatprep.subr.mxu0 0.0
    %1240 = vmatpush1.msra.mxu0 0.0
    %1241 = vmatprep.subr.mxu0 0.0
    %1242 = vmatpush1.msra.mxu0 0.0
    %1243 = vmatprep.subr.mxu0 0.0
    %1244 = vmatpush1.msra.mxu0 0.0
    %1245 = vmatprep.subr.mxu0 0.0
    %1246 = vmatpush1.msra.mxu0 0.0
    %1247 = vmatprep.subr.mxu0 0.0
    %1248 = vmatpush1.msra.mxu0 0.0
    %1249 = vmatprep.subr.mxu0 0.0
    %1250 = vmatpush1.msra.mxu0 0.0
    %1251 = vmatprep.subr.mxu0 0.0
    %1252 = vmatpush1.msra.mxu0 0.0
    %1253 = vmatprep.subr.mxu0 0.0
    %1254 = vmatpush1.msra.mxu0 0.0
    %1255 = vmatprep.subr.mxu0 0.0
    %1256 = vmatpush1.msra.mxu0 0.0
    %1257 = vmatprep.mubr.f32.mxu0 0.0
    %1258 = vmatmul.mubr.f32.gmra.mrb[0].mxu0 %v1119
    %v1259 = vpop.f32.mrb[0].mxu0
    %v1260 = vadd.f32 0.0, %v1259
    %v1261 = vpop.f32.mrb[0].mxu0
    %v1262 = vadd.f32 0.0, %v1261
    %1263 = vdwg.mxu0
    %1264 = vmatprep.subr.mxu0 %v1132
    %1265 = vmatpush1.msra.mxu0 %v1131
    %1266 = vmatprep.subr.mxu0 %v1136
    %1267 = vmatpush1.msra.mxu0 %v1135
    %1268 = vmatprep.subr.mxu0 %v1140
    %1269 = vmatpush1.msra.mxu0 %v1139
    %1270 = vmatprep.subr.mxu0 %v1144
    %1271 = vmatpush1.msra.mxu0 %v1143
    %1272 = vmatprep.subr.mxu0 %v1148
    %1273 = vmatpush1.msra.mxu0 %v1147
    %1274 = vmatprep.subr.mxu0 %v1152
    %1275 = vmatpush1.msra.mxu0 %v1151
    %1276 = vmatprep.subr.mxu0 %v1156
    %1277 = vmatpush1.msra.mxu0 %v1155
    %1278 = vmatprep.subr.mxu0 %v1160
    %1279 = vmatpush1.msra.mxu0 %v1159
    %1280 = vmatprep.subr.mxu0 %v1164
    %1281 = vmatpush1.msra.mxu0 %v1163
    %1282 = vmatprep.subr.mxu0 %v1168
    %1283 = vmatpush1.msra.mxu0 %v1167
    %1284 = vmatprep.subr.mxu0 %v1172
    %1285 = vmatpush1.msra.mxu0 %v1171
    %1286 = vmatprep.subr.mxu0 %v1176
    %1287 = vmatpush1.msra.mxu0 %v1175
    %1288 = vmatprep.subr.mxu0 %v1180
    %1289 = vmatpush1.msra.mxu0 %v1179
    %1290 = vmatprep.subr.mxu0 %v1184
    %1291 = vmatpush1.msra.mxu0 %v1183
    %1292 = vmatprep.subr.mxu0 %v1188
    %1293 = vmatpush1.msra.mxu0 %v1187
    %1294 = vmatprep.subr.mxu0 %v1192
    %1295 = vmatpush1.msra.mxu0 %v1191
    %1296 = vmatprep.subr.mxu0 0.0
    %1297 = vmatpush1.msra.mxu0 0.0
    %1298 = vmatprep.subr.mxu0 0.0
    %1299 = vmatpush1.msra.mxu0 0.0
    %1300 = vmatprep.subr.mxu0 0.0
    %1301 = vmatpush1.msra.mxu0 0.0
    %1302 = vmatprep.subr.mxu0 0.0
    %1303 = vmatpush1.msra.mxu0 0.0
    %1304 = vmatprep.subr.mxu0 0.0
    %1305 = vmatpush1.msra.mxu0 0.0
    %1306 = vmatprep.subr.mxu0 0.0
    %1307 = vmatpush1.msra.mxu0 0.0
    %1308 = vmatprep.subr.mxu0 0.0
    %1309 = vmatpush1.msra.mxu0 0.0
    %1310 = vmatprep.subr.mxu0 0.0
    %1311 = vmatpush1.msra.mxu0 0.0
    %1312 = vmatprep.subr.mxu0 0.0
    %1313 = vmatpush1.msra.mxu0 0.0
    %1314 = vmatprep.subr.mxu0 0.0
    %1315 = vmatpush1.msra.mxu0 0.0
    %1316 = vmatprep.subr.mxu0 0.0
    %1317 = vmatpush1.msra.mxu0 0.0
    %1318 = vmatprep.subr.mxu0 0.0
    %1319 = vmatpush1.msra.mxu0 0.0
    %1320 = vmatprep.subr.mxu0 0.0
    %1321 = vmatpush1.msra.mxu0 0.0
    %1322 = vmatprep.subr.mxu0 0.0
    %1323 = vmatpush1.msra.mxu0 0.0
    %1324 = vmatprep.subr.mxu0 0.0
    %1325 = vmatpush1.msra.mxu0 0.0
    %1326 = vmatprep.subr.mxu0 0.0
    %1327 = vmatpush1.msra.mxu0 0.0
    %1328 = vmatprep.mubr.f32.mxu0 0.0
    %1329 = vmatmul.mubr.f32.gmra.mrb[0].mxu0 %v1119
    %v1330 = vpop.f32.mrb[0].mxu0
    %v1331 = vadd.f32 0.0, %v1330
    %v1332 = vpop.f32.mrb[0].mxu0
    %v1333 = vadd.f32 0.0, %v1332
    %1334 = vdwg.mxu0
    %v1335 = vadd.f32 %v1125, %v1260
    %v1336 = vadd.f32 %v1126, %v1262
    %v1337 = vadd.f32 %v1127, %v1331
    %v1338 = vadd.f32 %v1128, %v1333
    %v1339 = vxor.u32 %v1335, 2147483648
    %v1340 = vmul.f32 %v1339, 1.442695
    %v1341 = vpow.pop %v1340
    %v1342 = vadd.f32 %v1341, 1.0
    %v1343 = vrcp.pop %v1342
    %v1344 = vmul.f32 1.0, %v1343
    %v1345 = vxor.u32 %v1336, 2147483648
    %v1346 = vmul.f32 %v1345, 1.442695
    %v1347 = vpow.pop %v1346
    %v1348 = vadd.f32 %v1347, 1.0
    %v1349 = vrcp.pop %v1348
    %v1350 = vmul.f32 1.0, %v1349
    %v1351 = vtanh.pop %v1337
    %v1352 = vxor.u32 %v1338, 2147483648
    %v1353 = vmul.f32 %v1352, 1.442695
    %v1354 = vpow.pop %v1353
    %v1355 = vadd.f32 %v1354, 1.0
    %v1356 = vrcp.pop %v1355
    %v1357 = vmul.f32 1.0, %v1356
    %v1358 = vmul.f32 %v1350, %v1117
    %v1359 = vmul.f32 %v1344, %v1351
    %v1360 = vadd.f32 %v1358, %v1359
    %v1361 = vtanh.pop %v1360
    %v1362 = vmul.f32 %v1357, %v1361
    %s1363 = scalar_lea.vmem [#allocation3], 24
    %1364 = vst [vmem:[%s1363] sm:$0xff] %v1362
    %s1365 = smul.u32 4, 4
    %s1366 = smul.addr %s1365, 8
    %s1367 = scalar_lea.vmem [#allocation2], %s1366
    %v1368 = vld [vmem:[%s1367] sm:$0xff]
    %v1369 = vld [vmem:[%s1367 + $0x8] sm:$0xff]
    %v1370 = vld [vmem:[%s1367 + $0x10] sm:$0xff]
    %v1371 = vld [vmem:[%s1367 + $0x18] sm:$0xff]
    %v1372 = vld [vmem:[#allocation7] sm:$0xff]
    %v1373 = vld [vmem:[#allocation7 + $0x8] sm:$0xff]
    %v1374 = vld [vmem:[#allocation7 + $0x10] sm:$0xff]
    %v1375 = vld [vmem:[#allocation7 + $0x18] sm:$0xff]
    %v1376 = vld [vmem:[#allocation7 + $0x20] sm:$0xff]
    %v1377 = vld [vmem:[#allocation7 + $0x28] sm:$0xff]
    %v1378 = vld [vmem:[#allocation7 + $0x30] sm:$0xff]
    %v1379 = vld [vmem:[#allocation7 + $0x38] sm:$0xff]
    %v1380 = vld [vmem:[#allocation7 + $0x40] sm:$0xff]
    %v1381 = vld [vmem:[#allocation7 + $0x48] sm:$0xff]
    %v1382 = vld [vmem:[#allocation7 + $0x50] sm:$0xff]
    %v1383 = vld [vmem:[#allocation7 + $0x58] sm:$0xff]
    %v1384 = vld [vmem:[#allocation7 + $0x60] sm:$0xff]
    %v1385 = vld [vmem:[#allocation7 + $0x68] sm:$0xff]
    %v1386 = vld [vmem:[#allocation7 + $0x70] sm:$0xff]
    %v1387 = vld [vmem:[#allocation7 + $0x78] sm:$0xff]
    %v1388 = vld [vmem:[#allocation7 + $0x80] sm:$0xff]
    %v1389 = vld [vmem:[#allocation7 + $0x88] sm:$0xff]
    %v1390 = vld [vmem:[#allocation7 + $0x90] sm:$0xff]
    %v1391 = vld [vmem:[#allocation7 + $0x98] sm:$0xff]
    %v1392 = vld [vmem:[#allocation7 + $0xa0] sm:$0xff]
    %v1393 = vld [vmem:[#allocation7 + $0xa8] sm:$0xff]
    %v1394 = vld [vmem:[#allocation7 + $0xb0] sm:$0xff]
    %v1395 = vld [vmem:[#allocation7 + $0xb8] sm:$0xff]
    %v1396 = vld [vmem:[#allocation7 + $0xc0] sm:$0xff]
    %v1397 = vld [vmem:[#allocation7 + $0xc8] sm:$0xff]
    %v1398 = vld [vmem:[#allocation7 + $0xd0] sm:$0xff]
    %v1399 = vld [vmem:[#allocation7 + $0xd8] sm:$0xff]
    %v1400 = vld [vmem:[#allocation7 + $0xe0] sm:$0xff]
    %v1401 = vld [vmem:[#allocation7 + $0xe8] sm:$0xff]
    %v1402 = vld [vmem:[#allocation7 + $0xf0] sm:$0xff]
    %v1403 = vld [vmem:[#allocation7 + $0xf8] sm:$0xff]
    %v1404 = vld [vmem:[#allocation7 + $0x100] sm:$0xff]
    %v1405 = vld [vmem:[#allocation7 + $0x108] sm:$0xff]
    %v1406 = vld [vmem:[#allocation7 + $0x110] sm:$0xff]
    %v1407 = vld [vmem:[#allocation7 + $0x118] sm:$0xff]
    %v1408 = vld [vmem:[#allocation7 + $0x120] sm:$0xff]
    %v1409 = vld [vmem:[#allocation7 + $0x128] sm:$0xff]
    %v1410 = vld [vmem:[#allocation7 + $0x130] sm:$0xff]
    %v1411 = vld [vmem:[#allocation7 + $0x138] sm:$0xff]
    %v1412 = vld [vmem:[#allocation7 + $0x140] sm:$0xff]
    %v1413 = vld [vmem:[#allocation7 + $0x148] sm:$0xff]
    %v1414 = vld [vmem:[#allocation7 + $0x150] sm:$0xff]
    %v1415 = vld [vmem:[#allocation7 + $0x158] sm:$0xff]
    %v1416 = vld [vmem:[#allocation7 + $0x160] sm:$0xff]
    %v1417 = vld [vmem:[#allocation7 + $0x168] sm:$0xff]
    %v1418 = vld [vmem:[#allocation7 + $0x170] sm:$0xff]
    %v1419 = vld [vmem:[#allocation7 + $0x178] sm:$0xff]
    %v1420 = vld [vmem:[#allocation7 + $0x180] sm:$0xff]
    %v1421 = vld [vmem:[#allocation7 + $0x188] sm:$0xff]
    %v1422 = vld [vmem:[#allocation7 + $0x190] sm:$0xff]
    %v1423 = vld [vmem:[#allocation7 + $0x198] sm:$0xff]
    %v1424 = vld [vmem:[#allocation7 + $0x1a0] sm:$0xff]
    %v1425 = vld [vmem:[#allocation7 + $0x1a8] sm:$0xff]
    %v1426 = vld [vmem:[#allocation7 + $0x1b0] sm:$0xff]
    %v1427 = vld [vmem:[#allocation7 + $0x1b8] sm:$0xff]
    %v1428 = vld [vmem:[#allocation7 + $0x1c0] sm:$0xff]
    %v1429 = vld [vmem:[#allocation7 + $0x1c8] sm:$0xff]
    %v1430 = vld [vmem:[#allocation7 + $0x1d0] sm:$0xff]
    %v1431 = vld [vmem:[#allocation7 + $0x1d8] sm:$0xff]
    %v1432 = vld [vmem:[#allocation7 + $0x1e0] sm:$0xff]
    %v1433 = vld [vmem:[#allocation7 + $0x1e8] sm:$0xff]
    %v1434 = vld [vmem:[#allocation7 + $0x1f0] sm:$0xff]
    %v1435 = vld [vmem:[#allocation7 + $0x1f8] sm:$0xff]
    %1436 = vmatprep.subr.mxu0 %v1373
    %1437 = vmatpush1.msra.mxu0 %v1372
    %1438 = vmatprep.subr.mxu0 %v1377
    %1439 = vmatpush1.msra.mxu0 %v1376
    %1440 = vmatprep.subr.mxu0 %v1381
    %1441 = vmatpush1.msra.mxu0 %v1380
    %1442 = vmatprep.subr.mxu0 %v1385
    %1443 = vmatpush1.msra.mxu0 %v1384
    %1444 = vmatprep.subr.mxu0 %v1389
    %1445 = vmatpush1.msra.mxu0 %v1388
    %1446 = vmatprep.subr.mxu0 %v1393
    %1447 = vmatpush1.msra.mxu0 %v1392
    %1448 = vmatprep.subr.mxu0 %v1397
    %1449 = vmatpush1.msra.mxu0 %v1396
    %1450 = vmatprep.subr.mxu0 %v1401
    %1451 = vmatpush1.msra.mxu0 %v1400
    %1452 = vmatprep.subr.mxu0 %v1405
    %1453 = vmatpush1.msra.mxu0 %v1404
    %1454 = vmatprep.subr.mxu0 %v1409
    %1455 = vmatpush1.msra.mxu0 %v1408
    %1456 = vmatprep.subr.mxu0 %v1413
    %1457 = vmatpush1.msra.mxu0 %v1412
    %1458 = vmatprep.subr.mxu0 %v1417
    %1459 = vmatpush1.msra.mxu0 %v1416
    %1460 = vmatprep.subr.mxu0 %v1421
    %1461 = vmatpush1.msra.mxu0 %v1420
    %1462 = vmatprep.subr.mxu0 %v1425
    %1463 = vmatpush1.msra.mxu0 %v1424
    %1464 = vmatprep.subr.mxu0 %v1429
    %1465 = vmatpush1.msra.mxu0 %v1428
    %1466 = vmatprep.subr.mxu0 %v1433
    %1467 = vmatpush1.msra.mxu0 %v1432
    %1468 = vmatprep.subr.mxu0 0.0
    %1469 = vmatpush1.msra.mxu0 0.0
    %1470 = vmatprep.subr.mxu0 0.0
    %1471 = vmatpush1.msra.mxu0 0.0
    %1472 = vmatprep.subr.mxu0 0.0
    %1473 = vmatpush1.msra.mxu0 0.0
    %1474 = vmatprep.subr.mxu0 0.0
    %1475 = vmatpush1.msra.mxu0 0.0
    %1476 = vmatprep.subr.mxu0 0.0
    %1477 = vmatpush1.msra.mxu0 0.0
    %1478 = vmatprep.subr.mxu0 0.0
    %1479 = vmatpush1.msra.mxu0 0.0
    %1480 = vmatprep.subr.mxu0 0.0
    %1481 = vmatpush1.msra.mxu0 0.0
    %1482 = vmatprep.subr.mxu0 0.0
    %1483 = vmatpush1.msra.mxu0 0.0
    %1484 = vmatprep.subr.mxu0 0.0
    %1485 = vmatpush1.msra.mxu0 0.0
    %1486 = vmatprep.subr.mxu0 0.0
    %1487 = vmatpush1.msra.mxu0 0.0
    %1488 = vmatprep.subr.mxu0 0.0
    %1489 = vmatpush1.msra.mxu0 0.0
    %1490 = vmatprep.subr.mxu0 0.0
    %1491 = vmatpush1.msra.mxu0 0.0
    %1492 = vmatprep.subr.mxu0 0.0
    %1493 = vmatpush1.msra.mxu0 0.0
    %1494 = vmatprep.subr.mxu0 0.0
    %1495 = vmatpush1.msra.mxu0 0.0
    %1496 = vmatprep.subr.mxu0 0.0
    %1497 = vmatpush1.msra.mxu0 0.0
    %1498 = vmatprep.subr.mxu0 0.0
    %1499 = vmatpush1.msra.mxu0 0.0
    %1500 = vmatprep.mubr.f32.mxu0 0.0
    %1501 = vmatmul.mubr.f32.gmra.mrb[0].mxu0 %v1362
    %v1502 = vpop.f32.mrb[0].mxu0
    %v1503 = vadd.f32 0.0, %v1502
    %v1504 = vpop.f32.mrb[0].mxu0
    %v1505 = vadd.f32 0.0, %v1504
    %1506 = vdwg.mxu0
    %1507 = vmatprep.subr.mxu0 %v1375
    %1508 = vmatpush1.msra.mxu0 %v1374
    %1509 = vmatprep.subr.mxu0 %v1379
    %1510 = vmatpush1.msra.mxu0 %v1378
    %1511 = vmatprep.subr.mxu0 %v1383
    %1512 = vmatpush1.msra.mxu0 %v1382
    %1513 = vmatprep.subr.mxu0 %v1387
    %1514 = vmatpush1.msra.mxu0 %v1386
    %1515 = vmatprep.subr.mxu0 %v1391
    %1516 = vmatpush1.msra.mxu0 %v1390
    %1517 = vmatprep.subr.mxu0 %v1395
    %1518 = vmatpush1.msra.mxu0 %v1394
    %1519 = vmatprep.subr.mxu0 %v1399
    %1520 = vmatpush1.msra.mxu0 %v1398
    %1521 = vmatprep.subr.mxu0 %v1403
    %1522 = vmatpush1.msra.mxu0 %v1402
    %1523 = vmatprep.subr.mxu0 %v1407
    %1524 = vmatpush1.msra.mxu0 %v1406
    %1525 = vmatprep.subr.mxu0 %v1411
    %1526 = vmatpush1.msra.mxu0 %v1410
    %1527 = vmatprep.subr.mxu0 %v1415
    %1528 = vmatpush1.msra.mxu0 %v1414
    %1529 = vmatprep.subr.mxu0 %v1419
    %1530 = vmatpush1.msra.mxu0 %v1418
    %1531 = vmatprep.subr.mxu0 %v1423
    %1532 = vmatpush1.msra.mxu0 %v1422
    %1533 = vmatprep.subr.mxu0 %v1427
    %1534 = vmatpush1.msra.mxu0 %v1426
    %1535 = vmatprep.subr.mxu0 %v1431
    %1536 = vmatpush1.msra.mxu0 %v1430
    %1537 = vmatprep.subr.mxu0 %v1435
    %1538 = vmatpush1.msra.mxu0 %v1434
    %1539 = vmatprep.subr.mxu0 0.0
    %1540 = vmatpush1.msra.mxu0 0.0
    %1541 = vmatprep.subr.mxu0 0.0
    %1542 = vmatpush1.msra.mxu0 0.0
    %1543 = vmatprep.subr.mxu0 0.0
    %1544 = vmatpush1.msra.mxu0 0.0
    %1545 = vmatprep.subr.mxu0 0.0
    %1546 = vmatpush1.msra.mxu0 0.0
    %1547 = vmatprep.subr.mxu0 0.0
    %1548 = vmatpush1.msra.mxu0 0.0
    %1549 = vmatprep.subr.mxu0 0.0
    %1550 = vmatpush1.msra.mxu0 0.0
    %1551 = vmatprep.subr.mxu0 0.0
    %1552 = vmatpush1.msra.mxu0 0.0
    %1553 = vmatprep.subr.mxu0 0.0
    %1554 = vmatpush1.msra.mxu0 0.0
    %1555 = vmatprep.subr.mxu0 0.0
    %1556 = vmatpush1.msra.mxu0 0.0
    %1557 = vmatprep.subr.mxu0 0.0
    %1558 = vmatpush1.msra.mxu0 0.0
    %1559 = vmatprep.subr.mxu0 0.0
    %1560 = vmatpush1.msra.mxu0 0.0
    %1561 = vmatprep.subr.mxu0 0.0
    %1562 = vmatpush1.msra.mxu0 0.0
    %1563 = vmatprep.subr.mxu0 0.0
    %1564 = vmatpush1.msra.mxu0 0.0
    %1565 = vmatprep.subr.mxu0 0.0
    %1566 = vmatpush1.msra.mxu0 0.0
    %1567 = vmatprep.subr.mxu0 0.0
    %1568 = vmatpush1.msra.mxu0 0.0
    %1569 = vmatprep.subr.mxu0 0.0
    %1570 = vmatpush1.msra.mxu0 0.0
    %1571 = vmatprep.mubr.f32.mxu0 0.0
    %1572 = vmatmul.mubr.f32.gmra.mrb[0].mxu0 %v1362
    %v1573 = vpop.f32.mrb[0].mxu0
    %v1574 = vadd.f32 0.0, %v1573
    %v1575 = vpop.f32.mrb[0].mxu0
    %v1576 = vadd.f32 0.0, %v1575
    %1577 = vdwg.mxu0
    %v1578 = vadd.f32 %v1368, %v1503
    %v1579 = vadd.f32 %v1369, %v1505
    %v1580 = vadd.f32 %v1370, %v1574
    %v1581 = vadd.f32 %v1371, %v1576
    %v1582 = vxor.u32 %v1578, 2147483648
    %v1583 = vmul.f32 %v1582, 1.442695
    %v1584 = vpow.pop %v1583
    %v1585 = vadd.f32 %v1584, 1.0
    %v1586 = vrcp.pop %v1585
    %v1587 = vmul.f32 1.0, %v1586
    %v1588 = vxor.u32 %v1579, 2147483648
    %v1589 = vmul.f32 %v1588, 1.442695
    %v1590 = vpow.pop %v1589
    %v1591 = vadd.f32 %v1590, 1.0
    %v1592 = vrcp.pop %v1591
    %v1593 = vmul.f32 1.0, %v1592
    %v1594 = vtanh.pop %v1580
    %v1595 = vxor.u32 %v1581, 2147483648
    %v1596 = vmul.f32 %v1595, 1.442695
    %v1597 = vpow.pop %v1596
    %v1598 = vadd.f32 %v1597, 1.0
    %v1599 = vrcp.pop %v1598
    %v1600 = vmul.f32 1.0, %v1599
    %v1601 = vmul.f32 %v1593, %v1360
    %v1602 = vmul.f32 %v1587, %v1594
    %v1603 = vadd.f32 %v1601, %v1602
    %v1604 = vtanh.pop %v1603
    %v1605 = vmul.f32 %v1600, %v1604
    %s1606 = scalar_lea.vmem [#allocation3], 32
    %1607 = vst [vmem:[%s1606] sm:$0xff] %v1605
    %s1608 = smul.u32 5, 4
    %s1609 = smul.addr %s1608, 8
    %s1610 = scalar_lea.vmem [#allocation2], %s1609
    %v1611 = vld [vmem:[%s1610] sm:$0xff]
    %v1612 = vld [vmem:[%s1610 + $0x8] sm:$0xff]
    %v1613 = vld [vmem:[%s1610 + $0x10] sm:$0xff]
    %v1614 = vld [vmem:[%s1610 + $0x18] sm:$0xff]
    %v1615 = vld [vmem:[#allocation7] sm:$0xff]
    %v1616 = vld [vmem:[#allocation7 + $0x8] sm:$0xff]
    %v1617 = vld [vmem:[#allocation7 + $0x10] sm:$0xff]
    %v1618 = vld [vmem:[#allocation7 + $0x18] sm:$0xff]
    %v1619 = vld [vmem:[#allocation7 + $0x20] sm:$0xff]
    %v1620 = vld [vmem:[#allocation7 + $0x28] sm:$0xff]
    %v1621 = vld [vmem:[#allocation7 + $0x30] sm:$0xff]
    %v1622 = vld [vmem:[#allocation7 + $0x38] sm:$0xff]
    %v1623 = vld [vmem:[#allocation7 + $0x40] sm:$0xff]
    %v1624 = vld [vmem:[#allocation7 + $0x48] sm:$0xff]
    %v1625 = vld [vmem:[#allocation7 + $0x50] sm:$0xff]
    %v1626 = vld [vmem:[#allocation7 + $0x58] sm:$0xff]
    %v1627 = vld [vmem:[#allocation7 + $0x60] sm:$0xff]
    %v1628 = vld [vmem:[#allocation7 + $0x68] sm:$0xff]
    %v1629 = vld [vmem:[#allocation7 + $0x70] sm:$0xff]
    %v1630 = vld [vmem:[#allocation7 + $0x78] sm:$0xff]
    %v1631 = vld [vmem:[#allocation7 + $0x80] sm:$0xff]
    %v1632 = vld [vmem:[#allocation7 + $0x88] sm:$0xff]
    %v1633 = vld [vmem:[#allocation7 + $0x90] sm:$0xff]
    %v1634 = vld [vmem:[#allocation7 + $0x98] sm:$0xff]
    %v1635 = vld [vmem:[#allocation7 + $0xa0] sm:$0xff]
    %v1636 = vld [vmem:[#allocation7 + $0xa8] sm:$0xff]
    %v1637 = vld [vmem:[#allocation7 + $0xb0] sm:$0xff]
    %v1638 = vld [vmem:[#allocation7 + $0xb8] sm:$0xff]
    %v1639 = vld [vmem:[#allocation7 + $0xc0] sm:$0xff]
    %v1640 = vld [vmem:[#allocation7 + $0xc8] sm:$0xff]
    %v1641 = vld [vmem:[#allocation7 + $0xd0] sm:$0xff]
    %v1642 = vld [vmem:[#allocation7 + $0xd8] sm:$0xff]
    %v1643 = vld [vmem:[#allocation7 + $0xe0] sm:$0xff]
    %v1644 = vld [vmem:[#allocation7 + $0xe8] sm:$0xff]
    %v1645 = vld [vmem:[#allocation7 + $0xf0] sm:$0xff]
    %v1646 = vld [vmem:[#allocation7 + $0xf8] sm:$0xff]
    %v1647 = vld [vmem:[#allocation7 + $0x100] sm:$0xff]
    %v1648 = vld [vmem:[#allocation7 + $0x108] sm:$0xff]
    %v1649 = vld [vmem:[#allocation7 + $0x110] sm:$0xff]
    %v1650 = vld [vmem:[#allocation7 + $0x118] sm:$0xff]
    %v1651 = vld [vmem:[#allocation7 + $0x120] sm:$0xff]
    %v1652 = vld [vmem:[#allocation7 + $0x128] sm:$0xff]
    %v1653 = vld [vmem:[#allocation7 + $0x130] sm:$0xff]
    %v1654 = vld [vmem:[#allocation7 + $0x138] sm:$0xff]
    %v1655 = vld [vmem:[#allocation7 + $0x140] sm:$0xff]
    %v1656 = vld [vmem:[#allocation7 + $0x148] sm:$0xff]
    %v1657 = vld [vmem:[#allocation7 + $0x150] sm:$0xff]
    %v1658 = vld [vmem:[#allocation7 + $0x158] sm:$0xff]
    %v1659 = vld [vmem:[#allocation7 + $0x160] sm:$0xff]
    %v1660 = vld [vmem:[#allocation7 + $0x168] sm:$0xff]
    %v1661 = vld [vmem:[#allocation7 + $0x170] sm:$0xff]
    %v1662 = vld [vmem:[#allocation7 + $0x178] sm:$0xff]
    %v1663 = vld [vmem:[#allocation7 + $0x180] sm:$0xff]
    %v1664 = vld [vmem:[#allocation7 + $0x188] sm:$0xff]
    %v1665 = vld [vmem:[#allocation7 + $0x190] sm:$0xff]
    %v1666 = vld [vmem:[#allocation7 + $0x198] sm:$0xff]
    %v1667 = vld [vmem:[#allocation7 + $0x1a0] sm:$0xff]
    %v1668 = vld [vmem:[#allocation7 + $0x1a8] sm:$0xff]
    %v1669 = vld [vmem:[#allocation7 + $0x1b0] sm:$0xff]
    %v1670 = vld [vmem:[#allocation7 + $0x1b8] sm:$0xff]
    %v1671 = vld [vmem:[#allocation7 + $0x1c0] sm:$0xff]
    %v1672 = vld [vmem:[#allocation7 + $0x1c8] sm:$0xff]
    %v1673 = vld [vmem:[#allocation7 + $0x1d0] sm:$0xff]
    %v1674 = vld [vmem:[#allocation7 + $0x1d8] sm:$0xff]
    %v1675 = vld [vmem:[#allocation7 + $0x1e0] sm:$0xff]
    %v1676 = vld [vmem:[#allocation7 + $0x1e8] sm:$0xff]
    %v1677 = vld [vmem:[#allocation7 + $0x1f0] sm:$0xff]
    %v1678 = vld [vmem:[#allocation7 + $0x1f8] sm:$0xff]
    %1679 = vmatprep.subr.mxu0 %v1616
    %1680 = vmatpush1.msra.mxu0 %v1615
    %1681 = vmatprep.subr.mxu0 %v1620
    %1682 = vmatpush1.msra.mxu0 %v1619
    %1683 = vmatprep.subr.mxu0 %v1624
    %1684 = vmatpush1.msra.mxu0 %v1623
    %1685 = vmatprep.subr.mxu0 %v1628
    %1686 = vmatpush1.msra.mxu0 %v1627
    %1687 = vmatprep.subr.mxu0 %v1632
    %1688 = vmatpush1.msra.mxu0 %v1631
    %1689 = vmatprep.subr.mxu0 %v1636
    %1690 = vmatpush1.msra.mxu0 %v1635
    %1691 = vmatprep.subr.mxu0 %v1640
    %1692 = vmatpush1.msra.mxu0 %v1639
    %1693 = vmatprep.subr.mxu0 %v1644
    %1694 = vmatpush1.msra.mxu0 %v1643
    %1695 = vmatprep.subr.mxu0 %v1648
    %1696 = vmatpush1.msra.mxu0 %v1647
    %1697 = vmatprep.subr.mxu0 %v1652
    %1698 = vmatpush1.msra.mxu0 %v1651
    %1699 = vmatprep.subr.mxu0 %v1656
    %1700 = vmatpush1.msra.mxu0 %v1655
    %1701 = vmatprep.subr.mxu0 %v1660
    %1702 = vmatpush1.msra.mxu0 %v1659
    %1703 = vmatprep.subr.mxu0 %v1664
    %1704 = vmatpush1.msra.mxu0 %v1663
    %1705 = vmatprep.subr.mxu0 %v1668
    %1706 = vmatpush1.msra.mxu0 %v1667
    %1707 = vmatprep.subr.mxu0 %v1672
    %1708 = vmatpush1.msra.mxu0 %v1671
    %1709 = vmatprep.subr.mxu0 %v1676
    %1710 = vmatpush1.msra.mxu0 %v1675
    %1711 = vmatprep.subr.mxu0 0.0
    %1712 = vmatpush1.msra.mxu0 0.0
    %1713 = vmatprep.subr.mxu0 0.0
    %1714 = vmatpush1.msra.mxu0 0.0
    %1715 = vmatprep.subr.mxu0 0.0
    %1716 = vmatpush1.msra.mxu0 0.0
    %1717 = vmatprep.subr.mxu0 0.0
    %1718 = vmatpush1.msra.mxu0 0.0
    %1719 = vmatprep.subr.mxu0 0.0
    %1720 = vmatpush1.msra.mxu0 0.0
    %1721 = vmatprep.subr.mxu0 0.0
    %1722 = vmatpush1.msra.mxu0 0.0
    %1723 = vmatprep.subr.mxu0 0.0
    %1724 = vmatpush1.msra.mxu0 0.0
    %1725 = vmatprep.subr.mxu0 0.0
    %1726 = vmatpush1.msra.mxu0 0.0
    %1727 = vmatprep.subr.mxu0 0.0
    %1728 = vmatpush1.msra.mxu0 0.0
    %1729 = vmatprep.subr.mxu0 0.0
    %1730 = vmatpush1.msra.mxu0 0.0
    %1731 = vmatprep.subr.mxu0 0.0
    %1732 = vmatpush1.msra.mxu0 0.0
    %1733 = vmatprep.subr.mxu0 0.0
    %1734 = vmatpush1.msra.mxu0 0.0
    %1735 = vmatprep.subr.mxu0 0.0
    %1736 = vmatpush1.msra.mxu0 0.0
    %1737 = vmatprep.subr.mxu0 0.0
    %1738 = vmatpush1.msra.mxu0 0.0
    %1739 = vmatprep.subr.mxu0 0.0
    %1740 = vmatpush1.msra.mxu0 0.0
    %1741 = vmatprep.subr.mxu0 0.0
    %1742 = vmatpush1.msra.mxu0 0.0
    %1743 = vmatprep.mubr.f32.mxu0 0.0
    %1744 = vmatmul.mubr.f32.gmra.mrb[0].mxu0 %v1605
    %v1745 = vpop.f32.mrb[0].mxu0
    %v1746 = vadd.f32 0.0, %v1745
    %v1747 = vpop.f32.mrb[0].mxu0
    %v1748 = vadd.f32 0.0, %v1747
    %1749 = vdwg.mxu0
    %1750 = vmatprep.subr.mxu0 %v1618
    %1751 = vmatpush1.msra.mxu0 %v1617
    %1752 = vmatprep.subr.mxu0 %v1622
    %1753 = vmatpush1.msra.mxu0 %v1621
    %1754 = vmatprep.subr.mxu0 %v1626
    %1755 = vmatpush1.msra.mxu0 %v1625
    %1756 = vmatprep.subr.mxu0 %v1630
    %1757 = vmatpush1.msra.mxu0 %v1629
    %1758 = vmatprep.subr.mxu0 %v1634
    %1759 = vmatpush1.msra.mxu0 %v1633
    %1760 = vmatprep.subr.mxu0 %v1638
    %1761 = vmatpush1.msra.mxu0 %v1637
    %1762 = vmatprep.subr.mxu0 %v1642
    %1763 = vmatpush1.msra.mxu0 %v1641
    %1764 = vmatprep.subr.mxu0 %v1646
    %1765 = vmatpush1.msra.mxu0 %v1645
    %1766 = vmatprep.subr.mxu0 %v1650
    %1767 = vmatpush1.msra.mxu0 %v1649
    %1768 = vmatprep.subr.mxu0 %v1654
    %1769 = vmatpush1.msra.mxu0 %v1653
    %1770 = vmatprep.subr.mxu0 %v1658
    %1771 = vmatpush1.msra.mxu0 %v1657
    %1772 = vmatprep.subr.mxu0 %v1662
    %1773 = vmatpush1.msra.mxu0 %v1661
    %1774 = vmatprep.subr.mxu0 %v1666
    %1775 = vmatpush1.msra.mxu0 %v1665
    %1776 = vmatprep.subr.mxu0 %v1670
    %1777 = vmatpush1.msra.mxu0 %v1669
    %1778 = vmatprep.subr.mxu0 %v1674
    %1779 = vmatpush1.msra.mxu0 %v1673
    %1780 = vmatprep.subr.mxu0 %v1678
    %1781 = vmatpush1.msra.mxu0 %v1677
    %1782 = vmatprep.subr.mxu0 0.0
    %1783 = vmatpush1.msra.mxu0 0.0
    %1784 = vmatprep.subr.mxu0 0.0
    %1785 = vmatpush1.msra.mxu0 0.0
    %1786 = vmatprep.subr.mxu0 0.0
    %1787 = vmatpush1.msra.mxu0 0.0
    %1788 = vmatprep.subr.mxu0 0.0
    %1789 = vmatpush1.msra.mxu0 0.0
    %1790 = vmatprep.subr.mxu0 0.0
    %1791 = vmatpush1.msra.mxu0 0.0
    %1792 = vmatprep.subr.mxu0 0.0
    %1793 = vmatpush1.msra.mxu0 0.0
    %1794 = vmatprep.subr.mxu0 0.0
    %1795 = vmatpush1.msra.mxu0 0.0
    %1796 = vmatprep.subr.mxu0 0.0
    %1797 = vmatpush1.msra.mxu0 0.0
    %1798 = vmatprep.subr.mxu0 0.0
    %1799 = vmatpush1.msra.mxu0 0.0
    %1800 = vmatprep.subr.mxu0 0.0
    %1801 = vmatpush1.msra.mxu0 0.0
    %1802 = vmatprep.subr.mxu0 0.0
    %1803 = vmatpush1.msra.mxu0 0.0
    %1804 = vmatprep.subr.mxu0 0.0
    %1805 = vmatpush1.msra.mxu0 0.0
    %1806 = vmatprep.subr.mxu0 0.0
    %1807 = vmatpush1.msra.mxu0 0.0
    %1808 = vmatprep.subr.mxu0 0.0
    %1809 = vmatpush1.msra.mxu0 0.0
    %1810 = vmatprep.subr.mxu0 0.0
    %1811 = vmatpush1.msra.mxu0 0.0
    %1812 = vmatprep.subr.mxu0 0.0
    %1813 = vmatpush1.msra.mxu0 0.0
    %1814 = vmatprep.mubr.f32.mxu0 0.0
    %1815 = vmatmul.mubr.f32.gmra.mrb[0].mxu0 %v1605
    %v1816 = vpop.f32.mrb[0].mxu0
    %v1817 = vadd.f32 0.0, %v1816
    %v1818 = vpop.f32.mrb[0].mxu0
    %v1819 = vadd.f32 0.0, %v1818
    %1820 = vdwg.mxu0
    %v1821 = vadd.f32 %v1611, %v1746
    %v1822 = vadd.f32 %v1612, %v1748
    %v1823 = vadd.f32 %v1613, %v1817
    %v1824 = vadd.f32 %v1614, %v1819
    %v1825 = vxor.u32 %v1821, 2147483648
    %v1826 = vmul.f32 %v1825, 1.442695
    %v1827 = vpow.pop %v1826
    %v1828 = vadd.f32 %v1827, 1.0
    %v1829 = vrcp.pop %v1828
    %v1830 = vmul.f32 1.0, %v1829
    %v1831 = vxor.u32 %v1822, 2147483648
    %v1832 = vmul.f32 %v1831, 1.442695
    %v1833 = vpow.pop %v1832
    %v1834 = vadd.f32 %v1833, 1.0
    %v1835 = vrcp.pop %v1834
    %v1836 = vmul.f32 1.0, %v1835
    %v1837 = vtanh.pop %v1823
    %v1838 = vxor.u32 %v1824, 2147483648
    %v1839 = vmul.f32 %v1838, 1.442695
    %v1840 = vpow.pop %v1839
    %v1841 = vadd.f32 %v1840, 1.0
    %v1842 = vrcp.pop %v1841
    %v1843 = vmul.f32 1.0, %v1842
    %v1844 = vmul.f32 %v1836, %v1603
    %v1845 = vmul.f32 %v1830, %v1837
    %v1846 = vadd.f32 %v1844, %v1845
    %v1847 = vtanh.pop %v1846
    %v1848 = vmul.f32 %v1843, %v1847
    %s1849 = scalar_lea.vmem [#allocation3], 40
    %1850 = vst [vmem:[%s1849] sm:$0xff] %v1848
    %s1851 = smul.u32 6, 4
    %s1852 = smul.addr %s1851, 8
    %s1853 = scalar_lea.vmem [#allocation2], %s1852
    %v1854 = vld [vmem:[%s1853] sm:$0xff]
    %v1855 = vld [vmem:[%s1853 + $0x8] sm:$0xff]
    %v1856 = vld [vmem:[%s1853 + $0x10] sm:$0xff]
    %v1857 = vld [vmem:[%s1853 + $0x18] sm:$0xff]
    %v1858 = vld [vmem:[#allocation7] sm:$0xff]
    %v1859 = vld [vmem:[#allocation7 + $0x8] sm:$0xff]
    %v1860 = vld [vmem:[#allocation7 + $0x10] sm:$0xff]
    %v1861 = vld [vmem:[#allocation7 + $0x18] sm:$0xff]
    %v1862 = vld [vmem:[#allocation7 + $0x20] sm:$0xff]
    %v1863 = vld [vmem:[#allocation7 + $0x28] sm:$0xff]
    %v1864 = vld [vmem:[#allocation7 + $0x30] sm:$0xff]
    %v1865 = vld [vmem:[#allocation7 + $0x38] sm:$0xff]
    %v1866 = vld [vmem:[#allocation7 + $0x40] sm:$0xff]
    %v1867 = vld [vmem:[#allocation7 + $0x48] sm:$0xff]
    %v1868 = vld [vmem:[#allocation7 + $0x50] sm:$0xff]
    %v1869 = vld [vmem:[#allocation7 + $0x58] sm:$0xff]
    %v1870 = vld [vmem:[#allocation7 + $0x60] sm:$0xff]
    %v1871 = vld [vmem:[#allocation7 + $0x68] sm:$0xff]
    %v1872 = vld [vmem:[#allocation7 + $0x70] sm:$0xff]
    %v1873 = vld [vmem:[#allocation7 + $0x78] sm:$0xff]
    %v1874 = vld [vmem:[#allocation7 + $0x80] sm:$0xff]
    %v1875 = vld [vmem:[#allocation7 + $0x88] sm:$0xff]
    %v1876 = vld [vmem:[#allocation7 + $0x90] sm:$0xff]
    %v1877 = vld [vmem:[#allocation7 + $0x98] sm:$0xff]
    %v1878 = vld [vmem:[#allocation7 + $0xa0] sm:$0xff]
    %v1879 = vld [vmem:[#allocation7 + $0xa8] sm:$0xff]
    %v1880 = vld [vmem:[#allocation7 + $0xb0] sm:$0xff]
    %v1881 = vld [vmem:[#allocation7 + $0xb8] sm:$0xff]
    %v1882 = vld [vmem:[#allocation7 + $0xc0] sm:$0xff]
    %v1883 = vld [vmem:[#allocation7 + $0xc8] sm:$0xff]
    %v1884 = vld [vmem:[#allocation7 + $0xd0] sm:$0xff]
    %v1885 = vld [vmem:[#allocation7 + $0xd8] sm:$0xff]
    %v1886 = vld [vmem:[#allocation7 + $0xe0] sm:$0xff]
    %v1887 = vld [vmem:[#allocation7 + $0xe8] sm:$0xff]
    %v1888 = vld [vmem:[#allocation7 + $0xf0] sm:$0xff]
    %v1889 = vld [vmem:[#allocation7 + $0xf8] sm:$0xff]
    %v1890 = vld [vmem:[#allocation7 + $0x100] sm:$0xff]
    %v1891 = vld [vmem:[#allocation7 + $0x108] sm:$0xff]
    %v1892 = vld [vmem:[#allocation7 + $0x110] sm:$0xff]
    %v1893 = vld [vmem:[#allocation7 + $0x118] sm:$0xff]
    %v1894 = vld [vmem:[#allocation7 + $0x120] sm:$0xff]
    %v1895 = vld [vmem:[#allocation7 + $0x128] sm:$0xff]
    %v1896 = vld [vmem:[#allocation7 + $0x130] sm:$0xff]
    %v1897 = vld [vmem:[#allocation7 + $0x138] sm:$0xff]
    %v1898 = vld [vmem:[#allocation7 + $0x140] sm:$0xff]
    %v1899 = vld [vmem:[#allocation7 + $0x148] sm:$0xff]
    %v1900 = vld [vmem:[#allocation7 + $0x150] sm:$0xff]
    %v1901 = vld [vmem:[#allocation7 + $0x158] sm:$0xff]
    %v1902 = vld [vmem:[#allocation7 + $0x160] sm:$0xff]
    %v1903 = vld [vmem:[#allocation7 + $0x168] sm:$0xff]
    %v1904 = vld [vmem:[#allocation7 + $0x170] sm:$0xff]
    %v1905 = vld [vmem:[#allocation7 + $0x178] sm:$0xff]
    %v1906 = vld [vmem:[#allocation7 + $0x180] sm:$0xff]
    %v1907 = vld [vmem:[#allocation7 + $0x188] sm:$0xff]
    %v1908 = vld [vmem:[#allocation7 + $0x190] sm:$0xff]
    %v1909 = vld [vmem:[#allocation7 + $0x198] sm:$0xff]
    %v1910 = vld [vmem:[#allocation7 + $0x1a0] sm:$0xff]
    %v1911 = vld [vmem:[#allocation7 + $0x1a8] sm:$0xff]
    %v1912 = vld [vmem:[#allocation7 + $0x1b0] sm:$0xff]
    %v1913 = vld [vmem:[#allocation7 + $0x1b8] sm:$0xff]
    %v1914 = vld [vmem:[#allocation7 + $0x1c0] sm:$0xff]
    %v1915 = vld [vmem:[#allocation7 + $0x1c8] sm:$0xff]
    %v1916 = vld [vmem:[#allocation7 + $0x1d0] sm:$0xff]
    %v1917 = vld [vmem:[#allocation7 + $0x1d8] sm:$0xff]
    %v1918 = vld [vmem:[#allocation7 + $0x1e0] sm:$0xff]
    %v1919 = vld [vmem:[#allocation7 + $0x1e8] sm:$0xff]
    %v1920 = vld [vmem:[#allocation7 + $0x1f0] sm:$0xff]
    %v1921 = vld [vmem:[#allocation7 + $0x1f8] sm:$0xff]
    %1922 = vmatprep.subr.mxu0 %v1859
    %1923 = vmatpush1.msra.mxu0 %v1858
    %1924 = vmatprep.subr.mxu0 %v1863
    %1925 = vmatpush1.msra.mxu0 %v1862
    %1926 = vmatprep.subr.mxu0 %v1867
    %1927 = vmatpush1.msra.mxu0 %v1866
    %1928 = vmatprep.subr.mxu0 %v1871
    %1929 = vmatpush1.msra.mxu0 %v1870
    %1930 = vmatprep.subr.mxu0 %v1875
    %1931 = vmatpush1.msra.mxu0 %v1874
    %1932 = vmatprep.subr.mxu0 %v1879
    %1933 = vmatpush1.msra.mxu0 %v1878
    %1934 = vmatprep.subr.mxu0 %v1883
    %1935 = vmatpush1.msra.mxu0 %v1882
    %1936 = vmatprep.subr.mxu0 %v1887
    %1937 = vmatpush1.msra.mxu0 %v1886
    %1938 = vmatprep.subr.mxu0 %v1891
    %1939 = vmatpush1.msra.mxu0 %v1890
    %1940 = vmatprep.subr.mxu0 %v1895
    %1941 = vmatpush1.msra.mxu0 %v1894
    %1942 = vmatprep.subr.mxu0 %v1899
    %1943 = vmatpush1.msra.mxu0 %v1898
    %1944 = vmatprep.subr.mxu0 %v1903
    %1945 = vmatpush1.msra.mxu0 %v1902
    %1946 = vmatprep.subr.mxu0 %v1907
    %1947 = vmatpush1.msra.mxu0 %v1906
    %1948 = vmatprep.subr.mxu0 %v1911
    %1949 = vmatpush1.msra.mxu0 %v1910
    %1950 = vmatprep.subr.mxu0 %v1915
    %1951 = vmatpush1.msra.mxu0 %v1914
    %1952 = vmatprep.subr.mxu0 %v1919
    %1953 = vmatpush1.msra.mxu0 %v1918
    %1954 = vmatprep.subr.mxu0 0.0
    %1955 = vmatpush1.msra.mxu0 0.0
    %1956 = vmatprep.subr.mxu0 0.0
    %1957 = vmatpush1.msra.mxu0 0.0
    %1958 = vmatprep.subr.mxu0 0.0
    %1959 = vmatpush1.msra.mxu0 0.0
    %1960 = vmatprep.subr.mxu0 0.0
    %1961 = vmatpush1.msra.mxu0 0.0
    %1962 = vmatprep.subr.mxu0 0.0
    %1963 = vmatpush1.msra.mxu0 0.0
    %1964 = vmatprep.subr.mxu0 0.0
    %1965 = vmatpush1.msra.mxu0 0.0
    %1966 = vmatprep.subr.mxu0 0.0
    %1967 = vmatpush1.msra.mxu0 0.0
    %1968 = vmatprep.subr.mxu0 0.0
    %1969 = vmatpush1.msra.mxu0 0.0
    %1970 = vmatprep.subr.mxu0 0.0
    %1971 = vmatpush1.msra.mxu0 0.0
    %1972 = vmatprep.subr.mxu0 0.0
    %1973 = vmatpush1.msra.mxu0 0.0
    %1974 = vmatprep.subr.mxu0 0.0
    %1975 = vmatpush1.msra.mxu0 0.0
    %1976 = vmatprep.subr.mxu0 0.0
    %1977 = vmatpush1.msra.mxu0 0.0
    %1978 = vmatprep.subr.mxu0 0.0
    %1979 = vmatpush1.msra.mxu0 0.0
    %1980 = vmatprep.subr.mxu0 0.0
    %1981 = vmatpush1.msra.mxu0 0.0
    %1982 = vmatprep.subr.mxu0 0.0
    %1983 = vmatpush1.msra.mxu0 0.0
    %1984 = vmatprep.subr.mxu0 0.0
    %1985 = vmatpush1.msra.mxu0 0.0
    %1986 = vmatprep.mubr.f32.mxu0 0.0
    %1987 = vmatmul.mubr.f32.gmra.mrb[0].mxu0 %v1848
    %v1988 = vpop.f32.mrb[0].mxu0
    %v1989 = vadd.f32 0.0, %v1988
    %v1990 = vpop.f32.mrb[0].mxu0
    %v1991 = vadd.f32 0.0, %v1990
    %1992 = vdwg.mxu0
    %1993 = vmatprep.subr.mxu0 %v1861
    %1994 = vmatpush1.msra.mxu0 %v1860
    %1995 = vmatprep.subr.mxu0 %v1865
    %1996 = vmatpush1.msra.mxu0 %v1864
    %1997 = vmatprep.subr.mxu0 %v1869
    %1998 = vmatpush1.msra.mxu0 %v1868
    %1999 = vmatprep.subr.mxu0 %v1873
    %2000 = vmatpush1.msra.mxu0 %v1872
    %2001 = vmatprep.subr.mxu0 %v1877
    %2002 = vmatpush1.msra.mxu0 %v1876
    %2003 = vmatprep.subr.mxu0 %v1881
    %2004 = vmatpush1.msra.mxu0 %v1880
    %2005 = vmatprep.subr.mxu0 %v1885
    %2006 = vmatpush1.msra.mxu0 %v1884
    %2007 = vmatprep.subr.mxu0 %v1889
    %2008 = vmatpush1.msra.mxu0 %v1888
    %2009 = vmatprep.subr.mxu0 %v1893
    %2010 = vmatpush1.msra.mxu0 %v1892
    %2011 = vmatprep.subr.mxu0 %v1897
    %2012 = vmatpush1.msra.mxu0 %v1896
    %2013 = vmatprep.subr.mxu0 %v1901
    %2014 = vmatpush1.msra.mxu0 %v1900
    %2015 = vmatprep.subr.mxu0 %v1905
    %2016 = vmatpush1.msra.mxu0 %v1904
    %2017 = vmatprep.subr.mxu0 %v1909
    %2018 = vmatpush1.msra.mxu0 %v1908
    %2019 = vmatprep.subr.mxu0 %v1913
    %2020 = vmatpush1.msra.mxu0 %v1912
    %2021 = vmatprep.subr.mxu0 %v1917
    %2022 = vmatpush1.msra.mxu0 %v1916
    %2023 = vmatprep.subr.mxu0 %v1921
    %2024 = vmatpush1.msra.mxu0 %v1920
    %2025 = vmatprep.subr.mxu0 0.0
    %2026 = vmatpush1.msra.mxu0 0.0
    %2027 = vmatprep.subr.mxu0 0.0
    %2028 = vmatpush1.msra.mxu0 0.0
    %2029 = vmatprep.subr.mxu0 0.0
    %2030 = vmatpush1.msra.mxu0 0.0
    %2031 = vmatprep.subr.mxu0 0.0
    %2032 = vmatpush1.msra.mxu0 0.0
    %2033 = vmatprep.subr.mxu0 0.0
    %2034 = vmatpush1.msra.mxu0 0.0
    %2035 = vmatprep.subr.mxu0 0.0
    %2036 = vmatpush1.msra.mxu0 0.0
    %2037 = vmatprep.subr.mxu0 0.0
    %2038 = vmatpush1.msra.mxu0 0.0
    %2039 = vmatprep.subr.mxu0 0.0
    %2040 = vmatpush1.msra.mxu0 0.0
    %2041 = vmatprep.subr.mxu0 0.0
    %2042 = vmatpush1.msra.mxu0 0.0
    %2043 = vmatprep.subr.mxu0 0.0
    %2044 = vmatpush1.msra.mxu0 0.0
    %2045 = vmatprep.subr.mxu0 0.0
    %2046 = vmatpush1.msra.mxu0 0.0
    %2047 = vmatprep.subr.mxu0 0.0
    %2048 = vmatpush1.msra.mxu0 0.0
    %2049 = vmatprep.subr.mxu0 0.0
    %2050 = vmatpush1.msra.mxu0 0.0
    %2051 = vmatprep.subr.mxu0 0.0
    %2052 = vmatpush1.msra.mxu0 0.0
    %2053 = vmatprep.subr.mxu0 0.0
    %2054 = vmatpush1.msra.mxu0 0.0
    %2055 = vmatprep.subr.mxu0 0.0
    %2056 = vmatpush1.msra.mxu0 0.0
    %2057 = vmatprep.mubr.f32.mxu0 0.0
    %2058 = vmatmul.mubr.f32.gmra.mrb[0].mxu0 %v1848
    %v2059 = vpop.f32.mrb[0].mxu0
    %v2060 = vadd.f32 0.0, %v2059
    %v2061 = vpop.f32.mrb[0].mxu0
    %v2062 = vadd.f32 0.0, %v2061
    %2063 = vdwg.mxu0
    %v2064 = vadd.f32 %v1854, %v1989
    %v2065 = vadd.f32 %v1855, %v1991
    %v2066 = vadd.f32 %v1856, %v2060
    %v2067 = vadd.f32 %v1857, %v2062
    %v2068 = vxor.u32 %v2064, 2147483648
    %v2069 = vmul.f32 %v2068, 1.442695
    %v2070 = vpow.pop %v2069
    %v2071 = vadd.f32 %v2070, 1.0
    %v2072 = vrcp.pop %v2071
    %v2073 = vmul.f32 1.0, %v2072
    %v2074 = vxor.u32 %v2065, 2147483648
    %v2075 = vmul.f32 %v2074, 1.442695
    %v2076 = vpow.pop %v2075
    %v2077 = vadd.f32 %v2076, 1.0
    %v2078 = vrcp.pop %v2077
    %v2079 = vmul.f32 1.0, %v2078
    %v2080 = vtanh.pop %v2066
    %v2081 = vxor.u32 %v2067, 2147483648
    %v2082 = vmul.f32 %v2081, 1.442695
    %v2083 = vpow.pop %v2082
    %v2084 = vadd.f32 %v2083, 1.0
    %v2085 = vrcp.pop %v2084
    %v2086 = vmul.f32 1.0, %v2085
    %v2087 = vmul.f32 %v2079, %v1846
    %v2088 = vmul.f32 %v2073, %v2080
    %v2089 = vadd.f32 %v2087, %v2088
    %v2090 = vtanh.pop %v2089
    %v2091 = vmul.f32 %v2086, %v2090
    %s2092 = scalar_lea.vmem [#allocation3], 48
    %2093 = vst [vmem:[%s2092] sm:$0xff] %v2091
    %s2094 = smul.u32 7, 4
    %s2095 = smul.addr %s2094, 8
    %s2096 = scalar_lea.vmem [#allocation2], %s2095
    %v2097 = vld [vmem:[%s2096] sm:$0xff]
    %v2098 = vld [vmem:[%s2096 + $0x8] sm:$0xff]
    %v2099 = vld [vmem:[%s2096 + $0x10] sm:$0xff]
    %v2100 = vld [vmem:[%s2096 + $0x18] sm:$0xff]
    %v2101 = vld [vmem:[#allocation7] sm:$0xff]
    %v2102 = vld [vmem:[#allocation7 + $0x8] sm:$0xff]
    %v2103 = vld [vmem:[#allocation7 + $0x10] sm:$0xff]
    %v2104 = vld [vmem:[#allocation7 + $0x18] sm:$0xff]
    %v2105 = vld [vmem:[#allocation7 + $0x20] sm:$0xff]
    %v2106 = vld [vmem:[#allocation7 + $0x28] sm:$0xff]
    %v2107 = vld [vmem:[#allocation7 + $0x30] sm:$0xff]
    %v2108 = vld [vmem:[#allocation7 + $0x38] sm:$0xff]
    %v2109 = vld [vmem:[#allocation7 + $0x40] sm:$0xff]
    %v2110 = vld [vmem:[#allocation7 + $0x48] sm:$0xff]
    %v2111 = vld [vmem:[#allocation7 + $0x50] sm:$0xff]
    %v2112 = vld [vmem:[#allocation7 + $0x58] sm:$0xff]
    %v2113 = vld [vmem:[#allocation7 + $0x60] sm:$0xff]
    %v2114 = vld [vmem:[#allocation7 + $0x68] sm:$0xff]
    %v2115 = vld [vmem:[#allocation7 + $0x70] sm:$0xff]
    %v2116 = vld [vmem:[#allocation7 + $0x78] sm:$0xff]
    %v2117 = vld [vmem:[#allocation7 + $0x80] sm:$0xff]
    %v2118 = vld [vmem:[#allocation7 + $0x88] sm:$0xff]
    %v2119 = vld [vmem:[#allocation7 + $0x90] sm:$0xff]
    %v2120 = vld [vmem:[#allocation7 + $0x98] sm:$0xff]
    %v2121 = vld [vmem:[#allocation7 + $0xa0] sm:$0xff]
    %v2122 = vld [vmem:[#allocation7 + $0xa8] sm:$0xff]
    %v2123 = vld [vmem:[#allocation7 + $0xb0] sm:$0xff]
    %v2124 = vld [vmem:[#allocation7 + $0xb8] sm:$0xff]
    %v2125 = vld [vmem:[#allocation7 + $0xc0] sm:$0xff]
    %v2126 = vld [vmem:[#allocation7 + $0xc8] sm:$0xff]
    %v2127 = vld [vmem:[#allocation7 + $0xd0] sm:$0xff]
    %v2128 = vld [vmem:[#allocation7 + $0xd8] sm:$0xff]
    %v2129 = vld [vmem:[#allocation7 + $0xe0] sm:$0xff]
    %v2130 = vld [vmem:[#allocation7 + $0xe8] sm:$0xff]
    %v2131 = vld [vmem:[#allocation7 + $0xf0] sm:$0xff]
    %v2132 = vld [vmem:[#allocation7 + $0xf8] sm:$0xff]
    %v2133 = vld [vmem:[#allocation7 + $0x100] sm:$0xff]
    %v2134 = vld [vmem:[#allocation7 + $0x108] sm:$0xff]
    %v2135 = vld [vmem:[#allocation7 + $0x110] sm:$0xff]
    %v2136 = vld [vmem:[#allocation7 + $0x118] sm:$0xff]
    %v2137 = vld [vmem:[#allocation7 + $0x120] sm:$0xff]
    %v2138 = vld [vmem:[#allocation7 + $0x128] sm:$0xff]
    %v2139 = vld [vmem:[#allocation7 + $0x130] sm:$0xff]
    %v2140 = vld [vmem:[#allocation7 + $0x138] sm:$0xff]
    %v2141 = vld [vmem:[#allocation7 + $0x140] sm:$0xff]
    %v2142 = vld [vmem:[#allocation7 + $0x148] sm:$0xff]
    %v2143 = vld [vmem:[#allocation7 + $0x150] sm:$0xff]
    %v2144 = vld [vmem:[#allocation7 + $0x158] sm:$0xff]
    %v2145 = vld [vmem:[#allocation7 + $0x160] sm:$0xff]
    %v2146 = vld [vmem:[#allocation7 + $0x168] sm:$0xff]
    %v2147 = vld [vmem:[#allocation7 + $0x170] sm:$0xff]
    %v2148 = vld [vmem:[#allocation7 + $0x178] sm:$0xff]
    %v2149 = vld [vmem:[#allocation7 + $0x180] sm:$0xff]
    %v2150 = vld [vmem:[#allocation7 + $0x188] sm:$0xff]
    %v2151 = vld [vmem:[#allocation7 + $0x190] sm:$0xff]
    %v2152 = vld [vmem:[#allocation7 + $0x198] sm:$0xff]
    %v2153 = vld [vmem:[#allocation7 + $0x1a0] sm:$0xff]
    %v2154 = vld [vmem:[#allocation7 + $0x1a8] sm:$0xff]
    %v2155 = vld [vmem:[#allocation7 + $0x1b0] sm:$0xff]
    %v2156 = vld [vmem:[#allocation7 + $0x1b8] sm:$0xff]
    %v2157 = vld [vmem:[#allocation7 + $0x1c0] sm:$0xff]
    %v2158 = vld [vmem:[#allocation7 + $0x1c8] sm:$0xff]
    %v2159 = vld [vmem:[#allocation7 + $0x1d0] sm:$0xff]
    %v2160 = vld [vmem:[#allocation7 + $0x1d8] sm:$0xff]
    %v2161 = vld [vmem:[#allocation7 + $0x1e0] sm:$0xff]
    %v2162 = vld [vmem:[#allocation7 + $0x1e8] sm:$0xff]
    %v2163 = vld [vmem:[#allocation7 + $0x1f0] sm:$0xff]
    %v2164 = vld [vmem:[#allocation7 + $0x1f8] sm:$0xff]
    %2165 = vmatprep.subr.mxu0 %v2102
    %2166 = vmatpush1.msra.mxu0 %v2101
    %2167 = vmatprep.subr.mxu0 %v2106
    %2168 = vmatpush1.msra.mxu0 %v2105
    %2169 = vmatprep.subr.mxu0 %v2110
    %2170 = vmatpush1.msra.mxu0 %v2109
    %2171 = vmatprep.subr.mxu0 %v2114
    %2172 = vmatpush1.msra.mxu0 %v2113
    %2173 = vmatprep.subr.mxu0 %v2118
    %2174 = vmatpush1.msra.mxu0 %v2117
    %2175 = vmatprep.subr.mxu0 %v2122
    %2176 = vmatpush1.msra.mxu0 %v2121
    %2177 = vmatprep.subr.mxu0 %v2126
    %2178 = vmatpush1.msra.mxu0 %v2125
    %2179 = vmatprep.subr.mxu0 %v2130
    %2180 = vmatpush1.msra.mxu0 %v2129
    %2181 = vmatprep.subr.mxu0 %v2134
    %2182 = vmatpush1.msra.mxu0 %v2133
    %2183 = vmatprep.subr.mxu0 %v2138
    %2184 = vmatpush1.msra.mxu0 %v2137
    %2185 = vmatprep.subr.mxu0 %v2142
    %2186 = vmatpush1.msra.mxu0 %v2141
    %2187 = vmatprep.subr.mxu0 %v2146
    %2188 = vmatpush1.msra.mxu0 %v2145
    %2189 = vmatprep.subr.mxu0 %v2150
    %2190 = vmatpush1.msra.mxu0 %v2149
    %2191 = vmatprep.subr.mxu0 %v2154
    %2192 = vmatpush1.msra.mxu0 %v2153
    %2193 = vmatprep.subr.mxu0 %v2158
    %2194 = vmatpush1.msra.mxu0 %v2157
    %2195 = vmatprep.subr.mxu0 %v2162
    %2196 = vmatpush1.msra.mxu0 %v2161
    %2197 = vmatprep.subr.mxu0 0.0
    %2198 = vmatpush1.msra.mxu0 0.0
    %2199 = vmatprep.subr.mxu0 0.0
    %2200 = vmatpush1.msra.mxu0 0.0
    %2201 = vmatprep.subr.mxu0 0.0
    %2202 = vmatpush1.msra.mxu0 0.0
    %2203 = vmatprep.subr.mxu0 0.0
    %2204 = vmatpush1.msra.mxu0 0.0
    %2205 = vmatprep.subr.mxu0 0.0
    %2206 = vmatpush1.msra.mxu0 0.0
    %2207 = vmatprep.subr.mxu0 0.0
    %2208 = vmatpush1.msra.mxu0 0.0
    %2209 = vmatprep.subr.mxu0 0.0
    %2210 = vmatpush1.msra.mxu0 0.0
    %2211 = vmatprep.subr.mxu0 0.0
    %2212 = vmatpush1.msra.mxu0 0.0
    %2213 = vmatprep.subr.mxu0 0.0
    %2214 = vmatpush1.msra.mxu0 0.0
    %2215 = vmatprep.subr.mxu0 0.0
    %2216 = vmatpush1.msra.mxu0 0.0
    %2217 = vmatprep.subr.mxu0 0.0
    %2218 = vmatpush1.msra.mxu0 0.0
    %2219 = vmatprep.subr.mxu0 0.0
    %2220 = vmatpush1.msra.mxu0 0.0
    %2221 = vmatprep.subr.mxu0 0.0
    %2222 = vmatpush1.msra.mxu0 0.0
    %2223 = vmatprep.subr.mxu0 0.0
    %2224 = vmatpush1.msra.mxu0 0.0
    %2225 = vmatprep.subr.mxu0 0.0
    %2226 = vmatpush1.msra.mxu0 0.0
    %2227 = vmatprep.subr.mxu0 0.0
    %2228 = vmatpush1.msra.mxu0 0.0
    %2229 = vmatprep.mubr.f32.mxu0 0.0
    %2230 = vmatmul.mubr.f32.gmra.mrb[0].mxu0 %v2091
    %v2231 = vpop.f32.mrb[0].mxu0
    %v2232 = vadd.f32 0.0, %v2231
    %v2233 = vpop.f32.mrb[0].mxu0
    %v2234 = vadd.f32 0.0, %v2233
    %2235 = vdwg.mxu0
    %2236 = vmatprep.subr.mxu0 %v2104
    %2237 = vmatpush1.msra.mxu0 %v2103
    %2238 = vmatprep.subr.mxu0 %v2108
    %2239 = vmatpush1.msra.mxu0 %v2107
    %2240 = vmatprep.subr.mxu0 %v2112
    %2241 = vmatpush1.msra.mxu0 %v2111
    %2242 = vmatprep.subr.mxu0 %v2116
    %2243 = vmatpush1.msra.mxu0 %v2115
    %2244 = vmatprep.subr.mxu0 %v2120
    %2245 = vmatpush1.msra.mxu0 %v2119
    %2246 = vmatprep.subr.mxu0 %v2124
    %2247 = vmatpush1.msra.mxu0 %v2123
    %2248 = vmatprep.subr.mxu0 %v2128
    %2249 = vmatpush1.msra.mxu0 %v2127
    %2250 = vmatprep.subr.mxu0 %v2132
    %2251 = vmatpush1.msra.mxu0 %v2131
    %2252 = vmatprep.subr.mxu0 %v2136
    %2253 = vmatpush1.msra.mxu0 %v2135
    %2254 = vmatprep.subr.mxu0 %v2140
    %2255 = vmatpush1.msra.mxu0 %v2139
    %2256 = vmatprep.subr.mxu0 %v2144
    %2257 = vmatpush1.msra.mxu0 %v2143
    %2258 = vmatprep.subr.mxu0 %v2148
    %2259 = vmatpush1.msra.mxu0 %v2147
    %2260 = vmatprep.subr.mxu0 %v2152
    %2261 = vmatpush1.msra.mxu0 %v2151
    %2262 = vmatprep.subr.mxu0 %v2156
    %2263 = vmatpush1.msra.mxu0 %v2155
    %2264 = vmatprep.subr.mxu0 %v2160
    %2265 = vmatpush1.msra.mxu0 %v2159
    %2266 = vmatprep.subr.mxu0 %v2164
    %2267 = vmatpush1.msra.mxu0 %v2163
    %2268 = vmatprep.subr.mxu0 0.0
    %2269 = vmatpush1.msra.mxu0 0.0
    %2270 = vmatprep.subr.mxu0 0.0
    %2271 = vmatpush1.msra.mxu0 0.0
    %2272 = vmatprep.subr.mxu0 0.0
    %2273 = vmatpush1.msra.mxu0 0.0
    %2274 = vmatprep.subr.mxu0 0.0
    %2275 = vmatpush1.msra.mxu0 0.0
    %2276 = vmatprep.subr.mxu0 0.0
    %2277 = vmatpush1.msra.mxu0 0.0
    %2278 = vmatprep.subr.mxu0 0.0
    %2279 = vmatpush1.msra.mxu0 0.0
    %2280 = vmatprep.subr.mxu0 0.0
    %2281 = vmatpush1.msra.mxu0 0.0
    %2282 = vmatprep.subr.mxu0 0.0
    %2283 = vmatpush1.msra.mxu0 0.0
    %2284 = vmatprep.subr.mxu0 0.0
    %2285 = vmatpush1.msra.mxu0 0.0
    %2286 = vmatprep.subr.mxu0 0.0
    %2287 = vmatpush1.msra.mxu0 0.0
    %2288 = vmatprep.subr.mxu0 0.0
    %2289 = vmatpush1.msra.mxu0 0.0
    %2290 = vmatprep.subr.mxu0 0.0
    %2291 = vmatpush1.msra.mxu0 0.0
    %2292 = vmatprep.subr.mxu0 0.0
    %2293 = vmatpush1.msra.mxu0 0.0
    %2294 = vmatprep.subr.mxu0 0.0
    %2295 = vmatpush1.msra.mxu0 0.0
    %2296 = vmatprep.subr.mxu0 0.0
    %2297 = vmatpush1.msra.mxu0 0.0
    %2298 = vmatprep.subr.mxu0 0.0
    %2299 = vmatpush1.msra.mxu0 0.0
    %2300 = vmatprep.mubr.f32.mxu0 0.0
    %2301 = vmatmul.mubr.f32.gmra.mrb[0].mxu0 %v2091
    %v2302 = vpop.f32.mrb[0].mxu0
    %v2303 = vadd.f32 0.0, %v2302
    %v2304 = vpop.f32.mrb[0].mxu0
    %v2305 = vadd.f32 0.0, %v2304
    %2306 = vdwg.mxu0
    %v2307 = vadd.f32 %v2097, %v2232
    %v2308 = vadd.f32 %v2098, %v2234
    %v2309 = vadd.f32 %v2099, %v2303
    %v2310 = vadd.f32 %v2100, %v2305
    %v2311 = vxor.u32 %v2307, 2147483648
    %v2312 = vmul.f32 %v2311, 1.442695
    %v2313 = vpow.pop %v2312
    %v2314 = vadd.f32 %v2313, 1.0
    %v2315 = vrcp.pop %v2314
    %v2316 = vmul.f32 1.0, %v2315
    %v2317 = vxor.u32 %v2308, 2147483648
    %v2318 = vmul.f32 %v2317, 1.442695
    %v2319 = vpow.pop %v2318
    %v2320 = vadd.f32 %v2319, 1.0
    %v2321 = vrcp.pop %v2320
    %v2322 = vmul.f32 1.0, %v2321
    %v2323 = vtanh.pop %v2309
    %v2324 = vxor.u32 %v2310, 2147483648
    %v2325 = vmul.f32 %v2324, 1.442695
    %v2326 = vpow.pop %v2325
    %v2327 = vadd.f32 %v2326, 1.0
    %v2328 = vrcp.pop %v2327
    %v2329 = vmul.f32 1.0, %v2328
    %v2330 = vmul.f32 %v2322, %v2089
    %v2331 = vmul.f32 %v2316, %v2323
    %v2332 = vadd.f32 %v2330, %v2331
    %v2333 = vtanh.pop %v2332
    %v2334 = vmul.f32 %v2329, %v2333
    %s2335 = scalar_lea.vmem [#allocation3], 56
    %2336 = vst [vmem:[%s2335] sm:$0xff] %v2334
    %v2337 = vld [vmem:[#allocation3] sm:$0xff]
    %v2338 = vld [vmem:[#allocation3 + $0x8] sm:$0xff]
    %v2339 = vld [vmem:[#allocation3 + $0x10] sm:$0xff]
    %v2340 = vld [vmem:[#allocation3 + $0x18] sm:$0xff]
    %v2341 = vld [vmem:[#allocation3 + $0x20] sm:$0xff]
    %v2342 = vld [vmem:[#allocation3 + $0x28] sm:$0xff]
    %v2343 = vld [vmem:[#allocation3 + $0x30] sm:$0xff]
    %v2344 = vld [vmem:[#allocation3 + $0x38] sm:$0xff]
    %v2345 = vld [vmem:[#allocation9] sm:$0xff]
    %v2346 = vld [vmem:[#allocation9 + $0x8] sm:$0xff]
    %v2347 = vld [vmem:[#allocation9 + $0x10] sm:$0xff]
    %v2348 = vld [vmem:[#allocation9 + $0x18] sm:$0xff]
    %v2349 = vld [vmem:[#allocation9 + $0x20] sm:$0xff]
    %v2350 = vld [vmem:[#allocation9 + $0x28] sm:$0xff]
    %v2351 = vld [vmem:[#allocation9 + $0x30] sm:$0xff]
    %v2352 = vld [vmem:[#allocation9 + $0x38] sm:$0xff]
    %v2353 = vld [vmem:[#allocation9 + $0x40] sm:$0xff]
    %v2354 = vld [vmem:[#allocation9 + $0x48] sm:$0xff]
    %v2355 = vld [vmem:[#allocation9 + $0x50] sm:$0xff]
    %v2356 = vld [vmem:[#allocation9 + $0x58] sm:$0xff]
    %v2357 = vld [vmem:[#allocation9 + $0x60] sm:$0xff]
    %v2358 = vld [vmem:[#allocation9 + $0x68] sm:$0xff]
    %v2359 = vld [vmem:[#allocation9 + $0x70] sm:$0xff]
    %v2360 = vld [vmem:[#allocation9 + $0x78] sm:$0xff]
    %v2361 = vld [vmem:[%s5] sm:$0x1]
    %v2363 = vlaneseq
    %v2364 = vshrl.u32 %v2363, 7
    %v2365 = vsub.s32 0, %v2364
    %v2366 = vrot.slane %v2361, %v2365
    %2368 = vmatprep.subr.mxu0 0.0
    %2369 = vmatpush1.msra.mxu0 %v2345
    %2370 = vmatprep.subr.mxu0 0.0
    %2371 = vmatpush1.msra.mxu0 %v2346
    %2372 = vmatprep.subr.mxu0 0.0
    %2373 = vmatpush1.msra.mxu0 %v2347
    %2374 = vmatprep.subr.mxu0 0.0
    %2375 = vmatpush1.msra.mxu0 %v2348
    %2376 = vmatprep.subr.mxu0 0.0
    %2377 = vmatpush1.msra.mxu0 %v2349
    %2378 = vmatprep.subr.mxu0 0.0
    %2379 = vmatpush1.msra.mxu0 %v2350
    %2380 = vmatprep.subr.mxu0 0.0
    %2381 = vmatpush1.msra.mxu0 %v2351
    %2382 = vmatprep.subr.mxu0 0.0
    %2383 = vmatpush1.msra.mxu0 %v2352
    %2384 = vmatprep.subr.mxu0 0.0
    %2385 = vmatpush1.msra.mxu0 %v2353
    %2386 = vmatprep.subr.mxu0 0.0
    %2387 = vmatpush1.msra.mxu0 %v2354
    %2388 = vmatprep.subr.mxu0 0.0
    %2389 = vmatpush1.msra.mxu0 %v2355
    %2390 = vmatprep.subr.mxu0 0.0
    %2391 = vmatpush1.msra.mxu0 %v2356
    %2392 = vmatprep.subr.mxu0 0.0
    %2393 = vmatpush1.msra.mxu0 %v2357
    %2394 = vmatprep.subr.mxu0 0.0
    %2395 = vmatpush1.msra.mxu0 %v2358
    %2396 = vmatprep.subr.mxu0 0.0
    %2397 = vmatpush1.msra.mxu0 %v2359
    %2398 = vmatprep.subr.mxu0 0.0
    %2399 = vmatpush1.msra.mxu0 %v2360
    %2400 = vmatprep.subr.mxu0 0.0
    %2401 = vmatpush1.msra.mxu0 0.0
    %2402 = vmatprep.subr.mxu0 0.0
    %2403 = vmatpush1.msra.mxu0 0.0
    %2404 = vmatprep.subr.mxu0 0.0
    %2405 = vmatpush1.msra.mxu0 0.0
    %2406 = vmatprep.subr.mxu0 0.0
    %2407 = vmatpush1.msra.mxu0 0.0
    %2408 = vmatprep.subr.mxu0 0.0
    %2409 = vmatpush1.msra.mxu0 0.0
    %2410 = vmatprep.subr.mxu0 0.0
    %2411 = vmatpush1.msra.mxu0 0.0
    %2412 = vmatprep.subr.mxu0 0.0
    %2413 = vmatpush1.msra.mxu0 0.0
    %2414 = vmatprep.subr.mxu0 0.0
    %2415 = vmatpush1.msra.mxu0 0.0
    %2416 = vmatprep.subr.mxu0 0.0
    %2417 = vmatpush1.msra.mxu0 0.0
    %2418 = vmatprep.subr.mxu0 0.0
    %2419 = vmatpush1.msra.mxu0 0.0
    %2420 = vmatprep.subr.mxu0 0.0
    %2421 = vmatpush1.msra.mxu0 0.0
    %2422 = vmatprep.subr.mxu0 0.0
    %2423 = vmatpush1.msra.mxu0 0.0
    %2424 = vmatprep.subr.mxu0 0.0
    %2425 = vmatpush1.msra.mxu0 0.0
    %2426 = vmatprep.subr.mxu0 0.0
    %2427 = vmatpush1.msra.mxu0 0.0
    %2428 = vmatprep.subr.mxu0 0.0
    %2429 = vmatpush1.msra.mxu0 0.0
    %2430 = vmatprep.subr.mxu0 0.0
    %2431 = vmatpush1.msra.mxu0 0.0
    %2432 = vmatprep.mubr.f32.mxu0 0.0
    %2433 = vmatmul.mubr.f32.gmra.mrb[0].mxu0 %v2337
    %v2434 = vpop.f32.mrb[0].mxu0
    %v2435 = vadd.f32 %v2366, %v2434
    %v2436 = vpop.f32.mrb[0].mxu0
    %2437 = vmatprep.mubr.f32.mxu0 0.0
    %2438 = vmatmul.mubr.f32.gmra.mrb[0].mxu0 %v2338
    %v2439 = vpop.f32.mrb[0].mxu0
    %v2440 = vadd.f32 %v2366, %v2439
    %v2441 = vpop.f32.mrb[0].mxu0
    %2442 = vmatprep.mubr.f32.mxu0 0.0
    %2443 = vmatmul.mubr.f32.gmra.mrb[0].mxu0 %v2339
    %v2444 = vpop.f32.mrb[0].mxu0
    %v2445 = vadd.f32 %v2366, %v2444
    %v2446 = vpop.f32.mrb[0].mxu0
    %2447 = vmatprep.mubr.f32.mxu0 0.0
    %2448 = vmatmul.mubr.f32.gmra.mrb[0].mxu0 %v2340
    %v2449 = vpop.f32.mrb[0].mxu0
    %v2450 = vadd.f32 %v2366, %v2449
    %v2451 = vpop.f32.mrb[0].mxu0
    %2452 = vmatprep.mubr.f32.mxu0 0.0
    %2453 = vmatmul.mubr.f32.gmra.mrb[0].mxu0 %v2341
    %v2454 = vpop.f32.mrb[0].mxu0
    %v2455 = vadd.f32 %v2366, %v2454
    %v2456 = vpop.f32.mrb[0].mxu0
    %2457 = vmatprep.mubr.f32.mxu0 0.0
    %2458 = vmatmul.mubr.f32.gmra.mrb[0].mxu0 %v2342
    %v2459 = vpop.f32.mrb[0].mxu0
    %v2460 = vadd.f32 %v2366, %v2459
    %v2461 = vpop.f32.mrb[0].mxu0
    %2462 = vmatprep.mubr.f32.mxu0 0.0
    %2463 = vmatmul.mubr.f32.gmra.mrb[0].mxu0 %v2343
    %v2464 = vpop.f32.mrb[0].mxu0
    %v2465 = vadd.f32 %v2366, %v2464
    %v2466 = vpop.f32.mrb[0].mxu0
    %2467 = vmatprep.mubr.f32.mxu0 0.0
    %2468 = vmatmul.mubr.f32.gmra.mrb[0].mxu0 %v2344
    %v2469 = vpop.f32.mrb[0].mxu0
    %v2470 = vadd.f32 %v2366, %v2469
    %v2471 = vpop.f32.mrb[0].mxu0
    %2472 = vdwg.mxu0
    %2473 = vst [vmem:[#allocation10] sm:$0xff] %v2435
    %2474 = vst [vmem:[#allocation10 + $0x8] sm:$0xff] %v2440
    %2475 = vst [vmem:[#allocation10 + $0x10] sm:$0xff] %v2445
    %2476 = vst [vmem:[#allocation10 + $0x18] sm:$0xff] %v2450
    %2477 = vst [vmem:[#allocation10 + $0x20] sm:$0xff] %v2455
    %2478 = vst [vmem:[#allocation10 + $0x28] sm:$0xff] %v2460
    %2479 = vst [vmem:[#allocation10 + $0x30] sm:$0xff] %v2465
    %2480 = vst [vmem:[#allocation10 + $0x38] sm:$0xff] %v2470
    // Predicated region
    $region38: #{tpu_custom_call.1} parent=1 // pred_check
      _
    $region39: #{tpu_custom_call.1} parent=1 // pred_check_branch
      %2482 = sbr.rel (0) target = $region41
    $region40: #{tpu_custom_call.1} parent=1 // pred_region
      %s2484 = ssub.s32 1024, 1024
      %2485 = vsyncadd [#allocation6], %s2484
      %s2486 = sshll.u32 [#allocation10], 4
      %s2487 = int_to_ptr.vmem [resolvable:$true] %s2486
      %2492 = dma.vmem_to_hbm [thread:$0]  %s2487, 1024, %s6, [#allocation6], 128, 128, 8
    $region41: #{tpu_custom_call.1} parent=1 // pred_fallthru
      _
    // Predicated region
    $region42: #{tpu_custom_call.1} parent=1 // pred_check
      _
    $region43: #{tpu_custom_call.1} parent=1 // pred_check_branch
      %2494 = sbr.rel (0) target = $region45
    $region44: #{tpu_custom_call.1} parent=1 // pred_region
      %2495 = dma.done [#allocation6], 1024
    $region45: #{tpu_custom_call.1} parent=1 // pred_fallthru
      _
    %2496 = vsyncpa [#allocation5], 1
    %2497 = vsyncpa [#allocation8], 1
    %2498 = vsyncpa [#allocation6], 1

</llo_original>
